<compile_context>
chip_gen: v6e
topology: v6e:2x2x1
jax: 0.10.0
libtpu: 0.0.40
codegen_flags: <defaults>
</compile_context>

<pallas_src>
import functools
import math

import jax
import jax.numpy as jnp
from jax.experimental import pallas as pl
from jax.experimental.pallas import tpu as pltpu


# ---------------------------------------------------------------------------
# Chip-aware VMEM budgeting.
# ---------------------------------------------------------------------------
def _vmem_limit_bytes():
    """Scoped-VMEM limit derived from the actual chip (v5e/v6e 128 MiB physical,
    v7x 64 MiB): use at most half the physical capacity, never below 16 MiB."""
    try:
        cap = int(pltpu.get_tpu_info().vmem_capacity_bytes)
    except Exception:
        cap = 128 * 1024 * 1024
    return max(16 * 1024 * 1024, min(64 * 1024 * 1024, cap // 2))


def _pick_row_tile(rows, stream_bytes_per_row, resident_bytes, limit):
    """Largest row tile whose pipeline footprint fits ~75% of `limit`.

    `stream_bytes_per_row`: bytes of blocks whose index_map varies with the row
    grid axis (double-buffered by the Pallas pipeline).  `resident_bytes`: bytes
    of constant-index blocks (weights/biases) -- also counted twice since they
    get the default 2 pipeline buffers.
    """
    budget = int(limit * 0.75) - 2 * resident_bytes
    t = budget // max(1, 2 * stream_bytes_per_row)
    t = min(t, rows, 2048)
    if t >= rows:
        # Whole extent fits in one block: when big enough, split once anyway so
        # both of v7x's TensorCores get a block along the 'parallel' axis.
        t = rows if rows < 32 else -(-rows // 2)
    if t < rows:
        if t >= 256:
            t -= t % 256          # match the 256-wide MXU on v6e/v7x
        elif t >= 16:
            t -= t % 16           # keep bf16 sublane packing friendly
    return max(8, min(t, rows))


# ---------------------------------------------------------------------------
# Kernel 1: input projection + positional encoding + fused Q/K/V projections.
# Grid: (B, S_tiles).  PE is indexed by the sequence tile only (no B-times
# duplicated PE buffer).  Outputs: fp32 residual stream x and q/k/v in the
# MXU compute dtype.
# ---------------------------------------------------------------------------
def _embed_qkv_kernel(x_ref, pe_ref, wp_ref, bp_ref, wq_ref, wk_ref, wv_ref,
                      bq_ref, bk_ref, bv_ref,
                      x_out_ref, q_out_ref, k_out_ref, v_out_ref,
                      *, compute_dtype):
    x = jnp.dot(x_ref[...].astype(compute_dtype), wp_ref[...],
                preferred_element_type=jnp.float32)
    x = x + bp_ref[...] + pe_ref[...]                       # fp32 epilogue
    x_out_ref[...] = x.astype(x_out_ref.dtype)
    xc = x.astype(compute_dtype)
    q_out_ref[...] = (jnp.dot(xc, wq_ref[...], preferred_element_type=jnp.float32)
                      + bq_ref[...]).astype(q_out_ref.dtype)
    k_out_ref[...] = (jnp.dot(xc, wk_ref[...], preferred_element_type=jnp.float32)
                      + bk_ref[...]).astype(k_out_ref.dtype)
    v_out_ref[...] = (jnp.dot(xc, wv_ref[...], preferred_element_type=jnp.float32)
                      + bv_ref[...]).astype(v_out_ref.dtype)


def embed_and_qkv(x0, pe, wp, bp, wq, wk, wv, bq, bk, bv, *,
                  qkv_dtype, compute_dtype, vmem_limit):
    B, S, K = x0.shape
    D = wp.shape[1]
    cbytes = jnp.dtype(compute_dtype).itemsize
    qbytes = jnp.dtype(qkv_dtype).itemsize
    resident = (wp.size + wq.size + wk.size + wv.size) * cbytes + 4 * D * 4
    stream = 4 * K + 4 * D + 4 * D + 3 * qbytes * D          # x0 + pe + x_out + q/k/v
    ts = _pick_row_tile(S, stream, resident, vmem_limit)
    grid = (B, pl.cdiv(S, ts))

    row3 = lambda b, s: (b, s, 0)
    const = lambda b, s: (0, 0)
    in_specs = [
        pl.BlockSpec((None, ts, K), row3),
        pl.BlockSpec((ts, D), lambda b, s: (s, 0)),          # PE broadcast over batch for free
        pl.BlockSpec((K, D), const),
        pl.BlockSpec((1, D), const),
        pl.BlockSpec((D, D), const),
        pl.BlockSpec((D, D), const),
        pl.BlockSpec((D, D), const),
        pl.BlockSpec((1, D), const),
        pl.BlockSpec((1, D), const),
        pl.BlockSpec((1, D), const),
    ]
    out_specs = tuple(pl.BlockSpec((None, ts, D), row3) for _ in range(4))
    out_shape = (jax.ShapeDtypeStruct((B, S, D), jnp.float32),
                 jax.ShapeDtypeStruct((B, S, D), qkv_dtype),
                 jax.ShapeDtypeStruct((B, S, D), qkv_dtype),
                 jax.ShapeDtypeStruct((B, S, D), qkv_dtype))
    return pl.pallas_call(
        functools.partial(_embed_qkv_kernel, compute_dtype=compute_dtype),
        out_shape=out_shape, grid=grid, in_specs=in_specs, out_specs=out_specs,
        compiler_params=pltpu.CompilerParams(
            dimension_semantics=("parallel", "parallel"),
            vmem_limit_bytes=vmem_limit),
    )(x0, pe, wp, bp, wq, wk, wv, bq, bk, bv)


# ---------------------------------------------------------------------------
# Kernel 2: multi-head softmax attention.
# Grid: (B, q_tiles).  q/k/v arrive as lane-dense (S, d_model) slabs; heads are
# sliced inside the kernel (no HBM transposes), the output is stored lane-dense
# in (B, S, d_model) layout so the downstream reshape is free.
# TODO(synk): no flash-style KV tiling -- the whole (S, d_model) K/V plus the
# (tq, S) fp32 scores must fit VMEM per step (tighter ceiling on v7x's 64 MiB).
# ---------------------------------------------------------------------------
def _attention_kernel(q_ref, k_ref, v_ref, o_ref, *, num_heads, scale, compute_dtype):
    q = q_ref[...]                                   # (tq, D)
    k = k_ref[...]                                   # (S,  D)
    v = v_ref[...]
    dh = q.shape[-1] // num_heads
    contract = (((1,), (1,)), ((), ()))              # contract feature dims, no transpose
    outs = []
    for h in range(num_heads):                       # static unroll over heads
        lo = h * dh
        qh = q[:, lo:lo + dh]
        kh = k[:, lo:lo + dh]
        vh = v[:, lo:lo + dh]
        s = jax.lax.dot_general(qh, kh, contract,
                                preferred_element_type=jnp.float32) * scale
        m = jnp.max(s, axis=-1, keepdims=True)
        p = jnp.exp(s - m)
        l = jnp.sum(p, axis=-1, keepdims=True)
        o = jnp.dot(p.astype(compute_dtype), vh, preferred_element_type=jnp.float32)
        outs.append(o * pl.reciprocal(l, approx=True))   # divide on the EUP slot
    o_ref[...] = jnp.concatenate(outs, axis=-1).astype(o_ref.dtype)


def attention(q, k, v, *, num_heads, scale, out_dtype, compute_dtype, vmem_limit):
    B, S, D = q.shape
    ibytes = q.dtype.itemsize
    obytes = jnp.dtype(out_dtype).itemsize
    resident = 2 * S * D * ibytes                    # K and V slabs per batch step
    stream = D * ibytes + D * obytes + 4 * S         # q row + o row + fp32 score row
    tq = _pick_row_tile(S, stream, resident, vmem_limit)
    grid = (B, pl.cdiv(S, tq))
    q_spec = pl.BlockSpec((None, tq, D), lambda b, i: (b, i, 0))
    kv_spec = pl.BlockSpec((None, S, D), lambda b, i: (b, 0, 0))
    return pl.pallas_call(
        functools.partial(_attention_kernel, num_heads=num_heads, scale=scale,
                          compute_dtype=compute_dtype),
        out_shape=jax.ShapeDtypeStruct((B, S, D), out_dtype),
        grid=grid, in_specs=[q_spec, kv_spec, kv_spec],
        out_specs=pl.BlockSpec((None, tq, D), lambda b, i: (b, i, 0)),
        compiler_params=pltpu.CompilerParams(
            dimension_semantics=("parallel", "parallel"),
            vmem_limit_bytes=vmem_limit),
    )(q, k, v)


# ---------------------------------------------------------------------------
# Kernel 3: attention output projection + residual add + LayerNorm1 (fused).
# ---------------------------------------------------------------------------
def _oproj_add_ln_kernel(a_ref, res_ref, w_ref, b_ref, g_ref, bt_ref, o_ref,
                         *, eps, compute_dtype):
    y = jnp.dot(a_ref[...].astype(compute_dtype), w_ref[...],
                preferred_element_type=jnp.float32)
    x = y + b_ref[...] + res_ref[...].astype(jnp.float32)
    mean = jnp.mean(x, axis=-1, keepdims=True)
    c = x - mean
    var = jnp.mean(c * c, axis=-1, keepdims=True)    # biased var (torch.nn.LayerNorm)
    inv = jax.lax.rsqrt(var + eps)                   # EUP slot, not VALU
    o_ref[...] = ((c * inv) * g_ref[...] + bt_ref[...]).astype(o_ref.dtype)


def attn_out_proj_ln(attn, res, w, b, gamma, beta, *, eps, compute_dtype, vmem_limit):
    rows, D = res.shape
    cbytes = jnp.dtype(compute_dtype).itemsize
    resident = w.size * cbytes + 3 * D * 4
    stream = D * attn.dtype.itemsize + 2 * D * 4     # attn in + residual in + out
    tile = _pick_row_tile(rows, stream, resident, vmem_limit)
    grid = (pl.cdiv(rows, tile),)
    row = pl.BlockSpec((tile, D), lambda i: (i, 0))
    const = lambda i: (0, 0)
    return pl.pallas_call(
        functools.partial(_oproj_add_ln_kernel, eps=eps, compute_dtype=compute_dtype),
        out_shape=jax.ShapeDtypeStruct((rows, D), jnp.float32),
        grid=grid,
        in_specs=[row, row, pl.BlockSpec((D, D), const), pl.BlockSpec((1, D), const),
                  pl.BlockSpec((1, D), const), pl.BlockSpec((1, D), const)],
        out_specs=row,
        compiler_params=pltpu.CompilerParams(
            dimension_semantics=("parallel",), vmem_limit_bytes=vmem_limit),
    )(attn, res, w, b, gamma, beta)


# ---------------------------------------------------------------------------
# Kernel 4: ff1 -> ReLU -> ff2 + residual + LayerNorm2 + output projection
# (fused; the (tile, ff_hidden) intermediate never leaves VMEM).
# TODO(synk): when output_size < 128 the final store is lane-masked; a
# lane-dense fold of several rows into the lane axis would speed the store path.
# ---------------------------------------------------------------------------
def _mlp_ln_out_kernel(x_ref, w1_ref, b1_ref, w2_ref, b2_ref, g_ref, bt_ref,
                       wo_ref, bo_ref, o_ref, *, eps, compute_dtype):
    x = x_ref[...].astype(jnp.float32)
    h = jnp.dot(x.astype(compute_dtype), w1_ref[...],
                preferred_element_type=jnp.float32) + b1_ref[...]
    h = jnp.maximum(h, 0.0)
    y = jnp.dot(h.astype(compute_dtype), w2_ref[...],
                preferred_element_type=jnp.float32) + b2_ref[...]
    z = x + y
    mean = jnp.mean(z, axis=-1, keepdims=True)
    c = z - mean
    var = jnp.mean(c * c, axis=-1, keepdims=True)
    zn = (c * jax.lax.rsqrt(var + eps)) * g_ref[...] + bt_ref[...]
    o_ref[...] = (jnp.dot(zn.astype(compute_dtype), wo_ref[...],
                          preferred_element_type=jnp.float32)
                  + bo_ref[...]).astype(o_ref.dtype)


def mlp_ln_out(x, w1, b1, w2, b2, gamma, beta, wo, bo, *, eps, compute_dtype,
               vmem_limit):
    rows, D = x.shape
    F = w1.shape[1]
    O = wo.shape[1]
    cbytes = jnp.dtype(compute_dtype).itemsize
    resident = (w1.size + w2.size + wo.size) * cbytes + (F + 4 * D + O) * 4
    stream = D * 4 + O * 4 + F * 4                   # x in + out + VMEM-held intermediate
    tile = _pick_row_tile(rows, stream, resident, vmem_limit)
    grid = (pl.cdiv(rows, tile),)
    const = lambda i: (0, 0)
    return pl.pallas_call(
        functools.partial(_mlp_ln_out_kernel, eps=eps, compute_dtype=compute_dtype),
        out_shape=jax.ShapeDtypeStruct((rows, O), jnp.float32),
        grid=grid,
        in_specs=[pl.BlockSpec((tile, D), lambda i: (i, 0)),
                  pl.BlockSpec((D, F), const), pl.BlockSpec((1, F), const),
                  pl.BlockSpec((F, D), const), pl.BlockSpec((1, D), const),
                  pl.BlockSpec((1, D), const), pl.BlockSpec((1, D), const),
                  pl.BlockSpec((D, O), const), pl.BlockSpec((1, O), const)],
        out_specs=pl.BlockSpec((tile, O), lambda i: (i, 0)),
        compiler_params=pltpu.CompilerParams(
            dimension_semantics=("parallel",), vmem_limit_bytes=vmem_limit),
    )(x, w1, b1, w2, b2, gamma, beta, wo, bo)


# ---------------------------------------------------------------------------
# Positional-encoding table (constant buffer, computed once in plain JAX).
# ---------------------------------------------------------------------------
def _positional_encoding(seq_len, d_model):
    pos = jnp.arange(seq_len, dtype=jnp.float32)[:, None]
    div = jnp.exp(jnp.arange(0, d_model, 2, dtype=jnp.float32)
                  * (-math.log(10000.0) / d_model))
    ang = pos * div
    pe = jnp.zeros((seq_len, d_model), jnp.float32)
    pe = pe.at[:, 0::2].set(jnp.sin(ang))
    pe = pe.at[:, 1::2].set(jnp.cos(ang))
    return pe


# ---------------------------------------------------------------------------
# Full TorchsTransformer forward (num_layers=1, batch_first=True, eval mode).
# TODO(synk): dropout is the identity in eval mode; training-mode dropout is
# not implemented.
# ---------------------------------------------------------------------------
def transformer_forward(inp, params, *, num_heads, ln_eps=1e-5,
                        compute_dtype=jnp.bfloat16):
    B, S, _ = inp.shape
    D = params["w_proj"].shape[1]
    assert D % num_heads == 0
    dh = D // num_heads
    rows = B * S
    cd = jnp.dtype(compute_dtype) if compute_dtype is not None else jnp.dtype(inp.dtype)
    limit = _vmem_limit_bytes()

    pe = _positional_encoding(S, D)

    # Weights cast once at the wrapper level to the MXU compute dtype; biases,
    # LN params, residuals and accumulation stay fp32.
    def wcast(w):
        return w.astype(cd)

    def brow(b):
        return b.reshape(1, -1).astype(jnp.float32)

    w_qkv, b_qkv = params["w_qkv"], params["b_qkv"]
    w_q, w_k, w_v = w_qkv[:, :D], w_qkv[:, D:2 * D], w_qkv[:, 2 * D:]
    b_q, b_k, b_v = b_qkv[:D], b_qkv[D:2 * D], b_qkv[2 * D:]

    x, q, k, v = embed_and_qkv(
        inp, pe, wcast(params["w_proj"]), brow(params["b_proj"]),
        wcast(w_q), wcast(w_k), wcast(w_v), brow(b_q), brow(b_k), brow(b_v),
        qkv_dtype=cd, compute_dtype=cd, vmem_limit=limit)

    attn = attention(q, k, v, num_heads=num_heads, scale=1.0 / math.sqrt(dh),
                     out_dtype=cd, compute_dtype=cd, vmem_limit=limit)

    x1 = attn_out_proj_ln(attn.reshape(rows, D), x.reshape(rows, D),
                          wcast(params["w_o"]), brow(params["b_o"]),
                          brow(params["ln1_g"]), brow(params["ln1_b"]),
                          eps=ln_eps, compute_dtype=cd, vmem_limit=limit)

    out = mlp_ln_out(x1, wcast(params["w_ff1"]), brow(params["b_ff1"]),
                     wcast(params["w_ff2"]), brow(params["b_ff2"]),
                     brow(params["ln2_g"]), brow(params["ln2_b"]),
                     wcast(params["w_out"]), brow(params["b_out"]),
                     eps=ln_eps, compute_dtype=cd, vmem_limit=limit)
    return out.reshape(B, S, -1)


# ---------------------------------------------------------------------------
# Pure-JAX reference for correctness checking.
# ---------------------------------------------------------------------------
def _layer_norm_ref(x, g, b, eps):
    mean = jnp.mean(x, axis=-1, keepdims=True)
    var = jnp.mean((x - mean) ** 2, axis=-1, keepdims=True)
    return (x - mean) / jnp.sqrt(var + eps) * g + b


def reference_forward(inp, params, *, num_heads, ln_eps=1e-5, compute_dtype=None):
    cd = jnp.dtype(compute_dtype) if compute_dtype is not None else jnp.dtype(inp.dtype)

    def mm(a, w):
        return jnp.dot(a.astype(cd), w.astype(cd), preferred_element_type=jnp.float32)

    B, S, _ = inp.shape
    D = params["w_proj"].shape[1]
    dh = D // num_heads
    pe = _positional_encoding(S, D)

    x = mm(inp, params["w_proj"]) + params["b_proj"] + pe[None]
    qkv = mm(x, params["w_qkv"]) + params["b_qkv"]
    q, k, v = jnp.split(qkv, 3, axis=-1)

    def heads(t):
        return t.reshape(B, S, num_heads, dh).transpose(0, 2, 1, 3)

    s = jnp.einsum("bhqd,bhkd->bhqk", heads(q).astype(cd), heads(k).astype(cd),
                   preferred_element_type=jnp.float32) / math.sqrt(dh)
    p = jax.nn.softmax(s, axis=-1)
    o = jnp.einsum("bhqk,bhkd->bhqd", p.astype(cd), heads(v).astype(cd),
                   preferred_element_type=jnp.float32)
    o = o.transpose(0, 2, 1, 3).reshape(B, S, D)
    x = _layer_norm_ref(x + mm(o, params["w_o"]) + params["b_o"],
                        params["ln1_g"], params["ln1_b"], ln_eps)
    h = jax.nn.relu(mm(x, params["w_ff1"]) + params["b_ff1"])
    h = mm(h, params["w_ff2"]) + params["b_ff2"]
    x = _layer_norm_ref(x + h, params["ln2_g"], params["ln2_b"], ln_eps)
    return mm(x, params["w_out"]) + params["b_out"]


if __name__ == "__main__":
    # Small shapes consistent with the module's forward.
    batch, seq = 2, 8
    input_size, d_model, attn_heads, ff_hidden, output_size = 16, 32, 4, 64, 8

    key = jax.random.PRNGKey(0)
    keys = jax.random.split(key, 16)

    def w(k_, shape, fan_in):
        return jax.random.normal(k_, shape, jnp.float32) / math.sqrt(fan_in)

    params = {
        "w_proj": w(keys[0], (input_size, d_model), input_size),
        "b_proj": w(keys[1], (d_model,), d_model),
        "w_qkv": w(keys[2], (d_model, 3 * d_model), d_model),
        "b_qkv": w(keys[3], (3 * d_model,), d_model),
        "w_o": w(keys[4], (d_model, d_model), d_model),
        "b_o": w(keys[5], (d_model,), d_model),
        "ln1_g": jnp.ones((d_model,), jnp.float32),
        "ln1_b": jnp.zeros((d_model,), jnp.float32),
        "w_ff1": w(keys[6], (d_model, ff_hidden), d_model),
        "b_ff1": w(keys[7], (ff_hidden,), ff_hidden),
        "w_ff2": w(keys[8], (ff_hidden, d_model), ff_hidden),
        "b_ff2": w(keys[9], (d_model,), d_model),
        "ln2_g": jnp.ones((d_model,), jnp.float32),
        "ln2_b": jnp.zeros((d_model,), jnp.float32),
        "w_out": w(keys[10], (d_model, output_size), d_model),
        "b_out": w(keys[11], (output_size,), output_size),
    }
    inp = jax.random.normal(keys[12], (batch, seq, input_size), jnp.float32)

    ref = reference_forward(inp, params, num_heads=attn_heads)

    # Exact-semantics check: fp32 MXU operands vs. the fp32 reference.
    fwd_f32 = jax.jit(functools.partial(transformer_forward, num_heads=attn_heads,
                                        compute_dtype=jnp.float32))
    out_f32 = jax.block_until_ready(fwd_f32(inp, params))
    assert out_f32.shape == (batch, seq, output_size)
    assert bool(jnp.all(jnp.isfinite(out_f32)))
    assert bool(jnp.allclose(out_f32, ref, atol=5e-2, rtol=5e-2)), "fp32 mismatch vs reference"

    # Fast path: bf16 MXU operands (native on v6e/v7x), fp32 accumulate/epilogues.
    fwd_bf16 = jax.jit(functools.partial(transformer_forward, num_heads=attn_heads,
                                         compute_dtype=jnp.bfloat16))
    out_bf16 = jax.block_until_ready(fwd_bf16(inp, params))
    assert out_bf16.shape == (batch, seq, output_size)
    assert bool(jnp.all(jnp.isfinite(out_bf16)))
    assert bool(jnp.allclose(out_bf16, ref, atol=1e-1, rtol=1e-1)), "bf16 drift too large"

    print("KERNEL_OK")
</pallas_src>

<mosaic_0001>
module attributes {stable_mosaic.version = 11 : i64} {
  func.func @_oproj_add_ln_kernel(%arg0: i32, %arg1: memref<16x32xf32, #tpu.memory_space<vmem>>, %arg2: memref<16x32xf32, #tpu.memory_space<vmem>>, %arg3: memref<32x32xf32, #tpu.memory_space<vmem>>, %arg4: memref<1x32xf32, #tpu.memory_space<vmem>>, %arg5: memref<1x32xf32, #tpu.memory_space<vmem>>, %arg6: memref<1x32xf32, #tpu.memory_space<vmem>>, %arg7: memref<16x32xf32, #tpu.memory_space<vmem>>) attributes {dimension_semantics = [#tpu.dimension_semantics<parallel>], iteration_bounds = array<i64: 1>, scalar_prefetch = 0 : i64, scratch_operands = 0 : i64, tpu.core_type = #tpu.core_type<tc>, window_params = [{transform_indices = @transform_0, window_bounds = array<i64: 16, 32>}, {transform_indices = @transform_1, window_bounds = array<i64: 16, 32>}, {pipeline_mode = #tpu.pipeline_mode<synchronous>, transform_indices = @transform_2, window_bounds = array<i64: 32, 32>}, {pipeline_mode = #tpu.pipeline_mode<synchronous>, transform_indices = @transform_3, window_bounds = array<i64: 1, 32>}, {pipeline_mode = #tpu.pipeline_mode<synchronous>, transform_indices = @transform_4, window_bounds = array<i64: 1, 32>}, {pipeline_mode = #tpu.pipeline_mode<synchronous>, transform_indices = @transform_5, window_bounds = array<i64: 1, 32>}, {transform_indices = @transform_6, window_bounds = array<i64: 16, 32>}]} {
    %c0 = arith.constant 0 : index
    %c0_0 = arith.constant 0 : index
    %0 = vector.load %arg1[%c0, %c0_0] : memref<16x32xf32, #tpu.memory_space<vmem>>, vector<16x32xf32>
    %c0_1 = arith.constant 0 : index
    %c0_2 = arith.constant 0 : index
    %1 = vector.load %arg3[%c0_1, %c0_2] : memref<32x32xf32, #tpu.memory_space<vmem>>, vector<32x32xf32>
    %cst = arith.constant dense<0.000000e+00> : vector<16x32xf32>
    %2 = tpu.matmul %0, %1, %cst {dimension_numbers = #tpu.dot_dimension_numbers<[1], [0], [0], [1], [0, 0, 1, 1], [], []>} : vector<16x32xf32>, vector<32x32xf32>, vector<16x32xf32> -> vector<16x32xf32>
    %c0_3 = arith.constant 0 : index
    %c0_4 = arith.constant 0 : index
    %3 = vector.load %arg4[%c0_3, %c0_4] : memref<1x32xf32, #tpu.memory_space<vmem>>, vector<1x32xf32>
    %4 = vector.broadcast %3 : vector<1x32xf32> to vector<16x32xf32>
    %5 = arith.addf %2, %4 : vector<16x32xf32>
    %c0_5 = arith.constant 0 : index
    %c0_6 = arith.constant 0 : index
    %6 = vector.load %arg2[%c0_5, %c0_6] : memref<16x32xf32, #tpu.memory_space<vmem>>, vector<16x32xf32>
    %7 = arith.addf %5, %6 : vector<16x32xf32>
    %cst_7 = arith.constant dense<0.000000e+00> : vector<16xf32>
    %8 = vector.multi_reduction <add>, %7, %cst_7 [1] : vector<16x32xf32> to vector<16xf32>
    %9 = vector.shape_cast %8 : vector<16xf32> to vector<16x1xf32>
    %cst_8 = arith.constant 3.200000e+01 : f32
    %10 = vector.broadcast %cst_8 : f32 to vector<16x1xf32>
    %11 = arith.divf %9, %10 : vector<16x1xf32>
    %12 = vector.broadcast %11 : vector<16x1xf32> to vector<16x32xf32>
    %13 = arith.subf %7, %12 : vector<16x32xf32>
    %14 = arith.mulf %13, %13 : vector<16x32xf32>
    %cst_9 = arith.constant dense<0.000000e+00> : vector<16xf32>
    %15 = vector.multi_reduction <add>, %14, %cst_9 [1] : vector<16x32xf32> to vector<16xf32>
    %16 = vector.shape_cast %15 : vector<16xf32> to vector<16x1xf32>
    %cst_10 = arith.constant 3.200000e+01 : f32
    %17 = vector.broadcast %cst_10 : f32 to vector<16x1xf32>
    %18 = arith.divf %16, %17 : vector<16x1xf32>
    %cst_11 = arith.constant 9.99999974E-6 : f32
    %19 = vector.broadcast %cst_11 : f32 to vector<16x1xf32>
    %20 = arith.addf %18, %19 : vector<16x1xf32>
    %21 = math.rsqrt %20 : vector<16x1xf32>
    %22 = vector.broadcast %21 : vector<16x1xf32> to vector<16x32xf32>
    %23 = arith.mulf %13, %22 : vector<16x32xf32>
    %c0_12 = arith.constant 0 : index
    %c0_13 = arith.constant 0 : index
    %24 = vector.load %arg5[%c0_12, %c0_13] : memref<1x32xf32, #tpu.memory_space<vmem>>, vector<1x32xf32>
    %25 = vector.broadcast %24 : vector<1x32xf32> to vector<16x32xf32>
    %26 = arith.mulf %23, %25 : vector<16x32xf32>
    %c0_14 = arith.constant 0 : index
    %c0_15 = arith.constant 0 : index
    %27 = vector.load %arg6[%c0_14, %c0_15] : memref<1x32xf32, #tpu.memory_space<vmem>>, vector<1x32xf32>
    %28 = vector.broadcast %27 : vector<1x32xf32> to vector<16x32xf32>
    %29 = arith.addf %26, %28 : vector<16x32xf32>
    %c0_16 = arith.constant 0 : index
    %c0_17 = arith.constant 0 : index
    %30 = vector.load %arg7[%c0_16, %c0_17] : memref<16x32xf32, #tpu.memory_space<vmem>>, vector<16x32xf32>
    tpu.vector_store %arg7[%c0_16, %c0_17], %29 {strides = array<i32>} : memref<16x32xf32, #tpu.memory_space<vmem>>, vector<16x32xf32>,
    return
  }
  func.func @transform_0(%arg0: i32) -> (i32, i32) {
    %c0_i32 = arith.constant 0 : i32
    %c0_i32_0 = arith.constant 0 : i32
    return %arg0, %c0_i32 : i32, i32
  }
  func.func @transform_1(%arg0: i32) -> (i32, i32) {
    %c0_i32 = arith.constant 0 : i32
    %c0_i32_0 = arith.constant 0 : i32
    return %arg0, %c0_i32 : i32, i32
  }
  func.func @transform_2(%arg0: i32) -> (i32, i32) {
    %c0_i32 = arith.constant 0 : i32
    %c0_i32_0 = arith.constant 0 : i32
    %c0_i32_1 = arith.constant 0 : i32
    return %c0_i32, %c0_i32_0 : i32, i32
  }
  func.func @transform_3(%arg0: i32) -> (i32, i32) {
    %c0_i32 = arith.constant 0 : i32
    %c0_i32_0 = arith.constant 0 : i32
    %c0_i32_1 = arith.constant 0 : i32
    return %c0_i32, %c0_i32_0 : i32, i32
  }
  func.func @transform_4(%arg0: i32) -> (i32, i32) {
    %c0_i32 = arith.constant 0 : i32
    %c0_i32_0 = arith.constant 0 : i32
    %c0_i32_1 = arith.constant 0 : i32
    return %c0_i32, %c0_i32_0 : i32, i32
  }
  func.func @transform_5(%arg0: i32) -> (i32, i32) {
    %c0_i32 = arith.constant 0 : i32
    %c0_i32_0 = arith.constant 0 : i32
    %c0_i32_1 = arith.constant 0 : i32
    return %c0_i32, %c0_i32_0 : i32, i32
  }
  func.func @transform_6(%arg0: i32) -> (i32, i32) {
    %c0_i32 = arith.constant 0 : i32
    %c0_i32_0 = arith.constant 0 : i32
    return %arg0, %c0_i32 : i32, i32
  }
}

module attributes {stable_mosaic.version = 11 : i64} {
  func.func @_attention_kernel(%arg0: i32, %arg1: i32, %arg2: memref<1x8x32xf32, #tpu.memory_space<vmem>>, %arg3: memref<1x8x32xf32, #tpu.memory_space<vmem>>, %arg4: memref<1x8x32xf32, #tpu.memory_space<vmem>>, %arg5: memref<1x8x32xf32, #tpu.memory_space<vmem>>) attributes {dimension_semantics = [#tpu.dimension_semantics<parallel>, #tpu.dimension_semantics<parallel>], iteration_bounds = array<i64: 2, 1>, scalar_prefetch = 0 : i64, scratch_operands = 0 : i64, tpu.core_type = #tpu.core_type<tc>, window_params = [{transform_indices = @transform_0, window_bounds = array<i64: 1, 8, 32>}, {transform_indices = @transform_1, window_bounds = array<i64: 1, 8, 32>}, {transform_indices = @transform_2, window_bounds = array<i64: 1, 8, 32>}, {transform_indices = @transform_3, window_bounds = array<i64: 1, 8, 32>}]} {
    %c0 = arith.constant 0 : index
    %c0_0 = arith.constant 0 : index
    %c0_1 = arith.constant 0 : index
    %0 = vector.load %arg2[%c0, %c0_0, %c0_1] : memref<1x8x32xf32, #tpu.memory_space<vmem>>, vector<1x8x32xf32>
    %1 = vector.shape_cast %0 : vector<1x8x32xf32> to vector<8x32xf32>
    %c0_2 = arith.constant 0 : index
    %c0_3 = arith.constant 0 : index
    %c0_4 = arith.constant 0 : index
    %2 = vector.load %arg3[%c0_2, %c0_3, %c0_4] : memref<1x8x32xf32, #tpu.memory_space<vmem>>, vector<1x8x32xf32>
    %3 = vector.shape_cast %2 : vector<1x8x32xf32> to vector<8x32xf32>
    %c0_5 = arith.constant 0 : index
    %c0_6 = arith.constant 0 : index
    %c0_7 = arith.constant 0 : index
    %4 = vector.load %arg4[%c0_5, %c0_6, %c0_7] : memref<1x8x32xf32, #tpu.memory_space<vmem>>, vector<1x8x32xf32>
    %5 = vector.shape_cast %4 : vector<1x8x32xf32> to vector<8x32xf32>
    %6 = vector.extract_strided_slice %1 {offsets = [0, 0], sizes = [8, 8], strides = [1, 1]} : vector<8x32xf32> to vector<8x8xf32>
    %7 = vector.extract_strided_slice %3 {offsets = [0, 0], sizes = [8, 8], strides = [1, 1]} : vector<8x32xf32> to vector<8x8xf32>
    %8 = vector.extract_strided_slice %5 {offsets = [0, 0], sizes = [8, 8], strides = [1, 1]} : vector<8x32xf32> to vector<8x8xf32>
    %cst = arith.constant dense<0.000000e+00> : vector<8x8xf32>
    %9 = tpu.matmul %6, %7, %cst {dimension_numbers = #tpu.dot_dimension_numbers<[1], [1], [0], [0], [0, 0, 1, 0], [], []>} : vector<8x8xf32>, vector<8x8xf32>, vector<8x8xf32> -> vector<8x8xf32>
    %cst_8 = arith.constant 0.353553385 : f32
    %10 = vector.broadcast %cst_8 : f32 to vector<8x8xf32>
    %11 = arith.mulf %9, %10 : vector<8x8xf32>
    %cst_9 = arith.constant dense<0xFF800000> : vector<8xf32>
    %12 = vector.multi_reduction <maximumf>, %11, %cst_9 [1] : vector<8x8xf32> to vector<8xf32>
    %13 = vector.shape_cast %12 : vector<8xf32> to vector<8x1xf32>
    %14 = vector.broadcast %13 : vector<8x1xf32> to vector<8x8xf32>
    %15 = arith.subf %11, %14 : vector<8x8xf32>
    %16 = math.exp %15 : vector<8x8xf32>
    %cst_10 = arith.constant dense<0.000000e+00> : vector<8xf32>
    %17 = vector.multi_reduction <add>, %16, %cst_10 [1] : vector<8x8xf32> to vector<8xf32>
    %18 = vector.shape_cast %17 : vector<8xf32> to vector<8x1xf32>
    %cst_11 = arith.constant dense<0.000000e+00> : vector<8x8xf32>
    %19 = tpu.matmul %16, %8, %cst_11 {dimension_numbers = #tpu.dot_dimension_numbers<[1], [0], [0], [1], [0, 0, 1, 1], [], []>} : vector<8x8xf32>, vector<8x8xf32>, vector<8x8xf32> -> vector<8x8xf32>
    %20 = tpu.reciprocal %18 {approx = true} : vector<8x1xf32> -> vector<8x1xf32>
    %21 = vector.broadcast %20 : vector<8x1xf32> to vector<8x8xf32>
    %22 = arith.mulf %19, %21 : vector<8x8xf32>
    %23 = vector.extract_strided_slice %1 {offsets = [0, 8], sizes = [8, 8], strides = [1, 1]} : vector<8x32xf32> to vector<8x8xf32>
    %24 = vector.extract_strided_slice %3 {offsets = [0, 8], sizes = [8, 8], strides = [1, 1]} : vector<8x32xf32> to vector<8x8xf32>
    %25 = vector.extract_strided_slice %5 {offsets = [0, 8], sizes = [8, 8], strides = [1, 1]} : vector<8x32xf32> to vector<8x8xf32>
    %cst_12 = arith.constant dense<0.000000e+00> : vector<8x8xf32>
    %26 = tpu.matmul %23, %24, %cst_12 {dimension_numbers = #tpu.dot_dimension_numbers<[1], [1], [0], [0], [0, 0, 1, 0], [], []>} : vector<8x8xf32>, vector<8x8xf32>, vector<8x8xf32> -> vector<8x8xf32>
    %cst_13 = arith.constant 0.353553385 : f32
    %27 = vector.broadcast %cst_13 : f32 to vector<8x8xf32>
    %28 = arith.mulf %26, %27 : vector<8x8xf32>
    %cst_14 = arith.constant dense<0xFF800000> : vector<8xf32>
    %29 = vector.multi_reduction <maximumf>, %28, %cst_14 [1] : vector<8x8xf32> to vector<8xf32>
    %30 = vector.shape_cast %29 : vector<8xf32> to vector<8x1xf32>
    %31 = vector.broadcast %30 : vector<8x1xf32> to vector<8x8xf32>
    %32 = arith.subf %28, %31 : vector<8x8xf32>
    %33 = math.exp %32 : vector<8x8xf32>
    %cst_15 = arith.constant dense<0.000000e+00> : vector<8xf32>
    %34 = vector.multi_reduction <add>, %33, %cst_15 [1] : vector<8x8xf32> to vector<8xf32>
    %35 = vector.shape_cast %34 : vector<8xf32> to vector<8x1xf32>
    %cst_16 = arith.constant dense<0.000000e+00> : vector<8x8xf32>
    %36 = tpu.matmul %33, %25, %cst_16 {dimension_numbers = #tpu.dot_dimension_numbers<[1], [0], [0], [1], [0, 0, 1, 1], [], []>} : vector<8x8xf32>, vector<8x8xf32>, vector<8x8xf32> -> vector<8x8xf32>
    %37 = tpu.reciprocal %35 {approx = true} : vector<8x1xf32> -> vector<8x1xf32>
    %38 = vector.broadcast %37 : vector<8x1xf32> to vector<8x8xf32>
    %39 = arith.mulf %36, %38 : vector<8x8xf32>
    %40 = vector.extract_strided_slice %1 {offsets = [0, 16], sizes = [8, 8], strides = [1, 1]} : vector<8x32xf32> to vector<8x8xf32>
    %41 = vector.extract_strided_slice %3 {offsets = [0, 16], sizes = [8, 8], strides = [1, 1]} : vector<8x32xf32> to vector<8x8xf32>
    %42 = vector.extract_strided_slice %5 {offsets = [0, 16], sizes = [8, 8], strides = [1, 1]} : vector<8x32xf32> to vector<8x8xf32>
    %cst_17 = arith.constant dense<0.000000e+00> : vector<8x8xf32>
    %43 = tpu.matmul %40, %41, %cst_17 {dimension_numbers = #tpu.dot_dimension_numbers<[1], [1], [0], [0], [0, 0, 1, 0], [], []>} : vector<8x8xf32>, vector<8x8xf32>, vector<8x8xf32> -> vector<8x8xf32>
    %cst_18 = arith.constant 0.353553385 : f32
    %44 = vector.broadcast %cst_18 : f32 to vector<8x8xf32>
    %45 = arith.mulf %43, %44 : vector<8x8xf32>
    %cst_19 = arith.constant dense<0xFF800000> : vector<8xf32>
    %46 = vector.multi_reduction <maximumf>, %45, %cst_19 [1] : vector<8x8xf32> to vector<8xf32>
    %47 = vector.shape_cast %46 : vector<8xf32> to vector<8x1xf32>
    %48 = vector.broadcast %47 : vector<8x1xf32> to vector<8x8xf32>
    %49 = arith.subf %45, %48 : vector<8x8xf32>
    %50 = math.exp %49 : vector<8x8xf32>
    %cst_20 = arith.constant dense<0.000000e+00> : vector<8xf32>
    %51 = vector.multi_reduction <add>, %50, %cst_20 [1] : vector<8x8xf32> to vector<8xf32>
    %52 = vector.shape_cast %51 : vector<8xf32> to vector<8x1xf32>
    %cst_21 = arith.constant dense<0.000000e+00> : vector<8x8xf32>
    %53 = tpu.matmul %50, %42, %cst_21 {dimension_numbers = #tpu.dot_dimension_numbers<[1], [0], [0], [1], [0, 0, 1, 1], [], []>} : vector<8x8xf32>, vector<8x8xf32>, vector<8x8xf32> -> vector<8x8xf32>
    %54 = tpu.reciprocal %52 {approx = true} : vector<8x1xf32> -> vector<8x1xf32>
    %55 = vector.broadcast %54 : vector<8x1xf32> to vector<8x8xf32>
    %56 = arith.mulf %53, %55 : vector<8x8xf32>
    %57 = vector.extract_strided_slice %1 {offsets = [0, 24], sizes = [8, 8], strides = [1, 1]} : vector<8x32xf32> to vector<8x8xf32>
    %58 = vector.extract_strided_slice %3 {offsets = [0, 24], sizes = [8, 8], strides = [1, 1]} : vector<8x32xf32> to vector<8x8xf32>
    %59 = vector.extract_strided_slice %5 {offsets = [0, 24], sizes = [8, 8], strides = [1, 1]} : vector<8x32xf32> to vector<8x8xf32>
    %cst_22 = arith.constant dense<0.000000e+00> : vector<8x8xf32>
    %60 = tpu.matmul %57, %58, %cst_22 {dimension_numbers = #tpu.dot_dimension_numbers<[1], [1], [0], [0], [0, 0, 1, 0], [], []>} : vector<8x8xf32>, vector<8x8xf32>, vector<8x8xf32> -> vector<8x8xf32>
    %cst_23 = arith.constant 0.353553385 : f32
    %61 = vector.broadcast %cst_23 : f32 to vector<8x8xf32>
    %62 = arith.mulf %60, %61 : vector<8x8xf32>
    %cst_24 = arith.constant dense<0xFF800000> : vector<8xf32>
    %63 = vector.multi_reduction <maximumf>, %62, %cst_24 [1] : vector<8x8xf32> to vector<8xf32>
    %64 = vector.shape_cast %63 : vector<8xf32> to vector<8x1xf32>
    %65 = vector.broadcast %64 : vector<8x1xf32> to vector<8x8xf32>
    %66 = arith.subf %62, %65 : vector<8x8xf32>
    %67 = math.exp %66 : vector<8x8xf32>
    %cst_25 = arith.constant dense<0.000000e+00> : vector<8xf32>
    %68 = vector.multi_reduction <add>, %67, %cst_25 [1] : vector<8x8xf32> to vector<8xf32>
    %69 = vector.shape_cast %68 : vector<8xf32> to vector<8x1xf32>
    %cst_26 = arith.constant dense<0.000000e+00> : vector<8x8xf32>
    %70 = tpu.matmul %67, %59, %cst_26 {dimension_numbers = #tpu.dot_dimension_numbers<[1], [0], [0], [1], [0, 0, 1, 1], [], []>} : vector<8x8xf32>, vector<8x8xf32>, vector<8x8xf32> -> vector<8x8xf32>
    %71 = tpu.reciprocal %69 {approx = true} : vector<8x1xf32> -> vector<8x1xf32>
    %72 = vector.broadcast %71 : vector<8x1xf32> to vector<8x8xf32>
    %73 = arith.mulf %70, %72 : vector<8x8xf32>
    %74 = tpu.concatenate %22, %39, %56, %73 in 1 : vector<8x8xf32>, vector<8x8xf32>, vector<8x8xf32>, vector<8x8xf32> -> vector<8x32xf32>
    %c0_27 = arith.constant 0 : index
    %c0_28 = arith.constant 0 : index
    %c0_29 = arith.constant 0 : index
    %75 = vector.load %arg5[%c0_27, %c0_28, %c0_29] : memref<1x8x32xf32, #tpu.memory_space<vmem>>, vector<1x8x32xf32>
    %76 = vector.shape_cast %75 : vector<1x8x32xf32> to vector<8x32xf32>
    %77 = vector.shape_cast %74 : vector<8x32xf32> to vector<1x8x32xf32>
    tpu.vector_store %arg5[%c0_27, %c0_28, %c0_29], %77 {strides = array<i32>} : memref<1x8x32xf32, #tpu.memory_space<vmem>>, vector<1x8x32xf32>,
    return
  }
  func.func @transform_0(%arg0: i32, %arg1: i32) -> (i32, i32, i32) {
    %c0_i32 = arith.constant 0 : i32
    %c0_i32_0 = arith.constant 0 : i32
    return %arg0, %arg1, %c0_i32 : i32, i32, i32
  }
  func.func @transform_1(%arg0: i32, %arg1: i32) -> (i32, i32, i32) {
    %c0_i32 = arith.constant 0 : i32
    %c0_i32_0 = arith.constant 0 : i32
    %c0_i32_1 = arith.constant 0 : i32
    return %arg0, %c0_i32, %c0_i32_0 : i32, i32, i32
  }
  func.func @transform_2(%arg0: i32, %arg1: i32) -> (i32, i32, i32) {
    %c0_i32 = arith.constant 0 : i32
    %c0_i32_0 = arith.constant 0 : i32
    %c0_i32_1 = arith.constant 0 : i32
    return %arg0, %c0_i32, %c0_i32_0 : i32, i32, i32
  }
  func.func @transform_3(%arg0: i32, %arg1: i32) -> (i32, i32, i32) {
    %c0_i32 = arith.constant 0 : i32
    %c0_i32_0 = arith.constant 0 : i32
    return %arg0, %arg1, %c0_i32 : i32, i32, i32
  }
}

module attributes {stable_mosaic.version = 11 : i64} {
  func.func @_embed_qkv_kernel(%arg0: i32, %arg1: i32, %arg2: memref<1x8x16xf32, #tpu.memory_space<vmem>>, %arg3: memref<8x32xf32, #tpu.memory_space<vmem>>, %arg4: memref<16x32xf32, #tpu.memory_space<vmem>>, %arg5: memref<1x32xf32, #tpu.memory_space<vmem>>, %arg6: memref<32x32xf32, #tpu.memory_space<vmem>>, %arg7: memref<32x32xf32, #tpu.memory_space<vmem>>, %arg8: memref<32x32xf32, #tpu.memory_space<vmem>>, %arg9: memref<1x32xf32, #tpu.memory_space<vmem>>, %arg10: memref<1x32xf32, #tpu.memory_space<vmem>>, %arg11: memref<1x32xf32, #tpu.memory_space<vmem>>, %arg12: memref<1x8x32xf32, #tpu.memory_space<vmem>>, %arg13: memref<1x8x32xf32, #tpu.memory_space<vmem>>, %arg14: memref<1x8x32xf32, #tpu.memory_space<vmem>>, %arg15: memref<1x8x32xf32, #tpu.memory_space<vmem>>) attributes {dimension_semantics = [#tpu.dimension_semantics<parallel>, #tpu.dimension_semantics<parallel>], iteration_bounds = array<i64: 2, 1>, scalar_prefetch = 0 : i64, scratch_operands = 0 : i64, tpu.core_type = #tpu.core_type<tc>, window_params = [{transform_indices = @transform_0, window_bounds = array<i64: 1, 8, 16>}, {transform_indices = @transform_1, window_bounds = array<i64: 8, 32>}, {pipeline_mode = #tpu.pipeline_mode<synchronous>, transform_indices = @transform_2, window_bounds = array<i64: 16, 32>}, {pipeline_mode = #tpu.pipeline_mode<synchronous>, transform_indices = @transform_3, window_bounds = array<i64: 1, 32>}, {pipeline_mode = #tpu.pipeline_mode<synchronous>, transform_indices = @transform_4, window_bounds = array<i64: 32, 32>}, {pipeline_mode = #tpu.pipeline_mode<synchronous>, transform_indices = @transform_5, window_bounds = array<i64: 32, 32>}, {pipeline_mode = #tpu.pipeline_mode<synchronous>, transform_indices = @transform_6, window_bounds = array<i64: 32, 32>}, {pipeline_mode = #tpu.pipeline_mode<synchronous>, transform_indices = @transform_7, window_bounds = array<i64: 1, 32>}, {pipeline_mode = #tpu.pipeline_mode<synchronous>, transform_indices = @transform_8, window_bounds = array<i64: 1, 32>}, {pipeline_mode = #tpu.pipeline_mode<synchronous>, transform_indices = @transform_9, window_bounds = array<i64: 1, 32>}, {transform_indices = @transform_10, window_bounds = array<i64: 1, 8, 32>}, {transform_indices = @transform_11, window_bounds = array<i64: 1, 8, 32>}, {transform_indices = @transform_12, window_bounds = array<i64: 1, 8, 32>}, {transform_indices = @transform_13, window_bounds = array<i64: 1, 8, 32>}]} {
    %c0 = arith.constant 0 : index
    %c0_0 = arith.constant 0 : index
    %c0_1 = arith.constant 0 : index
    %0 = vector.load %arg2[%c0, %c0_0, %c0_1] : memref<1x8x16xf32, #tpu.memory_space<vmem>>, vector<1x8x16xf32>
    %1 = vector.shape_cast %0 : vector<1x8x16xf32> to vector<8x16xf32>
    %c0_2 = arith.constant 0 : index
    %c0_3 = arith.constant 0 : index
    %2 = vector.load %arg4[%c0_2, %c0_3] : memref<16x32xf32, #tpu.memory_space<vmem>>, vector<16x32xf32>
    %cst = arith.constant dense<0.000000e+00> : vector<8x32xf32>
    %3 = tpu.matmul %1, %2, %cst {dimension_numbers = #tpu.dot_dimension_numbers<[1], [0], [0], [1], [0, 0, 1, 1], [], []>} : vector<8x16xf32>, vector<16x32xf32>, vector<8x32xf32> -> vector<8x32xf32>
    %c0_4 = arith.constant 0 : index
    %c0_5 = arith.constant 0 : index
    %4 = vector.load %arg5[%c0_4, %c0_5] : memref<1x32xf32, #tpu.memory_space<vmem>>, vector<1x32xf32>
    %5 = vector.broadcast %4 : vector<1x32xf32> to vector<8x32xf32>
    %6 = arith.addf %3, %5 : vector<8x32xf32>
    %c0_6 = arith.constant 0 : index
    %c0_7 = arith.constant 0 : index
    %7 = vector.load %arg3[%c0_6, %c0_7] : memref<8x32xf32, #tpu.memory_space<vmem>>, vector<8x32xf32>
    %8 = arith.addf %6, %7 : vector<8x32xf32>
    %c0_8 = arith.constant 0 : index
    %c0_9 = arith.constant 0 : index
    %c0_10 = arith.constant 0 : index
    %9 = vector.load %arg12[%c0_8, %c0_9, %c0_10] : memref<1x8x32xf32, #tpu.memory_space<vmem>>, vector<1x8x32xf32>
    %10 = vector.shape_cast %9 : vector<1x8x32xf32> to vector<8x32xf32>
    %11 = vector.shape_cast %8 : vector<8x32xf32> to vector<1x8x32xf32>
    tpu.vector_store %arg12[%c0_8, %c0_9, %c0_10], %11 {strides = array<i32>} : memref<1x8x32xf32, #tpu.memory_space<vmem>>, vector<1x8x32xf32>,
    %c0_11 = arith.constant 0 : index
    %c0_12 = arith.constant 0 : index
    %12 = vector.load %arg6[%c0_11, %c0_12] : memref<32x32xf32, #tpu.memory_space<vmem>>, vector<32x32xf32>
    %cst_13 = arith.constant dense<0.000000e+00> : vector<8x32xf32>
    %13 = tpu.matmul %8, %12, %cst_13 {dimension_numbers = #tpu.dot_dimension_numbers<[1], [0], [0], [1], [0, 0, 1, 1], [], []>} : vector<8x32xf32>, vector<32x32xf32>, vector<8x32xf32> -> vector<8x32xf32>
    %c0_14 = arith.constant 0 : index
    %c0_15 = arith.constant 0 : index
    %14 = vector.load %arg9[%c0_14, %c0_15] : memref<1x32xf32, #tpu.memory_space<vmem>>, vector<1x32xf32>
    %15 = vector.broadcast %14 : vector<1x32xf32> to vector<8x32xf32>
    %16 = arith.addf %13, %15 : vector<8x32xf32>
    %c0_16 = arith.constant 0 : index
    %c0_17 = arith.constant 0 : index
    %c0_18 = arith.constant 0 : index
    %17 = vector.load %arg13[%c0_16, %c0_17, %c0_18] : memref<1x8x32xf32, #tpu.memory_space<vmem>>, vector<1x8x32xf32>
    %18 = vector.shape_cast %17 : vector<1x8x32xf32> to vector<8x32xf32>
    %19 = vector.shape_cast %16 : vector<8x32xf32> to vector<1x8x32xf32>
    tpu.vector_store %arg13[%c0_16, %c0_17, %c0_18], %19 {strides = array<i32>} : memref<1x8x32xf32, #tpu.memory_space<vmem>>, vector<1x8x32xf32>,
    %c0_19 = arith.constant 0 : index
    %c0_20 = arith.constant 0 : index
    %20 = vector.load %arg7[%c0_19, %c0_20] : memref<32x32xf32, #tpu.memory_space<vmem>>, vector<32x32xf32>
    %cst_21 = arith.constant dense<0.000000e+00> : vector<8x32xf32>
    %21 = tpu.matmul %8, %20, %cst_21 {dimension_numbers = #tpu.dot_dimension_numbers<[1], [0], [0], [1], [0, 0, 1, 1], [], []>} : vector<8x32xf32>, vector<32x32xf32>, vector<8x32xf32> -> vector<8x32xf32>
    %c0_22 = arith.constant 0 : index
    %c0_23 = arith.constant 0 : index
    %22 = vector.load %arg10[%c0_22, %c0_23] : memref<1x32xf32, #tpu.memory_space<vmem>>, vector<1x32xf32>
    %23 = vector.broadcast %22 : vector<1x32xf32> to vector<8x32xf32>
    %24 = arith.addf %21, %23 : vector<8x32xf32>
    %c0_24 = arith.constant 0 : index
    %c0_25 = arith.constant 0 : index
    %c0_26 = arith.constant 0 : index
    %25 = vector.load %arg14[%c0_24, %c0_25, %c0_26] : memref<1x8x32xf32, #tpu.memory_space<vmem>>, vector<1x8x32xf32>
    %26 = vector.shape_cast %25 : vector<1x8x32xf32> to vector<8x32xf32>
    %27 = vector.shape_cast %24 : vector<8x32xf32> to vector<1x8x32xf32>
    tpu.vector_store %arg14[%c0_24, %c0_25, %c0_26], %27 {strides = array<i32>} : memref<1x8x32xf32, #tpu.memory_space<vmem>>, vector<1x8x32xf32>,
    %c0_27 = arith.constant 0 : index
    %c0_28 = arith.constant 0 : index
    %28 = vector.load %arg8[%c0_27, %c0_28] : memref<32x32xf32, #tpu.memory_space<vmem>>, vector<32x32xf32>
    %cst_29 = arith.constant dense<0.000000e+00> : vector<8x32xf32>
    %29 = tpu.matmul %8, %28, %cst_29 {dimension_numbers = #tpu.dot_dimension_numbers<[1], [0], [0], [1], [0, 0, 1, 1], [], []>} : vector<8x32xf32>, vector<32x32xf32>, vector<8x32xf32> -> vector<8x32xf32>
    %c0_30 = arith.constant 0 : index
    %c0_31 = arith.constant 0 : index
    %30 = vector.load %arg11[%c0_30, %c0_31] : memref<1x32xf32, #tpu.memory_space<vmem>>, vector<1x32xf32>
    %31 = vector.broadcast %30 : vector<1x32xf32> to vector<8x32xf32>
    %32 = arith.addf %29, %31 : vector<8x32xf32>
    %c0_32 = arith.constant 0 : index
    %c0_33 = arith.constant 0 : index
    %c0_34 = arith.constant 0 : index
    %33 = vector.load %arg15[%c0_32, %c0_33, %c0_34] : memref<1x8x32xf32, #tpu.memory_space<vmem>>, vector<1x8x32xf32>
    %34 = vector.shape_cast %33 : vector<1x8x32xf32> to vector<8x32xf32>
    %35 = vector.shape_cast %32 : vector<8x32xf32> to vector<1x8x32xf32>
    tpu.vector_store %arg15[%c0_32, %c0_33, %c0_34], %35 {strides = array<i32>} : memref<1x8x32xf32, #tpu.memory_space<vmem>>, vector<1x8x32xf32>,
    return
  }
  func.func @transform_0(%arg0: i32, %arg1: i32) -> (i32, i32, i32) {
    %c0_i32 = arith.constant 0 : i32
    %c0_i32_0 = arith.constant 0 : i32
    return %arg0, %arg1, %c0_i32 : i32, i32, i32
  }
  func.func @transform_1(%arg0: i32, %arg1: i32) -> (i32, i32) {
    %c0_i32 = arith.constant 0 : i32
    %c0_i32_0 = arith.constant 0 : i32
    return %arg1, %c0_i32 : i32, i32
  }
  func.func @transform_2(%arg0: i32, %arg1: i32) -> (i32, i32) {
    %c0_i32 = arith.constant 0 : i32
    %c0_i32_0 = arith.constant 0 : i32
    %c0_i32_1 = arith.constant 0 : i32
    return %c0_i32, %c0_i32_0 : i32, i32
  }
  func.func @transform_3(%arg0: i32, %arg1: i32) -> (i32, i32) {
    %c0_i32 = arith.constant 0 : i32
    %c0_i32_0 = arith.constant 0 : i32
    %c0_i32_1 = arith.constant 0 : i32
    return %c0_i32, %c0_i32_0 : i32, i32
  }
  func.func @transform_4(%arg0: i32, %arg1: i32) -> (i32, i32) {
    %c0_i32 = arith.constant 0 : i32
    %c0_i32_0 = arith.constant 0 : i32
    %c0_i32_1 = arith.constant 0 : i32
    return %c0_i32, %c0_i32_0 : i32, i32
  }
  func.func @transform_5(%arg0: i32, %arg1: i32) -> (i32, i32) {
    %c0_i32 = arith.constant 0 : i32
    %c0_i32_0 = arith.constant 0 : i32
    %c0_i32_1 = arith.constant 0 : i32
    return %c0_i32, %c0_i32_0 : i32, i32
  }
  func.func @transform_6(%arg0: i32, %arg1: i32) -> (i32, i32) {
    %c0_i32 = arith.constant 0 : i32
    %c0_i32_0 = arith.constant 0 : i32
    %c0_i32_1 = arith.constant 0 : i32
    return %c0_i32, %c0_i32_0 : i32, i32
  }
  func.func @transform_7(%arg0: i32, %arg1: i32) -> (i32, i32) {
    %c0_i32 = arith.constant 0 : i32
    %c0_i32_0 = arith.constant 0 : i32
    %c0_i32_1 = arith.constant 0 : i32
    return %c0_i32, %c0_i32_0 : i32, i32
  }
  func.func @transform_8(%arg0: i32, %arg1: i32) -> (i32, i32) {
    %c0_i32 = arith.constant 0 : i32
    %c0_i32_0 = arith.constant 0 : i32
    %c0_i32_1 = arith.constant 0 : i32
    return %c0_i32, %c0_i32_0 : i32, i32
  }
  func.func @transform_9(%arg0: i32, %arg1: i32) -> (i32, i32) {
    %c0_i32 = arith.constant 0 : i32
    %c0_i32_0 = arith.constant 0 : i32
    %c0_i32_1 = arith.constant 0 : i32
    return %c0_i32, %c0_i32_0 : i32, i32
  }
  func.func @transform_10(%arg0: i32, %arg1: i32) -> (i32, i32, i32) {
    %c0_i32 = arith.constant 0 : i32
    %c0_i32_0 = arith.constant 0 : i32
    return %arg0, %arg1, %c0_i32 : i32, i32, i32
  }
  func.func @transform_11(%arg0: i32, %arg1: i32) -> (i32, i32, i32) {
    %c0_i32 = arith.constant 0 : i32
    %c0_i32_0 = arith.constant 0 : i32
    return %arg0, %arg1, %c0_i32 : i32, i32, i32
  }
  func.func @transform_12(%arg0: i32, %arg1: i32) -> (i32, i32, i32) {
    %c0_i32 = arith.constant 0 : i32
    %c0_i32_0 = arith.constant 0 : i32
    return %arg0, %arg1, %c0_i32 : i32, i32, i32
  }
  func.func @transform_13(%arg0: i32, %arg1: i32) -> (i32, i32, i32) {
    %c0_i32 = arith.constant 0 : i32
    %c0_i32_0 = arith.constant 0 : i32
    return %arg0, %arg1, %c0_i32 : i32, i32, i32
  }
}

module attributes {stable_mosaic.version = 11 : i64} {
  func.func @_mlp_ln_out_kernel(%arg0: i32, %arg1: memref<16x32xf32, #tpu.memory_space<vmem>>, %arg2: memref<32x64xf32, #tpu.memory_space<vmem>>, %arg3: memref<1x64xf32, #tpu.memory_space<vmem>>, %arg4: memref<64x32xf32, #tpu.memory_space<vmem>>, %arg5: memref<1x32xf32, #tpu.memory_space<vmem>>, %arg6: memref<1x32xf32, #tpu.memory_space<vmem>>, %arg7: memref<1x32xf32, #tpu.memory_space<vmem>>, %arg8: memref<32x8xf32, #tpu.memory_space<vmem>>, %arg9: memref<1x8xf32, #tpu.memory_space<vmem>>, %arg10: memref<16x8xf32, #tpu.memory_space<vmem>>) attributes {dimension_semantics = [#tpu.dimension_semantics<parallel>], iteration_bounds = array<i64: 1>, scalar_prefetch = 0 : i64, scratch_operands = 0 : i64, tpu.core_type = #tpu.core_type<tc>, window_params = [{transform_indices = @transform_0, window_bounds = array<i64: 16, 32>}, {pipeline_mode = #tpu.pipeline_mode<synchronous>, transform_indices = @transform_1, window_bounds = array<i64: 32, 64>}, {pipeline_mode = #tpu.pipeline_mode<synchronous>, transform_indices = @transform_2, window_bounds = array<i64: 1, 64>}, {pipeline_mode = #tpu.pipeline_mode<synchronous>, transform_indices = @transform_3, window_bounds = array<i64: 64, 32>}, {pipeline_mode = #tpu.pipeline_mode<synchronous>, transform_indices = @transform_4, window_bounds = array<i64: 1, 32>}, {pipeline_mode = #tpu.pipeline_mode<synchronous>, transform_indices = @transform_5, window_bounds = array<i64: 1, 32>}, {pipeline_mode = #tpu.pipeline_mode<synchronous>, transform_indices = @transform_6, window_bounds = array<i64: 1, 32>}, {pipeline_mode = #tpu.pipeline_mode<synchronous>, transform_indices = @transform_7, window_bounds = array<i64: 32, 8>}, {pipeline_mode = #tpu.pipeline_mode<synchronous>, transform_indices = @transform_8, window_bounds = array<i64: 1, 8>}, {transform_indices = @transform_9, window_bounds = array<i64: 16, 8>}]} {
    %c0 = arith.constant 0 : index
    %c0_0 = arith.constant 0 : index
    %0 = vector.load %arg1[%c0, %c0_0] : memref<16x32xf32, #tpu.memory_space<vmem>>, vector<16x32xf32>
    %c0_1 = arith.constant 0 : index
    %c0_2 = arith.constant 0 : index
    %1 = vector.load %arg2[%c0_1, %c0_2] : memref<32x64xf32, #tpu.memory_space<vmem>>, vector<32x64xf32>
    %cst = arith.constant dense<0.000000e+00> : vector<16x64xf32>
    %2 = tpu.matmul %0, %1, %cst {dimension_numbers = #tpu.dot_dimension_numbers<[1], [0], [0], [1], [0, 0, 1, 1], [], []>} : vector<16x32xf32>, vector<32x64xf32>, vector<16x64xf32> -> vector<16x64xf32>
    %c0_3 = arith.constant 0 : index
    %c0_4 = arith.constant 0 : index
    %3 = vector.load %arg3[%c0_3, %c0_4] : memref<1x64xf32, #tpu.memory_space<vmem>>, vector<1x64xf32>
    %4 = vector.broadcast %3 : vector<1x64xf32> to vector<16x64xf32>
    %5 = arith.addf %2, %4 : vector<16x64xf32>
    %cst_5 = arith.constant 0.000000e+00 : f32
    %6 = vector.broadcast %cst_5 : f32 to vector<16x64xf32>
    %7 = arith.maximumf %5, %6 : vector<16x64xf32>
    %c0_6 = arith.constant 0 : index
    %c0_7 = arith.constant 0 : index
    %8 = vector.load %arg4[%c0_6, %c0_7] : memref<64x32xf32, #tpu.memory_space<vmem>>, vector<64x32xf32>
    %cst_8 = arith.constant dense<0.000000e+00> : vector<16x32xf32>
    %9 = tpu.matmul %7, %8, %cst_8 {dimension_numbers = #tpu.dot_dimension_numbers<[1], [0], [0], [1], [0, 0, 1, 1], [], []>} : vector<16x64xf32>, vector<64x32xf32>, vector<16x32xf32> -> vector<16x32xf32>
    %c0_9 = arith.constant 0 : index
    %c0_10 = arith.constant 0 : index
    %10 = vector.load %arg5[%c0_9, %c0_10] : memref<1x32xf32, #tpu.memory_space<vmem>>, vector<1x32xf32>
    %11 = vector.broadcast %10 : vector<1x32xf32> to vector<16x32xf32>
    %12 = arith.addf %9, %11 : vector<16x32xf32>
    %13 = arith.addf %0, %12 : vector<16x32xf32>
    %cst_11 = arith.constant dense<0.000000e+00> : vector<16xf32>
    %14 = vector.multi_reduction <add>, %13, %cst_11 [1] : vector<16x32xf32> to vector<16xf32>
    %15 = vector.shape_cast %14 : vector<16xf32> to vector<16x1xf32>
    %cst_12 = arith.constant 3.200000e+01 : f32
    %16 = vector.broadcast %cst_12 : f32 to vector<16x1xf32>
    %17 = arith.divf %15, %16 : vector<16x1xf32>
    %18 = vector.broadcast %17 : vector<16x1xf32> to vector<16x32xf32>
    %19 = arith.subf %13, %18 : vector<16x32xf32>
    %20 = arith.mulf %19, %19 : vector<16x32xf32>
    %cst_13 = arith.constant dense<0.000000e+00> : vector<16xf32>
    %21 = vector.multi_reduction <add>, %20, %cst_13 [1] : vector<16x32xf32> to vector<16xf32>
    %22 = vector.shape_cast %21 : vector<16xf32> to vector<16x1xf32>
    %cst_14 = arith.constant 3.200000e+01 : f32
    %23 = vector.broadcast %cst_14 : f32 to vector<16x1xf32>
    %24 = arith.divf %22, %23 : vector<16x1xf32>
    %cst_15 = arith.constant 9.99999974E-6 : f32
    %25 = vector.broadcast %cst_15 : f32 to vector<16x1xf32>
    %26 = arith.addf %24, %25 : vector<16x1xf32>
    %27 = math.rsqrt %26 : vector<16x1xf32>
    %28 = vector.broadcast %27 : vector<16x1xf32> to vector<16x32xf32>
    %29 = arith.mulf %19, %28 : vector<16x32xf32>
    %c0_16 = arith.constant 0 : index
    %c0_17 = arith.constant 0 : index
    %30 = vector.load %arg6[%c0_16, %c0_17] : memref<1x32xf32, #tpu.memory_space<vmem>>, vector<1x32xf32>
    %31 = vector.broadcast %30 : vector<1x32xf32> to vector<16x32xf32>
    %32 = arith.mulf %29, %31 : vector<16x32xf32>
    %c0_18 = arith.constant 0 : index
    %c0_19 = arith.constant 0 : index
    %33 = vector.load %arg7[%c0_18, %c0_19] : memref<1x32xf32, #tpu.memory_space<vmem>>, vector<1x32xf32>
    %34 = vector.broadcast %33 : vector<1x32xf32> to vector<16x32xf32>
    %35 = arith.addf %32, %34 : vector<16x32xf32>
    %c0_20 = arith.constant 0 : index
    %c0_21 = arith.constant 0 : index
    %36 = vector.load %arg8[%c0_20, %c0_21] : memref<32x8xf32, #tpu.memory_space<vmem>>, vector<32x8xf32>
    %cst_22 = arith.constant dense<0.000000e+00> : vector<16x8xf32>
    %37 = tpu.matmul %35, %36, %cst_22 {dimension_numbers = #tpu.dot_dimension_numbers<[1], [0], [0], [1], [0, 0, 1, 1], [], []>} : vector<16x32xf32>, vector<32x8xf32>, vector<16x8xf32> -> vector<16x8xf32>
    %c0_23 = arith.constant 0 : index
    %c0_24 = arith.constant 0 : index
    %38 = vector.load %arg9[%c0_23, %c0_24] : memref<1x8xf32, #tpu.memory_space<vmem>>, vector<1x8xf32>
    %39 = vector.broadcast %38 : vector<1x8xf32> to vector<16x8xf32>
    %40 = arith.addf %37, %39 : vector<16x8xf32>
    %c0_25 = arith.constant 0 : index
    %c0_26 = arith.constant 0 : index
    %41 = vector.load %arg10[%c0_25, %c0_26] : memref<16x8xf32, #tpu.memory_space<vmem>>, vector<16x8xf32>
    tpu.vector_store %arg10[%c0_25, %c0_26], %40 {strides = array<i32>} : memref<16x8xf32, #tpu.memory_space<vmem>>, vector<16x8xf32>,
    return
  }
  func.func @transform_0(%arg0: i32) -> (i32, i32) {
    %c0_i32 = arith.constant 0 : i32
    %c0_i32_0 = arith.constant 0 : i32
    return %arg0, %c0_i32 : i32, i32
  }
  func.func @transform_1(%arg0: i32) -> (i32, i32) {
    %c0_i32 = arith.constant 0 : i32
    %c0_i32_0 = arith.constant 0 : i32
    %c0_i32_1 = arith.constant 0 : i32
    return %c0_i32, %c0_i32_0 : i32, i32
  }
  func.func @transform_2(%arg0: i32) -> (i32, i32) {
    %c0_i32 = arith.constant 0 : i32
    %c0_i32_0 = arith.constant 0 : i32
    %c0_i32_1 = arith.constant 0 : i32
    return %c0_i32, %c0_i32_0 : i32, i32
  }
  func.func @transform_3(%arg0: i32) -> (i32, i32) {
    %c0_i32 = arith.constant 0 : i32
    %c0_i32_0 = arith.constant 0 : i32
    %c0_i32_1 = arith.constant 0 : i32
    return %c0_i32, %c0_i32_0 : i32, i32
  }
  func.func @transform_4(%arg0: i32) -> (i32, i32) {
    %c0_i32 = arith.constant 0 : i32
    %c0_i32_0 = arith.constant 0 : i32
    %c0_i32_1 = arith.constant 0 : i32
    return %c0_i32, %c0_i32_0 : i32, i32
  }
  func.func @transform_5(%arg0: i32) -> (i32, i32) {
    %c0_i32 = arith.constant 0 : i32
    %c0_i32_0 = arith.constant 0 : i32
    %c0_i32_1 = arith.constant 0 : i32
    return %c0_i32, %c0_i32_0 : i32, i32
  }
  func.func @transform_6(%arg0: i32) -> (i32, i32) {
    %c0_i32 = arith.constant 0 : i32
    %c0_i32_0 = arith.constant 0 : i32
    %c0_i32_1 = arith.constant 0 : i32
    return %c0_i32, %c0_i32_0 : i32, i32
  }
  func.func @transform_7(%arg0: i32) -> (i32, i32) {
    %c0_i32 = arith.constant 0 : i32
    %c0_i32_0 = arith.constant 0 : i32
    %c0_i32_1 = arith.constant 0 : i32
    return %c0_i32, %c0_i32_0 : i32, i32
  }
  func.func @transform_8(%arg0: i32) -> (i32, i32) {
    %c0_i32 = arith.constant 0 : i32
    %c0_i32_0 = arith.constant 0 : i32
    %c0_i32_1 = arith.constant 0 : i32
    return %c0_i32, %c0_i32_0 : i32, i32
  }
  func.func @transform_9(%arg0: i32) -> (i32, i32) {
    %c0_i32 = arith.constant 0 : i32
    %c0_i32_0 = arith.constant 0 : i32
    return %arg0, %c0_i32 : i32, i32
  }
}

</mosaic_0001>

<llo_original>
// kernel: transformer_forward.6
$region0: #{transformer_forward.6}
  #allocation0 [shape = 'u32[]', space=smem, size = 0x4, offset = 0x4, fixed_abs, tag = 'smem constant byte address 0x4 - core index']
  #allocation1 [shape = 'u32[144,128]{1,0:T(1,128)}', space=vmem, size = 0x12000, scoped, tag = 'internal scratch']
  %s0 = inlined_call_operand.vmem [shape: f32[16,32], index: 0, kind: input, shape index: {}]
  %s1 = inlined_call_operand.vmem [shape: f32[16,32], index: 1, kind: input, shape index: {}]
  %s2 = inlined_call_operand.vmem [shape: f32[32,32], index: 2, kind: input, shape index: {}]
  %s3 = inlined_call_operand.vmem [shape: f32[1,32], index: 3, kind: input, shape index: {}]
  %s4 = inlined_call_operand.vmem [shape: f32[1,32], index: 4, kind: input, shape index: {}]
  %s5 = inlined_call_operand.vmem [shape: f32[1,32], index: 5, kind: input, shape index: {}]
  %s6 = inlined_call_operand.vmem [shape: f32[16,32], index: 6, kind: output, shape index: {}]
  %s7 = sld [smem:[#allocation0]]
  $region34: #{transformer_forward.6} parent=0
    _
  %s9 = ssub.s32 1, %s7
  %s10 = scalar_select 0, %s9, %s7
  // Predicated region
  $region2: #{transformer_forward.6} parent=0 // pred_check
    _
  $region3: #{transformer_forward.6} parent=0 // pred_check_branch
    %12 = sbr.rel (0) target = $region5
  $region4: #{transformer_forward.6} parent=0 // pred_region
    _
  $region5: #{transformer_forward.6} parent=0 // pred_fallthru
    _
  // Predicated region
  $region6: #{transformer_forward.6} parent=0 // pred_check
    _
  $region7: #{transformer_forward.6} parent=0 // pred_check_branch
    %14 = sbr.rel (0) target = $region9
  $region8: #{transformer_forward.6} parent=0 // pred_region
    _
  $region9: #{transformer_forward.6} parent=0 // pred_fallthru
    _
  // Predicated region
  $region10: #{transformer_forward.6} parent=0 // pred_check
    _
  $region11: #{transformer_forward.6} parent=0 // pred_check_branch
    %16 = sbr.rel (0) target = $region13
  $region12: #{transformer_forward.6} parent=0 // pred_region
    _
  $region13: #{transformer_forward.6} parent=0 // pred_fallthru
    _
  // Predicated region
  $region14: #{transformer_forward.6} parent=0 // pred_check
    _
  $region15: #{transformer_forward.6} parent=0 // pred_check_branch
    %18 = sbr.rel (0) target = $region17
  $region16: #{transformer_forward.6} parent=0 // pred_region
    _
  $region17: #{transformer_forward.6} parent=0 // pred_fallthru
    _
  // Predicated region
  $region18: #{transformer_forward.6} parent=0 // pred_check
    _
  $region19: #{transformer_forward.6} parent=0 // pred_check_branch
    %20 = sbr.rel (0) target = $region21
  $region20: #{transformer_forward.6} parent=0 // pred_region
    _
  $region21: #{transformer_forward.6} parent=0 // pred_fallthru
    _
  // Predicated region
  $region22: #{transformer_forward.6} parent=0 // pred_check
    _
  $region23: #{transformer_forward.6} parent=0 // pred_check_branch
    %22 = sbr.rel (0) target = $region25
  $region24: #{transformer_forward.6} parent=0 // pred_region
    _
  $region25: #{transformer_forward.6} parent=0 // pred_fallthru
    _
  %v23 = vld [vmem:[%s0] sm:$0xff]
  %v24 = vld [vmem:[%s0 + $0x8] sm:$0xff]
  %v25 = vld [vmem:[%s2] sm:$0xff]
  %v26 = vld [vmem:[%s2 + $0x8] sm:$0xff]
  %v27 = vld [vmem:[%s2 + $0x10] sm:$0xff]
  %v28 = vld [vmem:[%s2 + $0x18] sm:$0xff]
  %v29 = vld [vmem:[%s3] sm:$0x1]
  %v31 = vlaneseq
  %v32 = vshrl.u32 %v31, 7
  %v33 = vsub.s32 0, %v32
  %v34 = vrot.slane %v29, %v33
  %vm36 = vcmask 261120
  %v38 = vsel %vm36, %v23, 0
  %v41 = vsel %vm36, %v24, 0
  %43 = vmatprep.subr.mxu0 0.0
  %44 = vmatpush1.msra.mxu0 0.0
  %45 = vmatprep.subr.mxu0 0.0
  %46 = vmatpush1.msra.mxu0 0.0
  %47 = vmatprep.subr.mxu0 0.0
  %48 = vmatpush1.msra.mxu0 0.0
  %49 = vmatprep.subr.mxu0 0.0
  %50 = vmatpush1.msra.mxu0 0.0
  %51 = vmatprep.subr.mxu0 0.0
  %52 = vmatpush1.msra.mxu0 0.0
  %53 = vmatprep.subr.mxu0 0.0
  %54 = vmatpush1.msra.mxu0 0.0
  %55 = vmatprep.subr.mxu0 0.0
  %56 = vmatpush1.msra.mxu0 0.0
  %57 = vmatprep.subr.mxu0 0.0
  %58 = vmatpush1.msra.mxu0 0.0
  %59 = vmatprep.subr.mxu0 0.0
  %60 = vmatpush1.msra.mxu0 0.0
  %61 = vmatprep.subr.mxu0 0.0
  %62 = vmatpush1.msra.mxu0 0.0
  %63 = vmatprep.subr.mxu0 0.0
  %64 = vmatpush1.msra.mxu0 0.0
  %65 = vmatprep.subr.mxu0 0.0
  %66 = vmatpush1.msra.mxu0 0.0
  %67 = vmatprep.subr.mxu0 0.0
  %68 = vmatpush1.msra.mxu0 %v28
  %69 = vmatprep.subr.mxu0 0.0
  %70 = vmatpush1.msra.mxu0 %v27
  %71 = vmatprep.subr.mxu0 0.0
  %72 = vmatpush1.msra.mxu0 %v26
  %73 = vmatprep.subr.mxu0 0.0
  %74 = vmatpush1.msra.mxu0 %v25
  %75 = vmatprep.subr.mxu0 0.0
  %76 = vmatpush2.msra.mxu0 0.0
  %77 = vmatprep.subr.mxu0 0.0
  %78 = vmatpush2.msra.mxu0 0.0
  %79 = vmatprep.subr.mxu0 0.0
  %80 = vmatpush2.msra.mxu0 0.0
  %81 = vmatprep.subr.mxu0 0.0
  %82 = vmatpush2.msra.mxu0 0.0
  %83 = vmatprep.subr.mxu0 0.0
  %84 = vmatpush2.msra.mxu0 0.0
  %85 = vmatprep.subr.mxu0 0.0
  %86 = vmatpush2.msra.mxu0 0.0
  %87 = vmatprep.subr.mxu0 0.0
  %88 = vmatpush2.msra.mxu0 0.0
  %89 = vmatprep.subr.mxu0 0.0
  %90 = vmatpush2.msra.mxu0 0.0
  %91 = vmatprep.subr.mxu0 0.0
  %92 = vmatpush2.msra.mxu0 0.0
  %93 = vmatprep.subr.mxu0 0.0
  %94 = vmatpush2.msra.mxu0 0.0
  %95 = vmatprep.subr.mxu0 0.0
  %96 = vmatpush2.msra.mxu0 0.0
  %97 = vmatprep.subr.mxu0 0.0
  %98 = vmatpush2.msra.mxu0 0.0
  %99 = vmatprep.subr.mxu0 0.0
  %100 = vmatpush2.msra.mxu0 0.0
  %101 = vmatprep.subr.mxu0 0.0
  %102 = vmatpush2.msra.mxu0 0.0
  %103 = vmatprep.subr.mxu0 0.0
  %104 = vmatpush2.msra.mxu0 0.0
  %105 = vmatprep.subr.mxu0 0.0
  %106 = vmatpush2.msra.mxu0 0.0
  %107 = vmatprep.mubr.f32.mxu0 0.0
  %108 = vmatmul.mubr.f32.gmra.mxu0 %v38
  %v109 = vpop.f32.mrf.mxu0
  %v110 = vadd.f32 %v34, %v109
  %v111 = vpop.f32.mrf.mxu0
  %112 = vmatprep.mubr.f32.mxu0 0.0
  %113 = vmatmul.mubr.f32.gmra.mxu0 %v41
  %v114 = vpop.f32.mrf.mxu0
  %v115 = vadd.f32 %v34, %v114
  %v116 = vpop.f32.mrf.mxu0
  %117 = vdwg.mxu0
  %v118 = vld [vmem:[%s1] sm:$0xff]
  %v119 = vld [vmem:[%s1 + $0x8] sm:$0xff]
  %v120 = vadd.f32 %v110, %v118
  %v121 = vadd.f32 %v115, %v119
  %v122 = vsel %vm36, %v120, 0.0
  %123 = vadd.xlane.f32.xlu0 %v122
  %v124 = vpop.xlane.xlu0 %123
  %v125 = vsel %vm36, %v121, 0.0
  %126 = vadd.xlane.f32.xlu0 %v125
  %v127 = vpop.xlane.xlu0 %126
  %v128 = vrcp.pop 32.0
  %v129 = vmul.f32 %v124, %v128
  %v130 = vmul.f32 %v127, %v128
  %v131 = vsub.f32 %v120, %v129
  %v132 = vsub.f32 %v121, %v130
  %v133 = vmul.f32 %v131, %v131
  %v134 = vmul.f32 %v132, %v132
  %v135 = vsel %vm36, %v133, 0.0
  %136 = vadd.xlane.f32.xlu0 %v135
  %v137 = vpop.xlane.xlu0 %136
  %v138 = vsel %vm36, %v134, 0.0
  %139 = vadd.xlane.f32.xlu0 %v138
  %v140 = vpop.xlane.xlu0 %139
  %v141 = vmul.f32 %v137, %v128
  %v142 = vmul.f32 %v140, %v128
  %v143 = vadd.f32 %v141, 1e-05
  %v144 = vadd.f32 %v142, 1e-05
  %v145 = vrsqrt.pop %v143
  %v146 = vrsqrt.pop %v144
  %v147 = vmul.f32 %v131, %v145
  %v148 = vmul.f32 %v132, %v146
  %v149 = vld [vmem:[%s4] sm:$0x1]
  %v151 = vlaneseq
  %v152 = vshrl.u32 %v151, 7
  %v153 = vsub.s32 0, %v152
  %v154 = vrot.slane %v149, %v153
  %v156 = vmul.f32 %v147, %v154
  %v157 = vmul.f32 %v148, %v154
  %v158 = vld [vmem:[%s5] sm:$0x1]
  %v160 = vlaneseq
  %v161 = vshrl.u32 %v160, 7
  %v162 = vsub.s32 0, %v161
  %v163 = vrot.slane %v158, %v162
  %v165 = vadd.f32 %v156, %v163
  %v166 = vadd.f32 %v157, %v163
  %167 = vst.msk [vmem:[%s6] sm:$0xff] %vm36, %v165
  %168 = vst.msk [vmem:[%s6 + $0x8] sm:$0xff] %vm36, %v166
  // Predicated region
  $region26: #{transformer_forward.6} parent=0 // pred_check
    _
  $region27: #{transformer_forward.6} parent=0 // pred_check_branch
    %170 = sbr.rel (0) target = $region29
  $region28: #{transformer_forward.6} parent=0 // pred_region
    _
  $region29: #{transformer_forward.6} parent=0 // pred_fallthru
    _
  // Predicated region
  $region30: #{transformer_forward.6} parent=0 // pred_check
    _
  $region31: #{transformer_forward.6} parent=0 // pred_check_branch
    %172 = sbr.rel (0) target = $region33
  $region32: #{transformer_forward.6} parent=0 // pred_region
    _
  $region33: #{transformer_forward.6} parent=0 // pred_fallthru
    _

// kernel: transformer_forward.7
$region0: #{transformer_forward.7}
  #allocation0 [shape = 'u32[]', space=smem, size = 0x4, offset = 0x4, fixed_abs, tag = 'smem constant byte address 0x4 - core index']
  #allocation1 [shape = 'u32[144,128]{1,0:T(1,128)}', space=vmem, size = 0x12000, scoped, tag = 'internal scratch']
  %s0 = inlined_call_operand.vmem [shape: f32[16,32], index: 0, kind: input, shape index: {}]
  %s1 = inlined_call_operand.vmem [shape: f32[32,64], index: 1, kind: input, shape index: {}]
  %s2 = inlined_call_operand.vmem [shape: f32[1,64], index: 2, kind: input, shape index: {}]
  %s3 = inlined_call_operand.vmem [shape: f32[64,32], index: 3, kind: input, shape index: {}]
  %s4 = inlined_call_operand.vmem [shape: f32[1,32], index: 4, kind: input, shape index: {}]
  %s5 = inlined_call_operand.vmem [shape: f32[1,32], index: 5, kind: input, shape index: {}]
  %s6 = inlined_call_operand.vmem [shape: f32[1,32], index: 6, kind: input, shape index: {}]
  %s7 = inlined_call_operand.vmem [shape: f32[32,8], index: 7, kind: input, shape index: {}]
  %s8 = inlined_call_operand.vmem [shape: f32[1,8], index: 8, kind: input, shape index: {}]
  %s9 = inlined_call_operand.hbm [shape: f32[16,8], index: 9, kind: output, shape index: {}]
  %s10 = sld [smem:[#allocation0]]
  $region46: #{transformer_forward.7} parent=0
    _
  %s12 = ssub.s32 1, %s10
  %s13 = scalar_select 0, %s12, %s10
  $region1: #{transformer_forward.7} parent=0
    #allocation2 [shape = 'u8[8192]{0}', space=vmem, size = 0x2000, scoped, tag = 'output window, operand 0, single buffered']
    #allocation3 [shape = 's32[1]{0}', space=sflag, size = 0x4, scoped, tag = 'scoped memory for transformer_forward.7']
    %14 = vsyncpa [#allocation3], 0
    // Predicated region
    $region2: #{transformer_forward.7} parent=1 // pred_check
      _
    $region3: #{transformer_forward.7} parent=1 // pred_check_branch
      %16 = sbr.rel (0) target = $region5
    $region4: #{transformer_forward.7} parent=1 // pred_region
      _
    $region5: #{transformer_forward.7} parent=1 // pred_fallthru
      _
    // Predicated region
    $region6: #{transformer_forward.7} parent=1 // pred_check
      _
    $region7: #{transformer_forward.7} parent=1 // pred_check_branch
      %18 = sbr.rel (0) target = $region9
    $region8: #{transformer_forward.7} parent=1 // pred_region
      _
    $region9: #{transformer_forward.7} parent=1 // pred_fallthru
      _
    // Predicated region
    $region10: #{transformer_forward.7} parent=1 // pred_check
      _
    $region11: #{transformer_forward.7} parent=1 // pred_check_branch
      %20 = sbr.rel (0) target = $region13
    $region12: #{transformer_forward.7} parent=1 // pred_region
      _
    $region13: #{transformer_forward.7} parent=1 // pred_fallthru
      _
    // Predicated region
    $region14: #{transformer_forward.7} parent=1 // pred_check
      _
    $region15: #{transformer_forward.7} parent=1 // pred_check_branch
      %22 = sbr.rel (0) target = $region17
    $region16: #{transformer_forward.7} parent=1 // pred_region
      _
    $region17: #{transformer_forward.7} parent=1 // pred_fallthru
      _
    // Predicated region
    $region18: #{transformer_forward.7} parent=1 // pred_check
      _
    $region19: #{transformer_forward.7} parent=1 // pred_check_branch
      %24 = sbr.rel (0) target = $region21
    $region20: #{transformer_forward.7} parent=1 // pred_region
      _
    $region21: #{transformer_forward.7} parent=1 // pred_fallthru
      _
    // Predicated region
    $region22: #{transformer_forward.7} parent=1 // pred_check
      _
    $region23: #{transformer_forward.7} parent=1 // pred_check_branch
      %26 = sbr.rel (0) target = $region25
    $region24: #{transformer_forward.7} parent=1 // pred_region
      _
    $region25: #{transformer_forward.7} parent=1 // pred_fallthru
      _
    // Predicated region
    $region26: #{transformer_forward.7} parent=1 // pred_check
      _
    $region27: #{transformer_forward.7} parent=1 // pred_check_branch
      %28 = sbr.rel (0) target = $region29
    $region28: #{transformer_forward.7} parent=1 // pred_region
      _
    $region29: #{transformer_forward.7} parent=1 // pred_fallthru
      _
    // Predicated region
    $region30: #{transformer_forward.7} parent=1 // pred_check
      _
    $region31: #{transformer_forward.7} parent=1 // pred_check_branch
      %30 = sbr.rel (0) target = $region33
    $region32: #{transformer_forward.7} parent=1 // pred_region
      _
    $region33: #{transformer_forward.7} parent=1 // pred_fallthru
      _
    // Predicated region
    $region34: #{transformer_forward.7} parent=1 // pred_check
      _
    $region35: #{transformer_forward.7} parent=1 // pred_check_branch
      %32 = sbr.rel (0) target = $region37
    $region36: #{transformer_forward.7} parent=1 // pred_region
      _
    $region37: #{transformer_forward.7} parent=1 // pred_fallthru
      _
    %v33 = vld [vmem:[%s0] sm:$0xff]
    %v34 = vld [vmem:[%s0 + $0x8] sm:$0xff]
    %v35 = vld [vmem:[%s1] sm:$0xff]
    %v36 = vld [vmem:[%s1 + $0x8] sm:$0xff]
    %v37 = vld [vmem:[%s1 + $0x10] sm:$0xff]
    %v38 = vld [vmem:[%s1 + $0x18] sm:$0xff]
    %v39 = vld [vmem:[%s2] sm:$0x1]
    %v41 = vlaneseq
    %v42 = vshrl.u32 %v41, 7
    %v43 = vsub.s32 0, %v42
    %v44 = vrot.slane %v39, %v43
    %vm46 = vcmask 261120
    %v48 = vsel %vm46, %v33, 0
    %v51 = vsel %vm46, %v34, 0
    %53 = vmatprep.subr.mxu0 0.0
    %54 = vmatpush1.msra.mxu0 0.0
    %55 = vmatprep.subr.mxu0 0.0
    %56 = vmatpush1.msra.mxu0 0.0
    %57 = vmatprep.subr.mxu0 0.0
    %58 = vmatpush1.msra.mxu0 0.0
    %59 = vmatprep.subr.mxu0 0.0
    %60 = vmatpush1.msra.mxu0 0.0
    %61 = vmatprep.subr.mxu0 0.0
    %62 = vmatpush1.msra.mxu0 0.0
    %63 = vmatprep.subr.mxu0 0.0
    %64 = vmatpush1.msra.mxu0 0.0
    %65 = vmatprep.subr.mxu0 0.0
    %66 = vmatpush1.msra.mxu0 0.0
    %67 = vmatprep.subr.mxu0 0.0
    %68 = vmatpush1.msra.mxu0 0.0
    %69 = vmatprep.subr.mxu0 0.0
    %70 = vmatpush1.msra.mxu0 0.0
    %71 = vmatprep.subr.mxu0 0.0
    %72 = vmatpush1.msra.mxu0 0.0
    %73 = vmatprep.subr.mxu0 0.0
    %74 = vmatpush1.msra.mxu0 0.0
    %75 = vmatprep.subr.mxu0 0.0
    %76 = vmatpush1.msra.mxu0 0.0
    %77 = vmatprep.subr.mxu0 0.0
    %78 = vmatpush1.msra.mxu0 %v38
    %79 = vmatprep.subr.mxu0 0.0
    %80 = vmatpush1.msra.mxu0 %v37
    %81 = vmatprep.subr.mxu0 0.0
    %82 = vmatpush1.msra.mxu0 %v36
    %83 = vmatprep.subr.mxu0 0.0
    %84 = vmatpush1.msra.mxu0 %v35
    %85 = vmatprep.subr.mxu0 0.0
    %86 = vmatpush2.msra.mxu0 0.0
    %87 = vmatprep.subr.mxu0 0.0
    %88 = vmatpush2.msra.mxu0 0.0
    %89 = vmatprep.subr.mxu0 0.0
    %90 = vmatpush2.msra.mxu0 0.0
    %91 = vmatprep.subr.mxu0 0.0
    %92 = vmatpush2.msra.mxu0 0.0
    %93 = vmatprep.subr.mxu0 0.0
    %94 = vmatpush2.msra.mxu0 0.0
    %95 = vmatprep.subr.mxu0 0.0
    %96 = vmatpush2.msra.mxu0 0.0
    %97 = vmatprep.subr.mxu0 0.0
    %98 = vmatpush2.msra.mxu0 0.0
    %99 = vmatprep.subr.mxu0 0.0
    %100 = vmatpush2.msra.mxu0 0.0
    %101 = vmatprep.subr.mxu0 0.0
    %102 = vmatpush2.msra.mxu0 0.0
    %103 = vmatprep.subr.mxu0 0.0
    %104 = vmatpush2.msra.mxu0 0.0
    %105 = vmatprep.subr.mxu0 0.0
    %106 = vmatpush2.msra.mxu0 0.0
    %107 = vmatprep.subr.mxu0 0.0
    %108 = vmatpush2.msra.mxu0 0.0
    %109 = vmatprep.subr.mxu0 0.0
    %110 = vmatpush2.msra.mxu0 0.0
    %111 = vmatprep.subr.mxu0 0.0
    %112 = vmatpush2.msra.mxu0 0.0
    %113 = vmatprep.subr.mxu0 0.0
    %114 = vmatpush2.msra.mxu0 0.0
    %115 = vmatprep.subr.mxu0 0.0
    %116 = vmatpush2.msra.mxu0 0.0
    %117 = vmatprep.mubr.f32.mxu0 0.0
    %118 = vmatmul.mubr.f32.gmra.mxu0 %v48
    %v119 = vpop.f32.mrf.mxu0
    %v120 = vadd.f32 %v44, %v119
    %v121 = vpop.f32.mrf.mxu0
    %122 = vmatprep.mubr.f32.mxu0 0.0
    %123 = vmatmul.mubr.f32.gmra.mxu0 %v51
    %v124 = vpop.f32.mrf.mxu0
    %v125 = vadd.f32 %v44, %v124
    %v126 = vpop.f32.mrf.mxu0
    %127 = vdwg.mxu0
    %v128 = vmax.f32 %v120, 0.0
    %v129 = vmax.f32 %v125, 0.0
    %v130 = vld [vmem:[%s3] sm:$0xff]
    %v131 = vld [vmem:[%s3 + $0x8] sm:$0xff]
    %v132 = vld [vmem:[%s3 + $0x10] sm:$0xff]
    %v133 = vld [vmem:[%s3 + $0x18] sm:$0xff]
    %v134 = vld [vmem:[%s3 + $0x20] sm:$0xff]
    %v135 = vld [vmem:[%s3 + $0x28] sm:$0xff]
    %v136 = vld [vmem:[%s3 + $0x30] sm:$0xff]
    %v137 = vld [vmem:[%s3 + $0x38] sm:$0xff]
    %v138 = vld [vmem:[%s4] sm:$0x1]
    %v140 = vlaneseq
    %v141 = vshrl.u32 %v140, 7
    %v142 = vsub.s32 0, %v141
    %v143 = vrot.slane %v138, %v142
    %vm145 = vcmask 523264
    %v147 = vsel %vm145, %v128, 0
    %v150 = vsel %vm145, %v129, 0
    %152 = vmatprep.subr.mxu0 0.0
    %153 = vmatpush1.msra.mxu0 0.0
    %154 = vmatprep.subr.mxu0 0.0
    %155 = vmatpush1.msra.mxu0 0.0
    %156 = vmatprep.subr.mxu0 0.0
    %157 = vmatpush1.msra.mxu0 0.0
    %158 = vmatprep.subr.mxu0 0.0
    %159 = vmatpush1.msra.mxu0 0.0
    %160 = vmatprep.subr.mxu0 0.0
    %161 = vmatpush1.msra.mxu0 0.0
    %162 = vmatprep.subr.mxu0 0.0
    %163 = vmatpush1.msra.mxu0 0.0
    %164 = vmatprep.subr.mxu0 0.0
    %165 = vmatpush1.msra.mxu0 0.0
    %166 = vmatprep.subr.mxu0 0.0
    %167 = vmatpush1.msra.mxu0 0.0
    %168 = vmatprep.subr.mxu0 0.0
    %169 = vmatpush1.msra.mxu0 %v137
    %170 = vmatprep.subr.mxu0 0.0
    %171 = vmatpush1.msra.mxu0 %v136
    %172 = vmatprep.subr.mxu0 0.0
    %173 = vmatpush1.msra.mxu0 %v135
    %174 = vmatprep.subr.mxu0 0.0
    %175 = vmatpush1.msra.mxu0 %v134
    %176 = vmatprep.subr.mxu0 0.0
    %177 = vmatpush1.msra.mxu0 %v133
    %178 = vmatprep.subr.mxu0 0.0
    %179 = vmatpush1.msra.mxu0 %v132
    %180 = vmatprep.subr.mxu0 0.0
    %181 = vmatpush1.msra.mxu0 %v131
    %182 = vmatprep.subr.mxu0 0.0
    %183 = vmatpush1.msra.mxu0 %v130
    %184 = vmatprep.subr.mxu0 0.0
    %185 = vmatpush2.msra.mxu0 0.0
    %186 = vmatprep.subr.mxu0 0.0
    %187 = vmatpush2.msra.mxu0 0.0
    %188 = vmatprep.subr.mxu0 0.0
    %189 = vmatpush2.msra.mxu0 0.0
    %190 = vmatprep.subr.mxu0 0.0
    %191 = vmatpush2.msra.mxu0 0.0
    %192 = vmatprep.subr.mxu0 0.0
    %193 = vmatpush2.msra.mxu0 0.0
    %194 = vmatprep.subr.mxu0 0.0
    %195 = vmatpush2.msra.mxu0 0.0
    %196 = vmatprep.subr.mxu0 0.0
    %197 = vmatpush2.msra.mxu0 0.0
    %198 = vmatprep.subr.mxu0 0.0
    %199 = vmatpush2.msra.mxu0 0.0
    %200 = vmatprep.subr.mxu0 0.0
    %201 = vmatpush2.msra.mxu0 0.0
    %202 = vmatprep.subr.mxu0 0.0
    %203 = vmatpush2.msra.mxu0 0.0
    %204 = vmatprep.subr.mxu0 0.0
    %205 = vmatpush2.msra.mxu0 0.0
    %206 = vmatprep.subr.mxu0 0.0
    %207 = vmatpush2.msra.mxu0 0.0
    %208 = vmatprep.subr.mxu0 0.0
    %209 = vmatpush2.msra.mxu0 0.0
    %210 = vmatprep.subr.mxu0 0.0
    %211 = vmatpush2.msra.mxu0 0.0
    %212 = vmatprep.subr.mxu0 0.0
    %213 = vmatpush2.msra.mxu0 0.0
    %214 = vmatprep.subr.mxu0 0.0
    %215 = vmatpush2.msra.mxu0 0.0
    %216 = vmatprep.mubr.f32.mxu0 0.0
    %217 = vmatmul.mubr.f32.gmra.mxu0 %v147
    %v218 = vpop.f32.mrf.mxu0
    %v219 = vadd.f32 %v143, %v218
    %v220 = vpop.f32.mrf.mxu0
    %221 = vmatprep.mubr.f32.mxu0 0.0
    %222 = vmatmul.mubr.f32.gmra.mxu0 %v150
    %v223 = vpop.f32.mrf.mxu0
    %v224 = vadd.f32 %v143, %v223
    %v225 = vpop.f32.mrf.mxu0
    %226 = vdwg.mxu0
    %v227 = vadd.f32 %v33, %v219
    %v228 = vadd.f32 %v34, %v224
    %v229 = vsel %vm46, %v227, 0.0
    %230 = vadd.xlane.f32.xlu0 %v229
    %v231 = vpop.xlane.xlu0 %230
    %v232 = vsel %vm46, %v228, 0.0
    %233 = vadd.xlane.f32.xlu0 %v232
    %v234 = vpop.xlane.xlu0 %233
    %v235 = vrcp.pop 32.0
    %v236 = vmul.f32 %v231, %v235
    %v237 = vmul.f32 %v234, %v235
    %v238 = vsub.f32 %v227, %v236
    %v239 = vsub.f32 %v228, %v237
    %v240 = vmul.f32 %v238, %v238
    %v241 = vmul.f32 %v239, %v239
    %v242 = vsel %vm46, %v240, 0.0
    %243 = vadd.xlane.f32.xlu0 %v242
    %v244 = vpop.xlane.xlu0 %243
    %v245 = vsel %vm46, %v241, 0.0
    %246 = vadd.xlane.f32.xlu0 %v245
    %v247 = vpop.xlane.xlu0 %246
    %v248 = vmul.f32 %v244, %v235
    %v249 = vmul.f32 %v247, %v235
    %v250 = vadd.f32 %v248, 1e-05
    %v251 = vadd.f32 %v249, 1e-05
    %v252 = vrsqrt.pop %v250
    %v253 = vrsqrt.pop %v251
    %v254 = vmul.f32 %v238, %v252
    %v255 = vmul.f32 %v239, %v253
    %v256 = vld [vmem:[%s5] sm:$0x1]
    %v258 = vlaneseq
    %v259 = vshrl.u32 %v258, 7
    %v260 = vsub.s32 0, %v259
    %v261 = vrot.slane %v256, %v260
    %v263 = vmul.f32 %v254, %v261
    %v264 = vmul.f32 %v255, %v261
    %v265 = vld [vmem:[%s6] sm:$0x1]
    %v267 = vlaneseq
    %v268 = vshrl.u32 %v267, 7
    %v269 = vsub.s32 0, %v268
    %v270 = vrot.slane %v265, %v269
    %v272 = vadd.f32 %v263, %v270
    %v273 = vadd.f32 %v264, %v270
    %v274 = vld [vmem:[%s7] sm:$0xff]
    %v275 = vld [vmem:[%s7 + $0x8] sm:$0xff]
    %v276 = vld [vmem:[%s7 + $0x10] sm:$0xff]
    %v277 = vld [vmem:[%s7 + $0x18] sm:$0xff]
    %v278 = vld [vmem:[%s8] sm:$0x1]
    %v280 = vlaneseq
    %v281 = vshrl.u32 %v280, 7
    %v282 = vsub.s32 0, %v281
    %v283 = vrot.slane %v278, %v282
    %v286 = vsel %vm46, %v272, 0
    %v289 = vsel %vm46, %v273, 0
    %291 = vmatprep.subr.mxu0 0.0
    %292 = vmatpush1.msra.mxu0 0.0
    %293 = vmatprep.subr.mxu0 0.0
    %294 = vmatpush1.msra.mxu0 0.0
    %295 = vmatprep.subr.mxu0 0.0
    %296 = vmatpush1.msra.mxu0 0.0
    %297 = vmatprep.subr.mxu0 0.0
    %298 = vmatpush1.msra.mxu0 0.0
    %299 = vmatprep.subr.mxu0 0.0
    %300 = vmatpush1.msra.mxu0 0.0
    %301 = vmatprep.subr.mxu0 0.0
    %302 = vmatpush1.msra.mxu0 0.0
    %303 = vmatprep.subr.mxu0 0.0
    %304 = vmatpush1.msra.mxu0 0.0
    %305 = vmatprep.subr.mxu0 0.0
    %306 = vmatpush1.msra.mxu0 0.0
    %307 = vmatprep.subr.mxu0 0.0
    %308 = vmatpush1.msra.mxu0 0.0
    %309 = vmatprep.subr.mxu0 0.0
    %310 = vmatpush1.msra.mxu0 0.0
    %311 = vmatprep.subr.mxu0 0.0
    %312 = vmatpush1.msra.mxu0 0.0
    %313 = vmatprep.subr.mxu0 0.0
    %314 = vmatpush1.msra.mxu0 0.0
    %315 = vmatprep.subr.mxu0 0.0
    %316 = vmatpush1.msra.mxu0 %v277
    %317 = vmatprep.subr.mxu0 0.0
    %318 = vmatpush1.msra.mxu0 %v276
    %319 = vmatprep.subr.mxu0 0.0
    %320 = vmatpush1.msra.mxu0 %v275
    %321 = vmatprep.subr.mxu0 0.0
    %322 = vmatpush1.msra.mxu0 %v274
    %323 = vmatprep.subr.mxu0 0.0
    %324 = vmatpush2.msra.mxu0 0.0
    %325 = vmatprep.subr.mxu0 0.0
    %326 = vmatpush2.msra.mxu0 0.0
    %327 = vmatprep.subr.mxu0 0.0
    %328 = vmatpush2.msra.mxu0 0.0
    %329 = vmatprep.subr.mxu0 0.0
    %330 = vmatpush2.msra.mxu0 0.0
    %331 = vmatprep.subr.mxu0 0.0
    %332 = vmatpush2.msra.mxu0 0.0
    %333 = vmatprep.subr.mxu0 0.0
    %334 = vmatpush2.msra.mxu0 0.0
    %335 = vmatprep.subr.mxu0 0.0
    %336 = vmatpush2.msra.mxu0 0.0
    %337 = vmatprep.subr.mxu0 0.0
    %338 = vmatpush2.msra.mxu0 0.0
    %339 = vmatprep.subr.mxu0 0.0
    %340 = vmatpush2.msra.mxu0 0.0
    %341 = vmatprep.subr.mxu0 0.0
    %342 = vmatpush2.msra.mxu0 0.0
    %343 = vmatprep.subr.mxu0 0.0
    %344 = vmatpush2.msra.mxu0 0.0
    %345 = vmatprep.subr.mxu0 0.0
    %346 = vmatpush2.msra.mxu0 0.0
    %347 = vmatprep.subr.mxu0 0.0
    %348 = vmatpush2.msra.mxu0 0.0
    %349 = vmatprep.subr.mxu0 0.0
    %350 = vmatpush2.msra.mxu0 0.0
    %351 = vmatprep.subr.mxu0 0.0
    %352 = vmatpush2.msra.mxu0 0.0
    %353 = vmatprep.subr.mxu0 0.0
    %354 = vmatpush2.msra.mxu0 0.0
    %355 = vmatprep.mubr.f32.mxu0 0.0
    %356 = vmatmul.mubr.f32.gmra.mxu0 %v286
    %v357 = vpop.f32.mrf.mxu0
    %v358 = vadd.f32 %v283, %v357
    %v359 = vpop.f32.mrf.mxu0
    %360 = vmatprep.mubr.f32.mxu0 0.0
    %361 = vmatmul.mubr.f32.gmra.mxu0 %v289
    %v362 = vpop.f32.mrf.mxu0
    %v363 = vadd.f32 %v283, %v362
    %v364 = vpop.f32.mrf.mxu0
    %365 = vdwg.mxu0
    %vm366 = vcmask 64512
    %367 = vst.msk [vmem:[#allocation2] sm:$0xff] %vm366, %v358
    %368 = vst.msk [vmem:[#allocation2 + $0x8] sm:$0xff] %vm366, %v363
    // Predicated region
    $region38: #{transformer_forward.7} parent=1 // pred_check
      _
    $region39: #{transformer_forward.7} parent=1 // pred_check_branch
      %370 = sbr.rel (0) target = $region41
    $region40: #{transformer_forward.7} parent=1 // pred_region
      %s372 = ssub.s32 256, 256
      %373 = vsyncadd [#allocation3], %s372
      %s374 = sshll.u32 [#allocation2], 4
      %s375 = int_to_ptr.vmem [resolvable:$true] %s374
      %380 = dma.vmem_to_hbm [thread:$0]  %s375, 256, %s9, [#allocation3], 128, 128, 8
    $region41: #{transformer_forward.7} parent=1 // pred_fallthru
      _
    // Predicated region
    $region42: #{transformer_forward.7} parent=1 // pred_check
      _
    $region43: #{transformer_forward.7} parent=1 // pred_check_branch
      %382 = sbr.rel (0) target = $region45
    $region44: #{transformer_forward.7} parent=1 // pred_region
      %383 = dma.done [#allocation3], 256
    $region45: #{transformer_forward.7} parent=1 // pred_fallthru
      _
    %384 = vsyncpa [#allocation3], 1

// kernel: transformer_forward.4
$region0: #{transformer_forward.4}
  #allocation0 [shape = 'u32[]', space=smem, size = 0x4, offset = 0x4, fixed_abs, tag = 'smem constant byte address 0x4 - core index']
  #allocation1 [shape = 'u32[144,128]{1,0:T(1,128)}', space=vmem, size = 0x12000, scoped, tag = 'internal scratch']
  %s0 = inlined_call_operand.vmem [shape: f32[2,8,16], index: 0, kind: input, shape index: {}]
  %s1 = inlined_call_operand.vmem [shape: f32[8,32], index: 1, kind: input, shape index: {}]
  %s2 = inlined_call_operand.vmem [shape: f32[16,32], index: 2, kind: input, shape index: {}]
  %s3 = inlined_call_operand.vmem [shape: f32[1,32], index: 3, kind: input, shape index: {}]
  %s4 = inlined_call_operand.vmem [shape: f32[32,32], index: 4, kind: input, shape index: {}]
  %s5 = inlined_call_operand.vmem [shape: f32[32,32], index: 5, kind: input, shape index: {}]
  %s6 = inlined_call_operand.vmem [shape: f32[32,32], index: 6, kind: input, shape index: {}]
  %s7 = inlined_call_operand.vmem [shape: f32[1,32], index: 7, kind: input, shape index: {}]
  %s8 = inlined_call_operand.vmem [shape: f32[1,32], index: 8, kind: input, shape index: {}]
  %s9 = inlined_call_operand.vmem [shape: f32[1,32], index: 9, kind: input, shape index: {}]
  %s10 = inlined_call_operand.vmem [shape: f32[2,8,32], index: 10, kind: output, shape index: {0}]
  %s11 = inlined_call_operand.vmem [shape: f32[2,8,32], index: 11, kind: output, shape index: {1}]
  %s12 = inlined_call_operand.vmem [shape: f32[2,8,32], index: 12, kind: output, shape index: {2}]
  %s13 = inlined_call_operand.vmem [shape: f32[2,8,32], index: 13, kind: output, shape index: {3}]
  %14 = xla_tuple %s10, %s11, %s12, %s13
  %s15 = sld [smem:[#allocation0]]
  $region97: #{transformer_forward.4} parent=0
    _
  %s17 = ssub.s32 1, %s15
  %s18 = scalar_select 0, %s17, %s15
  loop: start=0, step=1, limit=4
  $region2: #{transformer_forward.4} parent=0 // loop_pre_header
    _
  $region3: #{transformer_forward.4} parent=0 // loop_header
    %s20 = sphi 0, %s24
    %p21 = scmp.ge.s32.totalorder %s20, 4
    %s27 = sphi 0, %s39
    %s28 = sphi 0, %s35
    %s29 = sphi 0, %s27
    %s30 = sphi 0, %s28
    %s31 = sphi 0, %s29
    %s32 = sphi 0, %s30
    %s44 = sphi 0, %s46
    %s47 = sphi 0, %s44
    %s48 = sphi 0, %s47
    %s64 = sphi 0, %s48
    %s70 = sphi 0, %s72
    %s73 = sphi 0, %s70
    %s74 = sphi 0, %s73
    %s90 = sphi 0, %s74
    %s94 = sphi 0, %s94
    %s96 = sphi 0, %s94
    %s97 = sphi 0, %s96
    %s111 = sphi 0, %s97
    %s115 = sphi 0, %s115
    %s117 = sphi 0, %s115
    %s118 = sphi 0, %s117
    %s132 = sphi 0, %s118
    %s136 = sphi 0, %s136
    %s138 = sphi 0, %s136
    %s139 = sphi 0, %s138
    %s153 = sphi 0, %s139
    %s157 = sphi 0, %s157
    %s159 = sphi 0, %s157
    %s160 = sphi 0, %s159
    %s174 = sphi 0, %s160
    %s178 = sphi 0, %s178
    %s180 = sphi 0, %s178
    %s181 = sphi 0, %s180
    %s195 = sphi 0, %s181
    %s199 = sphi 0, %s199
    %s201 = sphi 0, %s199
    %s202 = sphi 0, %s201
    %s216 = sphi 0, %s202
    %s220 = sphi 0, %s220
    %s222 = sphi 0, %s220
    %s223 = sphi 0, %s222
    %s237 = sphi 0, %s223
    %s241 = sphi 0, %s241
    %s243 = sphi 0, %s241
    %s244 = sphi 0, %s243
    %s258 = sphi 0, %s244
    %s266 = sphi 0, %s268
    %s269 = sphi 0, %s266
    %s270 = sphi 0, %s269
    %s286 = sphi 0, %s270
    %s294 = sphi 0, %s296
    %s297 = sphi 0, %s294
    %s298 = sphi 0, %s297
    %s314 = sphi 0, %s298
    %s322 = sphi 0, %s324
    %s325 = sphi 0, %s322
    %s326 = sphi 0, %s325
    %s342 = sphi 0, %s326
    %s350 = sphi 0, %s352
    %s353 = sphi 0, %s350
    %s354 = sphi 0, %s353
    %s370 = sphi 0, %s354
  $region4: #{transformer_forward.4} parent=0 // loop_header_branch
    %23 = sbr.rel (%p21) target = $region8
  $region5: #{transformer_forward.4} parent=0 // loop_body
    %s25 = ssub.s32 %s20, 1
    %s26 = ssub.s32 %s20, 2
    %s33 = sadd.s32 1, %s28
    %p34 = scmp.ge.s32.totalorder %s33, 1
    %s35 = scalar_select %p34, 0, %s33
    %s36 = sadd.s32 1, %s27
    %s37 = scalar_select %p34, %s36, %s27
    %p38 = scmp.ge.s32.totalorder %s37, 2
    %s39 = scalar_select %p38, 0, %s37
    %s40 = ssub.s32 %s27, %s39
    %s41 = ssub.s32 %s28, %s35
    %s42 = sor.u32 %s40, %s41
    %p43 = scmp.eq.s32.totalorder %s42, 0
    %s45 = sadd.s32 %s44, 1
    %s46 = scalar_select %p43, %s44, %s45
    %p49 = pneg %p43
    %p50 = scmp.eq.s32.totalorder %s20, 1
    %p51 = por %p49, %p50
    %p52 = scmp.ne.s32.totalorder %s44, %s47
    %p53 = scmp.eq.s32.totalorder %s20, 0
    %p54 = por %p52, %p53
    %p55 = scmp.ne.s32.totalorder %s44, %s47
    %p56 = scmp.eq.s32.totalorder %s25, 1
    %p57 = por %p55, %p56
    %p58 = scmp.ne.s32.totalorder %s47, %s48
    %p59 = scmp.eq.s32.totalorder %s25, 0
    %p60 = por %p58, %p59
    %p61 = scmp.ne.s32.totalorder %s47, %s48
    %p62 = scmp.eq.s32.totalorder %s26, 1
    %p63 = por %p61, %p62
    %p65 = scmp.ne.s32.totalorder %s48, %s64
    %p66 = scmp.eq.s32.totalorder %s26, 0
    %p67 = por %p65, %p66
    %s68 = ssub.s32 %s28, %s35
    %p69 = scmp.eq.s32.totalorder %s68, 0
    %s71 = sadd.s32 %s70, 1
    %s72 = scalar_select %p69, %s70, %s71
    %p75 = pneg %p69
    %p76 = scmp.eq.s32.totalorder %s20, 1
    %p77 = por %p75, %p76
    %p78 = scmp.ne.s32.totalorder %s70, %s73
    %p79 = scmp.eq.s32.totalorder %s20, 0
    %p80 = por %p78, %p79
    %p81 = scmp.ne.s32.totalorder %s70, %s73
    %p82 = scmp.eq.s32.totalorder %s25, 1
    %p83 = por %p81, %p82
    %p84 = scmp.ne.s32.totalorder %s73, %s74
    %p85 = scmp.eq.s32.totalorder %s25, 0
    %p86 = por %p84, %p85
    %p87 = scmp.ne.s32.totalorder %s73, %s74
    %p88 = scmp.eq.s32.totalorder %s26, 1
    %p89 = por %p87, %p88
    %p91 = scmp.ne.s32.totalorder %s74, %s90
    %p92 = scmp.eq.s32.totalorder %s26, 0
    %p93 = por %p91, %p92
    %s95 = sadd.s32 %s94, 1
    %p98 = scmp.eq.s32.totalorder %s20, 1
    %p99 = scmp.ne.s32.totalorder %s94, %s96
    %p100 = scmp.eq.s32.totalorder %s20, 0
    %p101 = por %p99, %p100
    %p102 = scmp.ne.s32.totalorder %s94, %s96
    %p103 = scmp.eq.s32.totalorder %s25, 1
    %p104 = por %p102, %p103
    %p105 = scmp.ne.s32.totalorder %s96, %s97
    %p106 = scmp.eq.s32.totalorder %s25, 0
    %p107 = por %p105, %p106
    %p108 = scmp.ne.s32.totalorder %s96, %s97
    %p109 = scmp.eq.s32.totalorder %s26, 1
    %p110 = por %p108, %p109
    %p112 = scmp.ne.s32.totalorder %s97, %s111
    %p113 = scmp.eq.s32.totalorder %s26, 0
    %p114 = por %p112, %p113
    %s116 = sadd.s32 %s115, 1
    %p119 = scmp.eq.s32.totalorder %s20, 1
    %p120 = scmp.ne.s32.totalorder %s115, %s117
    %p121 = scmp.eq.s32.totalorder %s20, 0
    %p122 = por %p120, %p121
    %p123 = scmp.ne.s32.totalorder %s115, %s117
    %p124 = scmp.eq.s32.totalorder %s25, 1
    %p125 = por %p123, %p124
    %p126 = scmp.ne.s32.totalorder %s117, %s118
    %p127 = scmp.eq.s32.totalorder %s25, 0
    %p128 = por %p126, %p127
    %p129 = scmp.ne.s32.totalorder %s117, %s118
    %p130 = scmp.eq.s32.totalorder %s26, 1
    %p131 = por %p129, %p130
    %p133 = scmp.ne.s32.totalorder %s118, %s132
    %p134 = scmp.eq.s32.totalorder %s26, 0
    %p135 = por %p133, %p134
    %s137 = sadd.s32 %s136, 1
    %p140 = scmp.eq.s32.totalorder %s20, 1
    %p141 = scmp.ne.s32.totalorder %s136, %s138
    %p142 = scmp.eq.s32.totalorder %s20, 0
    %p143 = por %p141, %p142
    %p144 = scmp.ne.s32.totalorder %s136, %s138
    %p145 = scmp.eq.s32.totalorder %s25, 1
    %p146 = por %p144, %p145
    %p147 = scmp.ne.s32.totalorder %s138, %s139
    %p148 = scmp.eq.s32.totalorder %s25, 0
    %p149 = por %p147, %p148
    %p150 = scmp.ne.s32.totalorder %s138, %s139
    %p151 = scmp.eq.s32.totalorder %s26, 1
    %p152 = por %p150, %p151
    %p154 = scmp.ne.s32.totalorder %s139, %s153
    %p155 = scmp.eq.s32.totalorder %s26, 0
    %p156 = por %p154, %p155
    %s158 = sadd.s32 %s157, 1
    %p161 = scmp.eq.s32.totalorder %s20, 1
    %p162 = scmp.ne.s32.totalorder %s157, %s159
    %p163 = scmp.eq.s32.totalorder %s20, 0
    %p164 = por %p162, %p163
    %p165 = scmp.ne.s32.totalorder %s157, %s159
    %p166 = scmp.eq.s32.totalorder %s25, 1
    %p167 = por %p165, %p166
    %p168 = scmp.ne.s32.totalorder %s159, %s160
    %p169 = scmp.eq.s32.totalorder %s25, 0
    %p170 = por %p168, %p169
    %p171 = scmp.ne.s32.totalorder %s159, %s160
    %p172 = scmp.eq.s32.totalorder %s26, 1
    %p173 = por %p171, %p172
    %p175 = scmp.ne.s32.totalorder %s160, %s174
    %p176 = scmp.eq.s32.totalorder %s26, 0
    %p177 = por %p175, %p176
    %s179 = sadd.s32 %s178, 1
    %p182 = scmp.eq.s32.totalorder %s20, 1
    %p183 = scmp.ne.s32.totalorder %s178, %s180
    %p184 = scmp.eq.s32.totalorder %s20, 0
    %p185 = por %p183, %p184
    %p186 = scmp.ne.s32.totalorder %s178, %s180
    %p187 = scmp.eq.s32.totalorder %s25, 1
    %p188 = por %p186, %p187
    %p189 = scmp.ne.s32.totalorder %s180, %s181
    %p190 = scmp.eq.s32.totalorder %s25, 0
    %p191 = por %p189, %p190
    %p192 = scmp.ne.s32.totalorder %s180, %s181
    %p193 = scmp.eq.s32.totalorder %s26, 1
    %p194 = por %p192, %p193
    %p196 = scmp.ne.s32.totalorder %s181, %s195
    %p197 = scmp.eq.s32.totalorder %s26, 0
    %p198 = por %p196, %p197
    %s200 = sadd.s32 %s199, 1
    %p203 = scmp.eq.s32.totalorder %s20, 1
    %p204 = scmp.ne.s32.totalorder %s199, %s201
    %p205 = scmp.eq.s32.totalorder %s20, 0
    %p206 = por %p204, %p205
    %p207 = scmp.ne.s32.totalorder %s199, %s201
    %p208 = scmp.eq.s32.totalorder %s25, 1
    %p209 = por %p207, %p208
    %p210 = scmp.ne.s32.totalorder %s201, %s202
    %p211 = scmp.eq.s32.totalorder %s25, 0
    %p212 = por %p210, %p211
    %p213 = scmp.ne.s32.totalorder %s201, %s202
    %p214 = scmp.eq.s32.totalorder %s26, 1
    %p215 = por %p213, %p214
    %p217 = scmp.ne.s32.totalorder %s202, %s216
    %p218 = scmp.eq.s32.totalorder %s26, 0
    %p219 = por %p217, %p218
    %s221 = sadd.s32 %s220, 1
    %p224 = scmp.eq.s32.totalorder %s20, 1
    %p225 = scmp.ne.s32.totalorder %s220, %s222
    %p226 = scmp.eq.s32.totalorder %s20, 0
    %p227 = por %p225, %p226
    %p228 = scmp.ne.s32.totalorder %s220, %s222
    %p229 = scmp.eq.s32.totalorder %s25, 1
    %p230 = por %p228, %p229
    %p231 = scmp.ne.s32.totalorder %s222, %s223
    %p232 = scmp.eq.s32.totalorder %s25, 0
    %p233 = por %p231, %p232
    %p234 = scmp.ne.s32.totalorder %s222, %s223
    %p235 = scmp.eq.s32.totalorder %s26, 1
    %p236 = por %p234, %p235
    %p238 = scmp.ne.s32.totalorder %s223, %s237
    %p239 = scmp.eq.s32.totalorder %s26, 0
    %p240 = por %p238, %p239
    %s242 = sadd.s32 %s241, 1
    %p245 = scmp.eq.s32.totalorder %s20, 1
    %p246 = scmp.ne.s32.totalorder %s241, %s243
    %p247 = scmp.eq.s32.totalorder %s20, 0
    %p248 = por %p246, %p247
    %p249 = scmp.ne.s32.totalorder %s241, %s243
    %p250 = scmp.eq.s32.totalorder %s25, 1
    %p251 = por %p249, %p250
    %p252 = scmp.ne.s32.totalorder %s243, %s244
    %p253 = scmp.eq.s32.totalorder %s25, 0
    %p254 = por %p252, %p253
    %p255 = scmp.ne.s32.totalorder %s243, %s244
    %p256 = scmp.eq.s32.totalorder %s26, 1
    %p257 = por %p255, %p256
    %p259 = scmp.ne.s32.totalorder %s244, %s258
    %p260 = scmp.eq.s32.totalorder %s26, 0
    %p261 = por %p259, %p260
    %s262 = ssub.s32 %s27, %s39
    %s263 = ssub.s32 %s28, %s35
    %s264 = sor.u32 %s262, %s263
    %p265 = scmp.eq.s32.totalorder %s264, 0
    %s267 = sadd.s32 %s266, 1
    %s268 = scalar_select %p265, %s266, %s267
    %p271 = pneg %p265
    %p272 = scmp.eq.s32.totalorder %s20, 1
    %p273 = por %p271, %p272
    %p274 = scmp.ne.s32.totalorder %s266, %s269
    %p275 = scmp.eq.s32.totalorder %s20, 0
    %p276 = por %p274, %p275
    %p277 = scmp.ne.s32.totalorder %s266, %s269
    %p278 = scmp.eq.s32.totalorder %s25, 1
    %p279 = por %p277, %p278
    %p280 = scmp.ne.s32.totalorder %s269, %s270
    %p281 = scmp.eq.s32.totalorder %s25, 0
    %p282 = por %p280, %p281
    %p283 = scmp.ne.s32.totalorder %s269, %s270
    %p284 = scmp.eq.s32.totalorder %s26, 1
    %p285 = por %p283, %p284
    %p287 = scmp.ne.s32.totalorder %s270, %s286
    %p288 = scmp.eq.s32.totalorder %s26, 0
    %p289 = por %p287, %p288
    %s290 = ssub.s32 %s27, %s39
    %s291 = ssub.s32 %s28, %s35
    %s292 = sor.u32 %s290, %s291
    %p293 = scmp.eq.s32.totalorder %s292, 0
    %s295 = sadd.s32 %s294, 1
    %s296 = scalar_select %p293, %s294, %s295
    %p299 = pneg %p293
    %p300 = scmp.eq.s32.totalorder %s20, 1
    %p301 = por %p299, %p300
    %p302 = scmp.ne.s32.totalorder %s294, %s297
    %p303 = scmp.eq.s32.totalorder %s20, 0
    %p304 = por %p302, %p303
    %p305 = scmp.ne.s32.totalorder %s294, %s297
    %p306 = scmp.eq.s32.totalorder %s25, 1
    %p307 = por %p305, %p306
    %p308 = scmp.ne.s32.totalorder %s297, %s298
    %p309 = scmp.eq.s32.totalorder %s25, 0
    %p310 = por %p308, %p309
    %p311 = scmp.ne.s32.totalorder %s297, %s298
    %p312 = scmp.eq.s32.totalorder %s26, 1
    %p313 = por %p311, %p312
    %p315 = scmp.ne.s32.totalorder %s298, %s314
    %p316 = scmp.eq.s32.totalorder %s26, 0
    %p317 = por %p315, %p316
    %s318 = ssub.s32 %s27, %s39
    %s319 = ssub.s32 %s28, %s35
    %s320 = sor.u32 %s318, %s319
    %p321 = scmp.eq.s32.totalorder %s320, 0
    %s323 = sadd.s32 %s322, 1
    %s324 = scalar_select %p321, %s322, %s323
    %p327 = pneg %p321
    %p328 = scmp.eq.s32.totalorder %s20, 1
    %p329 = por %p327, %p328
    %p330 = scmp.ne.s32.totalorder %s322, %s325
    %p331 = scmp.eq.s32.totalorder %s20, 0
    %p332 = por %p330, %p331
    %p333 = scmp.ne.s32.totalorder %s322, %s325
    %p334 = scmp.eq.s32.totalorder %s25, 1
    %p335 = por %p333, %p334
    %p336 = scmp.ne.s32.totalorder %s325, %s326
    %p337 = scmp.eq.s32.totalorder %s25, 0
    %p338 = por %p336, %p337
    %p339 = scmp.ne.s32.totalorder %s325, %s326
    %p340 = scmp.eq.s32.totalorder %s26, 1
    %p341 = por %p339, %p340
    %p343 = scmp.ne.s32.totalorder %s326, %s342
    %p344 = scmp.eq.s32.totalorder %s26, 0
    %p345 = por %p343, %p344
    %s346 = ssub.s32 %s27, %s39
    %s347 = ssub.s32 %s28, %s35
    %s348 = sor.u32 %s346, %s347
    %p349 = scmp.eq.s32.totalorder %s348, 0
    %s351 = sadd.s32 %s350, 1
    %s352 = scalar_select %p349, %s350, %s351
    %p355 = pneg %p349
    %p356 = scmp.eq.s32.totalorder %s20, 1
    %p357 = por %p355, %p356
    %p358 = scmp.ne.s32.totalorder %s350, %s353
    %p359 = scmp.eq.s32.totalorder %s20, 0
    %p360 = por %p358, %p359
    %p361 = scmp.ne.s32.totalorder %s350, %s353
    %p362 = scmp.eq.s32.totalorder %s25, 1
    %p363 = por %p361, %p362
    %p364 = scmp.ne.s32.totalorder %s353, %s354
    %p365 = scmp.eq.s32.totalorder %s25, 0
    %p366 = por %p364, %p365
    %p367 = scmp.ne.s32.totalorder %s353, %s354
    %p368 = scmp.eq.s32.totalorder %s26, 1
    %p369 = por %p367, %p368
    %p371 = scmp.ne.s32.totalorder %s354, %s370
    %p372 = scmp.eq.s32.totalorder %s26, 0
    %p373 = por %p371, %p372
    %p374 = scmp.le.s32.totalorder 1, %s20
    %p375 = scmp.lt.s32.totalorder %s20, 3
    %p376 = pnand %p374, %p375
    %p377 = pneg %p376
    // Predicated region
    $region9: #{transformer_forward.4} parent=5 // pred_check
      _
    $region10: #{transformer_forward.4} parent=5 // pred_check_branch
      %379 = sbr.rel (%p376) target = $region12
    $region11: #{transformer_forward.4} parent=5 // pred_region
      %s380 = ssub.s32 %s20, 1
      // Predicated region
      $region13: #{transformer_forward.4} parent=11 // pred_check
        %p381 = pneg %p86
      $region14: #{transformer_forward.4} parent=11 // pred_check_branch
        %383 = sbr.rel (%p381) target = $region16
      $region15: #{transformer_forward.4} parent=11 // pred_region
        %p384 = scmp.lt.s32.totalorder %s30, 0
        %s385 = scalar_select %p384, %s30, 0
        %s386 = smul.addr %s385, 8
        %s387 = scalar_lea.vmem %s1, %s386
      $region16: #{transformer_forward.4} parent=11 // pred_fallthru
        _
      // Predicated region
      $region17: #{transformer_forward.4} parent=11 // pred_check
        %p388 = pneg %p107
      $region18: #{transformer_forward.4} parent=11 // pred_check_branch
        %390 = sbr.rel (%p388) target = $region20
      $region19: #{transformer_forward.4} parent=11 // pred_region
        _
      $region20: #{transformer_forward.4} parent=11 // pred_fallthru
        _
      // Predicated region
      $region21: #{transformer_forward.4} parent=11 // pred_check
        %p391 = pneg %p128
      $region22: #{transformer_forward.4} parent=11 // pred_check_branch
        %393 = sbr.rel (%p391) target = $region24
      $region23: #{transformer_forward.4} parent=11 // pred_region
        _
      $region24: #{transformer_forward.4} parent=11 // pred_fallthru
        _
      // Predicated region
      $region25: #{transformer_forward.4} parent=11 // pred_check
        %p394 = pneg %p149
      $region26: #{transformer_forward.4} parent=11 // pred_check_branch
        %396 = sbr.rel (%p394) target = $region28
      $region27: #{transformer_forward.4} parent=11 // pred_region
        _
      $region28: #{transformer_forward.4} parent=11 // pred_fallthru
        _
      // Predicated region
      $region29: #{transformer_forward.4} parent=11 // pred_check
        %p397 = pneg %p170
      $region30: #{transformer_forward.4} parent=11 // pred_check_branch
        %399 = sbr.rel (%p397) target = $region32
      $region31: #{transformer_forward.4} parent=11 // pred_region
        _
      $region32: #{transformer_forward.4} parent=11 // pred_fallthru
        _
      // Predicated region
      $region33: #{transformer_forward.4} parent=11 // pred_check
        %p400 = pneg %p191
      $region34: #{transformer_forward.4} parent=11 // pred_check_branch
        %402 = sbr.rel (%p400) target = $region36
      $region35: #{transformer_forward.4} parent=11 // pred_region
        _
      $region36: #{transformer_forward.4} parent=11 // pred_fallthru
        _
      // Predicated region
      $region37: #{transformer_forward.4} parent=11 // pred_check
        %p403 = pneg %p212
      $region38: #{transformer_forward.4} parent=11 // pred_check_branch
        %405 = sbr.rel (%p403) target = $region40
      $region39: #{transformer_forward.4} parent=11 // pred_region
        _
      $region40: #{transformer_forward.4} parent=11 // pred_fallthru
        _
      // Predicated region
      $region41: #{transformer_forward.4} parent=11 // pred_check
        %p406 = pneg %p233
      $region42: #{transformer_forward.4} parent=11 // pred_check_branch
        %408 = sbr.rel (%p406) target = $region44
      $region43: #{transformer_forward.4} parent=11 // pred_region
        _
      $region44: #{transformer_forward.4} parent=11 // pred_fallthru
        _
      // Predicated region
      $region45: #{transformer_forward.4} parent=11 // pred_check
        %p409 = pneg %p254
      $region46: #{transformer_forward.4} parent=11 // pred_check_branch
        %411 = sbr.rel (%p409) target = $region48
      $region47: #{transformer_forward.4} parent=11 // pred_region
        _
      $region48: #{transformer_forward.4} parent=11 // pred_fallthru
        _
    $region12: #{transformer_forward.4} parent=5 // pred_fallthru
      _
    %p412 = scmp.lt.s32.totalorder %s20, 2
    // Predicated region
    $region49: #{transformer_forward.4} parent=5 // pred_check
      %p413 = pneg %p412
    $region50: #{transformer_forward.4} parent=5 // pred_check_branch
      %415 = sbr.rel (%p413) target = $region52
    $region51: #{transformer_forward.4} parent=5 // pred_region
      // Predicated region
      $region53: #{transformer_forward.4} parent=51 // pred_check
        %p416 = pneg %p54
      $region54: #{transformer_forward.4} parent=51 // pred_check_branch
        %418 = sbr.rel (%p416) target = $region56
      $region55: #{transformer_forward.4} parent=51 // pred_region
        %p419 = scmp.lt.s32.totalorder %s27, 1
        %s420 = scalar_select %p419, %s27, 1
        %p421 = scmp.lt.s32.totalorder %s28, 0
        %s422 = scalar_select %p421, %s28, 0
        %s423 = sadd.s32 %s422, %s420
        %s424 = smul.addr %s423, 8
        %s425 = scalar_lea.vmem %s0, %s424
      $region56: #{transformer_forward.4} parent=51 // pred_fallthru
        _
    $region52: #{transformer_forward.4} parent=5 // pred_fallthru
      _
    %p426 = scmp.le.s32.totalorder 1, %s20
    %p427 = scmp.lt.s32.totalorder %s20, 3
    %p428 = pnand %p426, %p427
    %p429 = pneg %p428
    // Predicated region
    $region57: #{transformer_forward.4} parent=5 // pred_check
      _
    $region58: #{transformer_forward.4} parent=5 // pred_check_branch
      %431 = sbr.rel (%p428) target = $region60
    $region59: #{transformer_forward.4} parent=5 // pred_region
      %s432 = ssub.s32 %s20, 1
      %p433 = scmp.lt.s32.totalorder %s29, 1
      %s434 = scalar_select %p433, %s29, 1
      %p435 = scmp.lt.s32.totalorder %s30, 0
      %s436 = scalar_select %p435, %s30, 0
      %s437 = sadd.s32 %s436, %s434
      %s438 = smul.addr %s437, 8
      %s439 = scalar_lea.vmem %s0, %s438
      %p440 = pneg %p60
      %p441 = pneg %p57
      %p442 = scmp.lt.s32.totalorder %s30, 0
      %s443 = scalar_select %p442, %s30, 0
      %s444 = smul.addr %s443, 8
      %s445 = scalar_lea.vmem %s1, %s444
      %p446 = pneg %p86
      %p447 = pneg %p83
      %p448 = pneg %p107
      %p449 = pneg %p104
      %p450 = pneg %p128
      %p451 = pneg %p125
      %p452 = pneg %p149
      %p453 = pneg %p146
      %p454 = pneg %p170
      %p455 = pneg %p167
      %p456 = pneg %p191
      %p457 = pneg %p188
      %p458 = pneg %p212
      %p459 = pneg %p209
      %p460 = pneg %p233
      %p461 = pneg %p230
      %p462 = pneg %p254
      %p463 = pneg %p251
      %p464 = pneg %p282
      %p465 = pneg %p279
      %p466 = scmp.lt.s32.totalorder %s29, 1
      %s467 = scalar_select %p466, %s29, 1
      %p468 = scmp.lt.s32.totalorder %s30, 0
      %s469 = scalar_select %p468, %s30, 0
      %s470 = sadd.s32 %s469, %s467
      %s471 = smul.addr %s470, 8
      %s472 = scalar_lea.vmem %s10, %s471
      %p473 = pneg %p310
      %p474 = pneg %p307
      %p475 = scmp.lt.s32.totalorder %s29, 1
      %s476 = scalar_select %p475, %s29, 1
      %p477 = scmp.lt.s32.totalorder %s30, 0
      %s478 = scalar_select %p477, %s30, 0
      %s479 = sadd.s32 %s478, %s476
      %s480 = smul.addr %s479, 8
      %s481 = scalar_lea.vmem %s11, %s480
      %p482 = pneg %p338
      %p483 = pneg %p335
      %p484 = scmp.lt.s32.totalorder %s29, 1
      %s485 = scalar_select %p484, %s29, 1
      %p486 = scmp.lt.s32.totalorder %s30, 0
      %s487 = scalar_select %p486, %s30, 0
      %s488 = sadd.s32 %s487, %s485
      %s489 = smul.addr %s488, 8
      %s490 = scalar_lea.vmem %s12, %s489
      %p491 = pneg %p366
      %p492 = pneg %p363
      %p493 = scmp.lt.s32.totalorder %s29, 1
      %s494 = scalar_select %p493, %s29, 1
      %p495 = scmp.lt.s32.totalorder %s30, 0
      %s496 = scalar_select %p495, %s30, 0
      %s497 = sadd.s32 %s496, %s494
      %s498 = smul.addr %s497, 8
      %s499 = scalar_lea.vmem %s13, %s498
      %p500 = scmp.lt.s32.totalorder %s29, 1
      %s501 = scalar_select %p500, %s29, 1
      %p502 = scmp.lt.s32.totalorder %s30, 0
      %s503 = scalar_select %p502, %s30, 0
      %s504 = sadd.s32 %s503, %s501
      %s505 = smul.addr %s504, 8
      %s506 = scalar_lea.vmem %s0, %s505
      %p507 = scmp.lt.s32.totalorder %s30, 0
      %s508 = scalar_select %p507, %s30, 0
      %s509 = smul.addr %s508, 8
      %s510 = scalar_lea.vmem %s1, %s509
      %p511 = scmp.lt.s32.totalorder %s29, 1
      %s512 = scalar_select %p511, %s29, 1
      %p513 = scmp.lt.s32.totalorder %s30, 0
      %s514 = scalar_select %p513, %s30, 0
      %s515 = sadd.s32 %s514, %s512
      %s516 = smul.addr %s515, 8
      %s517 = scalar_lea.vmem %s10, %s516
      %p518 = scmp.lt.s32.totalorder %s29, 1
      %s519 = scalar_select %p518, %s29, 1
      %p520 = scmp.lt.s32.totalorder %s30, 0
      %s521 = scalar_select %p520, %s30, 0
      %s522 = sadd.s32 %s521, %s519
      %s523 = smul.addr %s522, 8
      %s524 = scalar_lea.vmem %s11, %s523
      %p525 = scmp.lt.s32.totalorder %s29, 1
      %s526 = scalar_select %p525, %s29, 1
      %p527 = scmp.lt.s32.totalorder %s30, 0
      %s528 = scalar_select %p527, %s30, 0
      %s529 = sadd.s32 %s528, %s526
      %s530 = smul.addr %s529, 8
      %s531 = scalar_lea.vmem %s12, %s530
      %p532 = scmp.lt.s32.totalorder %s29, 1
      %s533 = scalar_select %p532, %s29, 1
      %p534 = scmp.lt.s32.totalorder %s30, 0
      %s535 = scalar_select %p534, %s30, 0
      %s536 = sadd.s32 %s535, %s533
      %s537 = smul.addr %s536, 8
      %s538 = scalar_lea.vmem %s13, %s537
      %v539 = vld [vmem:[%s506] sm:$0xff]
      %v540 = vld [vmem:[%s2] sm:$0xff]
      %v541 = vld [vmem:[%s2 + $0x8] sm:$0xff]
      %v542 = vld [vmem:[%s3] sm:$0x1]
      %v544 = vlaneseq
      %v545 = vshrl.u32 %v544, 7
      %v546 = vsub.s32 0, %v545
      %v547 = vrot.slane %v542, %v546
      %vm549 = vcmask 130048
      %v551 = vsel %vm549, %v539, 0
      %553 = vmatprep.subr.mxu0 0.0
      %554 = vmatpush1.msra.mxu0 0.0
      %555 = vmatprep.subr.mxu0 0.0
      %556 = vmatpush1.msra.mxu0 0.0
      %557 = vmatprep.subr.mxu0 0.0
      %558 = vmatpush1.msra.mxu0 0.0
      %559 = vmatprep.subr.mxu0 0.0
      %560 = vmatpush1.msra.mxu0 0.0
      %561 = vmatprep.subr.mxu0 0.0
      %562 = vmatpush1.msra.mxu0 0.0
      %563 = vmatprep.subr.mxu0 0.0
      %564 = vmatpush1.msra.mxu0 0.0
      %565 = vmatprep.subr.mxu0 0.0
      %566 = vmatpush1.msra.mxu0 0.0
      %567 = vmatprep.subr.mxu0 0.0
      %568 = vmatpush1.msra.mxu0 0.0
      %569 = vmatprep.subr.mxu0 0.0
      %570 = vmatpush1.msra.mxu0 0.0
      %571 = vmatprep.subr.mxu0 0.0
      %572 = vmatpush1.msra.mxu0 0.0
      %573 = vmatprep.subr.mxu0 0.0
      %574 = vmatpush1.msra.mxu0 0.0
      %575 = vmatprep.subr.mxu0 0.0
      %576 = vmatpush1.msra.mxu0 0.0
      %577 = vmatprep.subr.mxu0 0.0
      %578 = vmatpush1.msra.mxu0 0.0
      %579 = vmatprep.subr.mxu0 0.0
      %580 = vmatpush1.msra.mxu0 0.0
      %581 = vmatprep.subr.mxu0 0.0
      %582 = vmatpush1.msra.mxu0 %v541
      %583 = vmatprep.subr.mxu0 0.0
      %584 = vmatpush1.msra.mxu0 %v540
      %585 = vmatprep.subr.mxu0 0.0
      %586 = vmatpush2.msra.mxu0 0.0
      %587 = vmatprep.subr.mxu0 0.0
      %588 = vmatpush2.msra.mxu0 0.0
      %589 = vmatprep.subr.mxu0 0.0
      %590 = vmatpush2.msra.mxu0 0.0
      %591 = vmatprep.subr.mxu0 0.0
      %592 = vmatpush2.msra.mxu0 0.0
      %593 = vmatprep.subr.mxu0 0.0
      %594 = vmatpush2.msra.mxu0 0.0
      %595 = vmatprep.subr.mxu0 0.0
      %596 = vmatpush2.msra.mxu0 0.0
      %597 = vmatprep.subr.mxu0 0.0
      %598 = vmatpush2.msra.mxu0 0.0
      %599 = vmatprep.subr.mxu0 0.0
      %600 = vmatpush2.msra.mxu0 0.0
      %601 = vmatprep.subr.mxu0 0.0
      %602 = vmatpush2.msra.mxu0 0.0
      %603 = vmatprep.subr.mxu0 0.0
      %604 = vmatpush2.msra.mxu0 0.0
      %605 = vmatprep.subr.mxu0 0.0
      %606 = vmatpush2.msra.mxu0 0.0
      %607 = vmatprep.subr.mxu0 0.0
      %608 = vmatpush2.msra.mxu0 0.0
      %609 = vmatprep.subr.mxu0 0.0
      %610 = vmatpush2.msra.mxu0 0.0
      %611 = vmatprep.subr.mxu0 0.0
      %612 = vmatpush2.msra.mxu0 0.0
      %613 = vmatprep.subr.mxu0 0.0
      %614 = vmatpush2.msra.mxu0 0.0
      %615 = vmatprep.subr.mxu0 0.0
      %616 = vmatpush2.msra.mxu0 0.0
      %617 = vmatprep.mubr.f32.mxu0 0.0
      %618 = vmatmul.mubr.f32.gmra.mxu0 %v551
      %v619 = vpop.f32.mrf.mxu0
      %v620 = vadd.f32 %v547, %v619
      %v621 = vpop.f32.mrf.mxu0
      %622 = vdwg.mxu0
      %v623 = vld [vmem:[%s510] sm:$0xff]
      %v624 = vadd.f32 %v620, %v623
      %vm625 = vcmask 261120
      %626 = vst.msk [vmem:[%s517] sm:$0xff] %vm625, %v624
      %v627 = vld [vmem:[%s4] sm:$0xff]
      %v628 = vld [vmem:[%s4 + $0x8] sm:$0xff]
      %v629 = vld [vmem:[%s4 + $0x10] sm:$0xff]
      %v630 = vld [vmem:[%s4 + $0x18] sm:$0xff]
      %v631 = vld [vmem:[%s7] sm:$0x1]
      %v633 = vlaneseq
      %v634 = vshrl.u32 %v633, 7
      %v635 = vsub.s32 0, %v634
      %v636 = vrot.slane %v631, %v635
      %v639 = vsel %vm625, %v624, 0
      %641 = vmatprep.subr.mxu0 0.0
      %642 = vmatpush1.msra.mxu0 0.0
      %643 = vmatprep.subr.mxu0 0.0
      %644 = vmatpush1.msra.mxu0 0.0
      %645 = vmatprep.subr.mxu0 0.0
      %646 = vmatpush1.msra.mxu0 0.0
      %647 = vmatprep.subr.mxu0 0.0
      %648 = vmatpush1.msra.mxu0 0.0
      %649 = vmatprep.subr.mxu0 0.0
      %650 = vmatpush1.msra.mxu0 0.0
      %651 = vmatprep.subr.mxu0 0.0
      %652 = vmatpush1.msra.mxu0 0.0
      %653 = vmatprep.subr.mxu0 0.0
      %654 = vmatpush1.msra.mxu0 0.0
      %655 = vmatprep.subr.mxu0 0.0
      %656 = vmatpush1.msra.mxu0 0.0
      %657 = vmatprep.subr.mxu0 0.0
      %658 = vmatpush1.msra.mxu0 0.0
      %659 = vmatprep.subr.mxu0 0.0
      %660 = vmatpush1.msra.mxu0 0.0
      %661 = vmatprep.subr.mxu0 0.0
      %662 = vmatpush1.msra.mxu0 0.0
      %663 = vmatprep.subr.mxu0 0.0
      %664 = vmatpush1.msra.mxu0 0.0
      %665 = vmatprep.subr.mxu0 0.0
      %666 = vmatpush1.msra.mxu0 %v630
      %667 = vmatprep.subr.mxu0 0.0
      %668 = vmatpush1.msra.mxu0 %v629
      %669 = vmatprep.subr.mxu0 0.0
      %670 = vmatpush1.msra.mxu0 %v628
      %671 = vmatprep.subr.mxu0 0.0
      %672 = vmatpush1.msra.mxu0 %v627
      %673 = vmatprep.subr.mxu0 0.0
      %674 = vmatpush2.msra.mxu0 0.0
      %675 = vmatprep.subr.mxu0 0.0
      %676 = vmatpush2.msra.mxu0 0.0
      %677 = vmatprep.subr.mxu0 0.0
      %678 = vmatpush2.msra.mxu0 0.0
      %679 = vmatprep.subr.mxu0 0.0
      %680 = vmatpush2.msra.mxu0 0.0
      %681 = vmatprep.subr.mxu0 0.0
      %682 = vmatpush2.msra.mxu0 0.0
      %683 = vmatprep.subr.mxu0 0.0
      %684 = vmatpush2.msra.mxu0 0.0
      %685 = vmatprep.subr.mxu0 0.0
      %686 = vmatpush2.msra.mxu0 0.0
      %687 = vmatprep.subr.mxu0 0.0
      %688 = vmatpush2.msra.mxu0 0.0
      %689 = vmatprep.subr.mxu0 0.0
      %690 = vmatpush2.msra.mxu0 0.0
      %691 = vmatprep.subr.mxu0 0.0
      %692 = vmatpush2.msra.mxu0 0.0
      %693 = vmatprep.subr.mxu0 0.0
      %694 = vmatpush2.msra.mxu0 0.0
      %695 = vmatprep.subr.mxu0 0.0
      %696 = vmatpush2.msra.mxu0 0.0
      %697 = vmatprep.subr.mxu0 0.0
      %698 = vmatpush2.msra.mxu0 0.0
      %699 = vmatprep.subr.mxu0 0.0
      %700 = vmatpush2.msra.mxu0 0.0
      %701 = vmatprep.subr.mxu0 0.0
      %702 = vmatpush2.msra.mxu0 0.0
      %703 = vmatprep.subr.mxu0 0.0
      %704 = vmatpush2.msra.mxu0 0.0
      %705 = vmatprep.mubr.f32.mxu0 0.0
      %706 = vmatmul.mubr.f32.gmra.mxu0 %v639
      %v707 = vpop.f32.mrf.mxu0
      %v708 = vadd.f32 %v636, %v707
      %v709 = vpop.f32.mrf.mxu0
      %710 = vdwg.mxu0
      %711 = vst.msk [vmem:[%s524] sm:$0xff] %vm625, %v708
      %v712 = vld [vmem:[%s5] sm:$0xff]
      %v713 = vld [vmem:[%s5 + $0x8] sm:$0xff]
      %v714 = vld [vmem:[%s5 + $0x10] sm:$0xff]
      %v715 = vld [vmem:[%s5 + $0x18] sm:$0xff]
      %v716 = vld [vmem:[%s8] sm:$0x1]
      %v718 = vlaneseq
      %v719 = vshrl.u32 %v718, 7
      %v720 = vsub.s32 0, %v719
      %v721 = vrot.slane %v716, %v720
      %723 = vmatprep.subr.mxu0 0.0
      %724 = vmatpush1.msra.mxu0 0.0
      %725 = vmatprep.subr.mxu0 0.0
      %726 = vmatpush1.msra.mxu0 0.0
      %727 = vmatprep.subr.mxu0 0.0
      %728 = vmatpush1.msra.mxu0 0.0
      %729 = vmatprep.subr.mxu0 0.0
      %730 = vmatpush1.msra.mxu0 0.0
      %731 = vmatprep.subr.mxu0 0.0
      %732 = vmatpush1.msra.mxu0 0.0
      %733 = vmatprep.subr.mxu0 0.0
      %734 = vmatpush1.msra.mxu0 0.0
      %735 = vmatprep.subr.mxu0 0.0
      %736 = vmatpush1.msra.mxu0 0.0
      %737 = vmatprep.subr.mxu0 0.0
      %738 = vmatpush1.msra.mxu0 0.0
      %739 = vmatprep.subr.mxu0 0.0
      %740 = vmatpush1.msra.mxu0 0.0
      %741 = vmatprep.subr.mxu0 0.0
      %742 = vmatpush1.msra.mxu0 0.0
      %743 = vmatprep.subr.mxu0 0.0
      %744 = vmatpush1.msra.mxu0 0.0
      %745 = vmatprep.subr.mxu0 0.0
      %746 = vmatpush1.msra.mxu0 0.0
      %747 = vmatprep.subr.mxu0 0.0
      %748 = vmatpush1.msra.mxu0 %v715
      %749 = vmatprep.subr.mxu0 0.0
      %750 = vmatpush1.msra.mxu0 %v714
      %751 = vmatprep.subr.mxu0 0.0
      %752 = vmatpush1.msra.mxu0 %v713
      %753 = vmatprep.subr.mxu0 0.0
      %754 = vmatpush1.msra.mxu0 %v712
      %755 = vmatprep.subr.mxu0 0.0
      %756 = vmatpush2.msra.mxu0 0.0
      %757 = vmatprep.subr.mxu0 0.0
      %758 = vmatpush2.msra.mxu0 0.0
      %759 = vmatprep.subr.mxu0 0.0
      %760 = vmatpush2.msra.mxu0 0.0
      %761 = vmatprep.subr.mxu0 0.0
      %762 = vmatpush2.msra.mxu0 0.0
      %763 = vmatprep.subr.mxu0 0.0
      %764 = vmatpush2.msra.mxu0 0.0
      %765 = vmatprep.subr.mxu0 0.0
      %766 = vmatpush2.msra.mxu0 0.0
      %767 = vmatprep.subr.mxu0 0.0
      %768 = vmatpush2.msra.mxu0 0.0
      %769 = vmatprep.subr.mxu0 0.0
      %770 = vmatpush2.msra.mxu0 0.0
      %771 = vmatprep.subr.mxu0 0.0
      %772 = vmatpush2.msra.mxu0 0.0
      %773 = vmatprep.subr.mxu0 0.0
      %774 = vmatpush2.msra.mxu0 0.0
      %775 = vmatprep.subr.mxu0 0.0
      %776 = vmatpush2.msra.mxu0 0.0
      %777 = vmatprep.subr.mxu0 0.0
      %778 = vmatpush2.msra.mxu0 0.0
      %779 = vmatprep.subr.mxu0 0.0
      %780 = vmatpush2.msra.mxu0 0.0
      %781 = vmatprep.subr.mxu0 0.0
      %782 = vmatpush2.msra.mxu0 0.0
      %783 = vmatprep.subr.mxu0 0.0
      %784 = vmatpush2.msra.mxu0 0.0
      %785 = vmatprep.subr.mxu0 0.0
      %786 = vmatpush2.msra.mxu0 0.0
      %787 = vmatprep.mubr.f32.mxu0 0.0
      %788 = vmatmul.mubr.f32.gmra.mxu0 %v639
      %v789 = vpop.f32.mrf.mxu0
      %v790 = vadd.f32 %v721, %v789
      %v791 = vpop.f32.mrf.mxu0
      %792 = vdwg.mxu0
      %793 = vst.msk [vmem:[%s531] sm:$0xff] %vm625, %v790
      %v794 = vld [vmem:[%s6] sm:$0xff]
      %v795 = vld [vmem:[%s6 + $0x8] sm:$0xff]
      %v796 = vld [vmem:[%s6 + $0x10] sm:$0xff]
      %v797 = vld [vmem:[%s6 + $0x18] sm:$0xff]
      %v798 = vld [vmem:[%s9] sm:$0x1]
      %v800 = vlaneseq
      %v801 = vshrl.u32 %v800, 7
      %v802 = vsub.s32 0, %v801
      %v803 = vrot.slane %v798, %v802
      %805 = vmatprep.subr.mxu0 0.0
      %806 = vmatpush1.msra.mxu0 0.0
      %807 = vmatprep.subr.mxu0 0.0
      %808 = vmatpush1.msra.mxu0 0.0
      %809 = vmatprep.subr.mxu0 0.0
      %810 = vmatpush1.msra.mxu0 0.0
      %811 = vmatprep.subr.mxu0 0.0
      %812 = vmatpush1.msra.mxu0 0.0
      %813 = vmatprep.subr.mxu0 0.0
      %814 = vmatpush1.msra.mxu0 0.0
      %815 = vmatprep.subr.mxu0 0.0
      %816 = vmatpush1.msra.mxu0 0.0
      %817 = vmatprep.subr.mxu0 0.0
      %818 = vmatpush1.msra.mxu0 0.0
      %819 = vmatprep.subr.mxu0 0.0
      %820 = vmatpush1.msra.mxu0 0.0
      %821 = vmatprep.subr.mxu0 0.0
      %822 = vmatpush1.msra.mxu0 0.0
      %823 = vmatprep.subr.mxu0 0.0
      %824 = vmatpush1.msra.mxu0 0.0
      %825 = vmatprep.subr.mxu0 0.0
      %826 = vmatpush1.msra.mxu0 0.0
      %827 = vmatprep.subr.mxu0 0.0
      %828 = vmatpush1.msra.mxu0 0.0
      %829 = vmatprep.subr.mxu0 0.0
      %830 = vmatpush1.msra.mxu0 %v797
      %831 = vmatprep.subr.mxu0 0.0
      %832 = vmatpush1.msra.mxu0 %v796
      %833 = vmatprep.subr.mxu0 0.0
      %834 = vmatpush1.msra.mxu0 %v795
      %835 = vmatprep.subr.mxu0 0.0
      %836 = vmatpush1.msra.mxu0 %v794
      %837 = vmatprep.subr.mxu0 0.0
      %838 = vmatpush2.msra.mxu0 0.0
      %839 = vmatprep.subr.mxu0 0.0
      %840 = vmatpush2.msra.mxu0 0.0
      %841 = vmatprep.subr.mxu0 0.0
      %842 = vmatpush2.msra.mxu0 0.0
      %843 = vmatprep.subr.mxu0 0.0
      %844 = vmatpush2.msra.mxu0 0.0
      %845 = vmatprep.subr.mxu0 0.0
      %846 = vmatpush2.msra.mxu0 0.0
      %847 = vmatprep.subr.mxu0 0.0
      %848 = vmatpush2.msra.mxu0 0.0
      %849 = vmatprep.subr.mxu0 0.0
      %850 = vmatpush2.msra.mxu0 0.0
      %851 = vmatprep.subr.mxu0 0.0
      %852 = vmatpush2.msra.mxu0 0.0
      %853 = vmatprep.subr.mxu0 0.0
      %854 = vmatpush2.msra.mxu0 0.0
      %855 = vmatprep.subr.mxu0 0.0
      %856 = vmatpush2.msra.mxu0 0.0
      %857 = vmatprep.subr.mxu0 0.0
      %858 = vmatpush2.msra.mxu0 0.0
      %859 = vmatprep.subr.mxu0 0.0
      %860 = vmatpush2.msra.mxu0 0.0
      %861 = vmatprep.subr.mxu0 0.0
      %862 = vmatpush2.msra.mxu0 0.0
      %863 = vmatprep.subr.mxu0 0.0
      %864 = vmatpush2.msra.mxu0 0.0
      %865 = vmatprep.subr.mxu0 0.0
      %866 = vmatpush2.msra.mxu0 0.0
      %867 = vmatprep.subr.mxu0 0.0
      %868 = vmatpush2.msra.mxu0 0.0
      %869 = vmatprep.mubr.f32.mxu0 0.0
      %870 = vmatmul.mubr.f32.gmra.mxu0 %v639
      %v871 = vpop.f32.mrf.mxu0
      %v872 = vadd.f32 %v803, %v871
      %v873 = vpop.f32.mrf.mxu0
      %874 = vdwg.mxu0
      %875 = vst.msk [vmem:[%s538] sm:$0xff] %vm625, %v872
      %p876 = scmp.lt.s32.totalorder %s29, 1
      %s877 = scalar_select %p876, %s29, 1
      %p878 = scmp.lt.s32.totalorder %s30, 0
      %s879 = scalar_select %p878, %s30, 0
      %s880 = sadd.s32 %s879, %s877
      %s881 = smul.addr %s880, 8
      %s882 = scalar_lea.vmem %s10, %s881
      %p883 = scmp.lt.s32.totalorder %s29, 1
      %s884 = scalar_select %p883, %s29, 1
      %p885 = scmp.lt.s32.totalorder %s30, 0
      %s886 = scalar_select %p885, %s30, 0
      %s887 = sadd.s32 %s886, %s884
      %s888 = smul.addr %s887, 8
      %s889 = scalar_lea.vmem %s11, %s888
      %p890 = scmp.lt.s32.totalorder %s29, 1
      %s891 = scalar_select %p890, %s29, 1
      %p892 = scmp.lt.s32.totalorder %s30, 0
      %s893 = scalar_select %p892, %s30, 0
      %s894 = sadd.s32 %s893, %s891
      %s895 = smul.addr %s894, 8
      %s896 = scalar_lea.vmem %s12, %s895
      %p897 = scmp.lt.s32.totalorder %s29, 1
      %s898 = scalar_select %p897, %s29, 1
      %p899 = scmp.lt.s32.totalorder %s30, 0
      %s900 = scalar_select %p899, %s30, 0
      %s901 = sadd.s32 %s900, %s898
      %s902 = smul.addr %s901, 8
      %s903 = scalar_lea.vmem %s13, %s902
      // Predicated region
      $region61: #{transformer_forward.4} parent=59 // pred_check
        %p904 = pneg %p279
      $region62: #{transformer_forward.4} parent=59 // pred_check_branch
        %906 = sbr.rel (%p904) target = $region64
      $region63: #{transformer_forward.4} parent=59 // pred_region
        _
      $region64: #{transformer_forward.4} parent=59 // pred_fallthru
        _
      // Predicated region
      $region65: #{transformer_forward.4} parent=59 // pred_check
        %p907 = pneg %p307
      $region66: #{transformer_forward.4} parent=59 // pred_check_branch
        %909 = sbr.rel (%p907) target = $region68
      $region67: #{transformer_forward.4} parent=59 // pred_region
        _
      $region68: #{transformer_forward.4} parent=59 // pred_fallthru
        _
      // Predicated region
      $region69: #{transformer_forward.4} parent=59 // pred_check
        %p910 = pneg %p335
      $region70: #{transformer_forward.4} parent=59 // pred_check_branch
        %912 = sbr.rel (%p910) target = $region72
      $region71: #{transformer_forward.4} parent=59 // pred_region
        _
      $region72: #{transformer_forward.4} parent=59 // pred_fallthru
        _
      // Predicated region
      $region73: #{transformer_forward.4} parent=59 // pred_check
        %p913 = pneg %p363
      $region74: #{transformer_forward.4} parent=59 // pred_check_branch
        %915 = sbr.rel (%p913) target = $region76
      $region75: #{transformer_forward.4} parent=59 // pred_region
        _
      $region76: #{transformer_forward.4} parent=59 // pred_fallthru
        _
    $region60: #{transformer_forward.4} parent=5 // pred_fallthru
      _
    %p916 = scmp.le.s32.totalorder 2, %s20
    // Predicated region
    $region77: #{transformer_forward.4} parent=5 // pred_check
      %p917 = pneg %p916
    $region78: #{transformer_forward.4} parent=5 // pred_check_branch
      %919 = sbr.rel (%p917) target = $region80
    $region79: #{transformer_forward.4} parent=5 // pred_region
      %s920 = ssub.s32 %s20, 2
      // Predicated region
      $region81: #{transformer_forward.4} parent=79 // pred_check
        %p921 = pneg %p285
      $region82: #{transformer_forward.4} parent=79 // pred_check_branch
        %923 = sbr.rel (%p921) target = $region84
      $region83: #{transformer_forward.4} parent=79 // pred_region
        %p924 = scmp.lt.s32.totalorder %s31, 1
        %s925 = scalar_select %p924, %s31, 1
        %p926 = scmp.lt.s32.totalorder %s32, 0
        %s927 = scalar_select %p926, %s32, 0
        %s928 = sadd.s32 %s927, %s925
        %s929 = smul.addr %s928, 8
        %s930 = scalar_lea.vmem %s10, %s929
      $region84: #{transformer_forward.4} parent=79 // pred_fallthru
        _
      // Predicated region
      $region85: #{transformer_forward.4} parent=79 // pred_check
        %p931 = pneg %p313
      $region86: #{transformer_forward.4} parent=79 // pred_check_branch
        %933 = sbr.rel (%p931) target = $region88
      $region87: #{transformer_forward.4} parent=79 // pred_region
        %p934 = scmp.lt.s32.totalorder %s31, 1
        %s935 = scalar_select %p934, %s31, 1
        %p936 = scmp.lt.s32.totalorder %s32, 0
        %s937 = scalar_select %p936, %s32, 0
        %s938 = sadd.s32 %s937, %s935
        %s939 = smul.addr %s938, 8
        %s940 = scalar_lea.vmem %s11, %s939
      $region88: #{transformer_forward.4} parent=79 // pred_fallthru
        _
      // Predicated region
      $region89: #{transformer_forward.4} parent=79 // pred_check
        %p941 = pneg %p341
      $region90: #{transformer_forward.4} parent=79 // pred_check_branch
        %943 = sbr.rel (%p941) target = $region92
      $region91: #{transformer_forward.4} parent=79 // pred_region
        %p944 = scmp.lt.s32.totalorder %s31, 1
        %s945 = scalar_select %p944, %s31, 1
        %p946 = scmp.lt.s32.totalorder %s32, 0
        %s947 = scalar_select %p946, %s32, 0
        %s948 = sadd.s32 %s947, %s945
        %s949 = smul.addr %s948, 8
        %s950 = scalar_lea.vmem %s12, %s949
      $region92: #{transformer_forward.4} parent=79 // pred_fallthru
        _
      // Predicated region
      $region93: #{transformer_forward.4} parent=79 // pred_check
        %p951 = pneg %p369
      $region94: #{transformer_forward.4} parent=79 // pred_check_branch
        %953 = sbr.rel (%p951) target = $region96
      $region95: #{transformer_forward.4} parent=79 // pred_region
        %p954 = scmp.lt.s32.totalorder %s31, 1
        %s955 = scalar_select %p954, %s31, 1
        %p956 = scmp.lt.s32.totalorder %s32, 0
        %s957 = scalar_select %p956, %s32, 0
        %s958 = sadd.s32 %s957, %s955
        %s959 = smul.addr %s958, 8
        %s960 = scalar_lea.vmem %s13, %s959
      $region96: #{transformer_forward.4} parent=79 // pred_fallthru
        _
    $region80: #{transformer_forward.4} parent=5 // pred_fallthru
      _
  $region6: #{transformer_forward.4} parent=0 // loop_footer
    %s24 = sadd.s32 1, %s20
  $region7: #{transformer_forward.4} parent=0 // loop_footer_branch
    %19 = sbr.rel target = $region3
  $region8: #{transformer_forward.4} parent=0 // loop_exit
    _

// kernel: transformer_forward.5
$region0: #{transformer_forward.5}
  #allocation0 [shape = 'u32[]', space=smem, size = 0x4, offset = 0x4, fixed_abs, tag = 'smem constant byte address 0x4 - core index']
  #allocation1 [shape = 'u32[144,128]{1,0:T(1,128)}', space=vmem, size = 0x12000, scoped, tag = 'internal scratch']
  %s0 = inlined_call_operand.vmem [shape: f32[2,8,32], index: 0, kind: input, shape index: {}]
  %s1 = inlined_call_operand.vmem [shape: f32[2,8,32], index: 1, kind: input, shape index: {}]
  %s2 = inlined_call_operand.vmem [shape: f32[2,8,32], index: 2, kind: input, shape index: {}]
  %s3 = inlined_call_operand.vmem [shape: f32[2,8,32], index: 3, kind: output, shape index: {}]
  %s4 = sld [smem:[#allocation0]]
  $region45: #{transformer_forward.5} parent=0
    _
  %s6 = ssub.s32 1, %s4
  %s7 = scalar_select 0, %s6, %s4
  loop: start=0, step=1, limit=4
  $region2: #{transformer_forward.5} parent=0 // loop_pre_header
    _
  $region3: #{transformer_forward.5} parent=0 // loop_header
    %s9 = sphi 0, %s13
    %p10 = scmp.ge.s32.totalorder %s9, 4
    %s16 = sphi 0, %s28
    %s17 = sphi 0, %s24
    %s18 = sphi 0, %s16
    %s19 = sphi 0, %s17
    %s20 = sphi 0, %s18
    %s21 = sphi 0, %s19
    %s33 = sphi 0, %s35
    %s36 = sphi 0, %s33
    %s37 = sphi 0, %s36
    %s53 = sphi 0, %s37
    %s59 = sphi 0, %s61
    %s62 = sphi 0, %s59
    %s63 = sphi 0, %s62
    %s79 = sphi 0, %s63
    %s85 = sphi 0, %s87
    %s88 = sphi 0, %s85
    %s89 = sphi 0, %s88
    %s105 = sphi 0, %s89
    %s113 = sphi 0, %s115
    %s116 = sphi 0, %s113
    %s117 = sphi 0, %s116
    %s133 = sphi 0, %s117
  $region4: #{transformer_forward.5} parent=0 // loop_header_branch
    %12 = sbr.rel (%p10) target = $region8
  $region5: #{transformer_forward.5} parent=0 // loop_body
    %s14 = ssub.s32 %s9, 1
    %s15 = ssub.s32 %s9, 2
    %s22 = sadd.s32 1, %s17
    %p23 = scmp.ge.s32.totalorder %s22, 1
    %s24 = scalar_select %p23, 0, %s22
    %s25 = sadd.s32 1, %s16
    %s26 = scalar_select %p23, %s25, %s16
    %p27 = scmp.ge.s32.totalorder %s26, 2
    %s28 = scalar_select %p27, 0, %s26
    %s29 = ssub.s32 %s16, %s28
    %s30 = ssub.s32 %s17, %s24
    %s31 = sor.u32 %s29, %s30
    %p32 = scmp.eq.s32.totalorder %s31, 0
    %s34 = sadd.s32 %s33, 1
    %s35 = scalar_select %p32, %s33, %s34
    %p38 = pneg %p32
    %p39 = scmp.eq.s32.totalorder %s9, 1
    %p40 = por %p38, %p39
    %p41 = scmp.ne.s32.totalorder %s33, %s36
    %p42 = scmp.eq.s32.totalorder %s9, 0
    %p43 = por %p41, %p42
    %p44 = scmp.ne.s32.totalorder %s33, %s36
    %p45 = scmp.eq.s32.totalorder %s14, 1
    %p46 = por %p44, %p45
    %p47 = scmp.ne.s32.totalorder %s36, %s37
    %p48 = scmp.eq.s32.totalorder %s14, 0
    %p49 = por %p47, %p48
    %p50 = scmp.ne.s32.totalorder %s36, %s37
    %p51 = scmp.eq.s32.totalorder %s15, 1
    %p52 = por %p50, %p51
    %p54 = scmp.ne.s32.totalorder %s37, %s53
    %p55 = scmp.eq.s32.totalorder %s15, 0
    %p56 = por %p54, %p55
    %s57 = ssub.s32 %s16, %s28
    %p58 = scmp.eq.s32.totalorder %s57, 0
    %s60 = sadd.s32 %s59, 1
    %s61 = scalar_select %p58, %s59, %s60
    %p64 = pneg %p58
    %p65 = scmp.eq.s32.totalorder %s9, 1
    %p66 = por %p64, %p65
    %p67 = scmp.ne.s32.totalorder %s59, %s62
    %p68 = scmp.eq.s32.totalorder %s9, 0
    %p69 = por %p67, %p68
    %p70 = scmp.ne.s32.totalorder %s59, %s62
    %p71 = scmp.eq.s32.totalorder %s14, 1
    %p72 = por %p70, %p71
    %p73 = scmp.ne.s32.totalorder %s62, %s63
    %p74 = scmp.eq.s32.totalorder %s14, 0
    %p75 = por %p73, %p74
    %p76 = scmp.ne.s32.totalorder %s62, %s63
    %p77 = scmp.eq.s32.totalorder %s15, 1
    %p78 = por %p76, %p77
    %p80 = scmp.ne.s32.totalorder %s63, %s79
    %p81 = scmp.eq.s32.totalorder %s15, 0
    %p82 = por %p80, %p81
    %s83 = ssub.s32 %s16, %s28
    %p84 = scmp.eq.s32.totalorder %s83, 0
    %s86 = sadd.s32 %s85, 1
    %s87 = scalar_select %p84, %s85, %s86
    %p90 = pneg %p84
    %p91 = scmp.eq.s32.totalorder %s9, 1
    %p92 = por %p90, %p91
    %p93 = scmp.ne.s32.totalorder %s85, %s88
    %p94 = scmp.eq.s32.totalorder %s9, 0
    %p95 = por %p93, %p94
    %p96 = scmp.ne.s32.totalorder %s85, %s88
    %p97 = scmp.eq.s32.totalorder %s14, 1
    %p98 = por %p96, %p97
    %p99 = scmp.ne.s32.totalorder %s88, %s89
    %p100 = scmp.eq.s32.totalorder %s14, 0
    %p101 = por %p99, %p100
    %p102 = scmp.ne.s32.totalorder %s88, %s89
    %p103 = scmp.eq.s32.totalorder %s15, 1
    %p104 = por %p102, %p103
    %p106 = scmp.ne.s32.totalorder %s89, %s105
    %p107 = scmp.eq.s32.totalorder %s15, 0
    %p108 = por %p106, %p107
    %s109 = ssub.s32 %s16, %s28
    %s110 = ssub.s32 %s17, %s24
    %s111 = sor.u32 %s109, %s110
    %p112 = scmp.eq.s32.totalorder %s111, 0
    %s114 = sadd.s32 %s113, 1
    %s115 = scalar_select %p112, %s113, %s114
    %p118 = pneg %p112
    %p119 = scmp.eq.s32.totalorder %s9, 1
    %p120 = por %p118, %p119
    %p121 = scmp.ne.s32.totalorder %s113, %s116
    %p122 = scmp.eq.s32.totalorder %s9, 0
    %p123 = por %p121, %p122
    %p124 = scmp.ne.s32.totalorder %s113, %s116
    %p125 = scmp.eq.s32.totalorder %s14, 1
    %p126 = por %p124, %p125
    %p127 = scmp.ne.s32.totalorder %s116, %s117
    %p128 = scmp.eq.s32.totalorder %s14, 0
    %p129 = por %p127, %p128
    %p130 = scmp.ne.s32.totalorder %s116, %s117
    %p131 = scmp.eq.s32.totalorder %s15, 1
    %p132 = por %p130, %p131
    %p134 = scmp.ne.s32.totalorder %s117, %s133
    %p135 = scmp.eq.s32.totalorder %s15, 0
    %p136 = por %p134, %p135
    %p137 = scmp.le.s32.totalorder 1, %s9
    %p138 = scmp.lt.s32.totalorder %s9, 3
    %p139 = pnand %p137, %p138
    %p140 = pneg %p139
    // Predicated region
    $region9: #{transformer_forward.5} parent=5 // pred_check
      _
    $region10: #{transformer_forward.5} parent=5 // pred_check_branch
      %142 = sbr.rel (%p139) target = $region12
    $region11: #{transformer_forward.5} parent=5 // pred_region
      %s143 = ssub.s32 %s9, 1
    $region12: #{transformer_forward.5} parent=5 // pred_fallthru
      _
    %p144 = scmp.lt.s32.totalorder %s9, 2
    // Predicated region
    $region13: #{transformer_forward.5} parent=5 // pred_check
      %p145 = pneg %p144
    $region14: #{transformer_forward.5} parent=5 // pred_check_branch
      %147 = sbr.rel (%p145) target = $region16
    $region15: #{transformer_forward.5} parent=5 // pred_region
      // Predicated region
      $region17: #{transformer_forward.5} parent=15 // pred_check
        %p148 = pneg %p43
      $region18: #{transformer_forward.5} parent=15 // pred_check_branch
        %150 = sbr.rel (%p148) target = $region20
      $region19: #{transformer_forward.5} parent=15 // pred_region
        %p151 = scmp.lt.s32.totalorder %s16, 1
        %s152 = scalar_select %p151, %s16, 1
        %p153 = scmp.lt.s32.totalorder %s17, 0
        %s154 = scalar_select %p153, %s17, 0
        %s155 = sadd.s32 %s154, %s152
        %s156 = smul.addr %s155, 8
        %s157 = scalar_lea.vmem %s0, %s156
      $region20: #{transformer_forward.5} parent=15 // pred_fallthru
        _
      // Predicated region
      $region21: #{transformer_forward.5} parent=15 // pred_check
        %p158 = pneg %p69
      $region22: #{transformer_forward.5} parent=15 // pred_check_branch
        %160 = sbr.rel (%p158) target = $region24
      $region23: #{transformer_forward.5} parent=15 // pred_region
        %p161 = scmp.lt.s32.totalorder %s16, 1
        %s162 = scalar_select %p161, %s16, 1
        %s163 = smul.addr %s162, 8
        %s164 = scalar_lea.vmem %s1, %s163
      $region24: #{transformer_forward.5} parent=15 // pred_fallthru
        _
      // Predicated region
      $region25: #{transformer_forward.5} parent=15 // pred_check
        %p165 = pneg %p95
      $region26: #{transformer_forward.5} parent=15 // pred_check_branch
        %167 = sbr.rel (%p165) target = $region28
      $region27: #{transformer_forward.5} parent=15 // pred_region
        %p168 = scmp.lt.s32.totalorder %s16, 1
        %s169 = scalar_select %p168, %s16, 1
        %s170 = smul.addr %s169, 8
        %s171 = scalar_lea.vmem %s2, %s170
      $region28: #{transformer_forward.5} parent=15 // pred_fallthru
        _
    $region16: #{transformer_forward.5} parent=5 // pred_fallthru
      _
    %p172 = scmp.le.s32.totalorder 1, %s9
    %p173 = scmp.lt.s32.totalorder %s9, 3
    %p174 = pnand %p172, %p173
    %p175 = pneg %p174
    // Predicated region
    $region29: #{transformer_forward.5} parent=5 // pred_check
      _
    $region30: #{transformer_forward.5} parent=5 // pred_check_branch
      %177 = sbr.rel (%p174) target = $region32
    $region31: #{transformer_forward.5} parent=5 // pred_region
      %s178 = ssub.s32 %s9, 1
      %p179 = scmp.lt.s32.totalorder %s18, 1
      %s180 = scalar_select %p179, %s18, 1
      %p181 = scmp.lt.s32.totalorder %s19, 0
      %s182 = scalar_select %p181, %s19, 0
      %s183 = sadd.s32 %s182, %s180
      %s184 = smul.addr %s183, 8
      %s185 = scalar_lea.vmem %s0, %s184
      %p186 = pneg %p49
      %p187 = pneg %p46
      %p188 = scmp.lt.s32.totalorder %s18, 1
      %s189 = scalar_select %p188, %s18, 1
      %s190 = smul.addr %s189, 8
      %s191 = scalar_lea.vmem %s1, %s190
      %p192 = pneg %p75
      %p193 = pneg %p72
      %p194 = scmp.lt.s32.totalorder %s18, 1
      %s195 = scalar_select %p194, %s18, 1
      %s196 = smul.addr %s195, 8
      %s197 = scalar_lea.vmem %s2, %s196
      %p198 = pneg %p101
      %p199 = pneg %p98
      %p200 = pneg %p129
      %p201 = pneg %p126
      %p202 = scmp.lt.s32.totalorder %s18, 1
      %s203 = scalar_select %p202, %s18, 1
      %p204 = scmp.lt.s32.totalorder %s19, 0
      %s205 = scalar_select %p204, %s19, 0
      %s206 = sadd.s32 %s205, %s203
      %s207 = smul.addr %s206, 8
      %s208 = scalar_lea.vmem %s3, %s207
      %p209 = scmp.lt.s32.totalorder %s18, 1
      %s210 = scalar_select %p209, %s18, 1
      %p211 = scmp.lt.s32.totalorder %s19, 0
      %s212 = scalar_select %p211, %s19, 0
      %s213 = sadd.s32 %s212, %s210
      %s214 = smul.addr %s213, 8
      %s215 = scalar_lea.vmem %s0, %s214
      %p216 = scmp.lt.s32.totalorder %s18, 1
      %s217 = scalar_select %p216, %s18, 1
      %s218 = smul.addr %s217, 8
      %s219 = scalar_lea.vmem %s1, %s218
      %p220 = scmp.lt.s32.totalorder %s18, 1
      %s221 = scalar_select %p220, %s18, 1
      %s222 = smul.addr %s221, 8
      %s223 = scalar_lea.vmem %s2, %s222
      %p224 = scmp.lt.s32.totalorder %s18, 1
      %s225 = scalar_select %p224, %s18, 1
      %p226 = scmp.lt.s32.totalorder %s19, 0
      %s227 = scalar_select %p226, %s19, 0
      %s228 = sadd.s32 %s227, %s225
      %s229 = smul.addr %s228, 8
      %s230 = scalar_lea.vmem %s3, %s229
      %v231 = vld [vmem:[%s215] sm:$0xff]
      %v232 = vld [vmem:[%s219] sm:$0xff]
      %v233 = vld [vmem:[%s223] sm:$0xff]
      %vm234 = vcmask 64512
      %v236 = vsel %vm234, %v231, 0
      %v239 = vsel %vm234, %v232, 0
      %241 = vmatprep.subr.mxu0 0.0
      %242 = vmatpush1.xpose.msra.mxu0 0.0
      %243 = vmatprep.subr.mxu0 0.0
      %244 = vmatpush1.xpose.msra.mxu0 0.0
      %245 = vmatprep.subr.mxu0 0.0
      %246 = vmatpush1.xpose.msra.mxu0 0.0
      %247 = vmatprep.subr.mxu0 0.0
      %248 = vmatpush1.xpose.msra.mxu0 0.0
      %249 = vmatprep.subr.mxu0 0.0
      %250 = vmatpush1.xpose.msra.mxu0 0.0
      %251 = vmatprep.subr.mxu0 0.0
      %252 = vmatpush1.xpose.msra.mxu0 0.0
      %253 = vmatprep.subr.mxu0 0.0
      %254 = vmatpush1.xpose.msra.mxu0 0.0
      %255 = vmatprep.subr.mxu0 0.0
      %256 = vmatpush1.xpose.msra.mxu0 0.0
      %257 = vmatprep.subr.mxu0 0.0
      %258 = vmatpush1.xpose.msra.mxu0 0.0
      %259 = vmatprep.subr.mxu0 0.0
      %260 = vmatpush1.xpose.msra.mxu0 0.0
      %261 = vmatprep.subr.mxu0 0.0
      %262 = vmatpush1.xpose.msra.mxu0 0.0
      %263 = vmatprep.subr.mxu0 0.0
      %264 = vmatpush1.xpose.msra.mxu0 0.0
      %265 = vmatprep.subr.mxu0 0.0
      %266 = vmatpush1.xpose.msra.mxu0 0.0
      %267 = vmatprep.subr.mxu0 0.0
      %268 = vmatpush1.xpose.msra.mxu0 0.0
      %269 = vmatprep.subr.mxu0 0.0
      %270 = vmatpush1.xpose.msra.mxu0 0.0
      %271 = vmatprep.subr.mxu0 0.0
      %272 = vmatpush1.xpose.msra.mxu0 %v239
      %273 = vmatprep.subr.mxu0 0.0
      %274 = vmatpush2.xpose.msra.mxu0 0.0
      %275 = vmatprep.subr.mxu0 0.0
      %276 = vmatpush2.xpose.msra.mxu0 0.0
      %277 = vmatprep.subr.mxu0 0.0
      %278 = vmatpush2.xpose.msra.mxu0 0.0
      %279 = vmatprep.subr.mxu0 0.0
      %280 = vmatpush2.xpose.msra.mxu0 0.0
      %281 = vmatprep.subr.mxu0 0.0
      %282 = vmatpush2.xpose.msra.mxu0 0.0
      %283 = vmatprep.subr.mxu0 0.0
      %284 = vmatpush2.xpose.msra.mxu0 0.0
      %285 = vmatprep.subr.mxu0 0.0
      %286 = vmatpush2.xpose.msra.mxu0 0.0
      %287 = vmatprep.subr.mxu0 0.0
      %288 = vmatpush2.xpose.msra.mxu0 0.0
      %289 = vmatprep.subr.mxu0 0.0
      %290 = vmatpush2.xpose.msra.mxu0 0.0
      %291 = vmatprep.subr.mxu0 0.0
      %292 = vmatpush2.xpose.msra.mxu0 0.0
      %293 = vmatprep.subr.mxu0 0.0
      %294 = vmatpush2.xpose.msra.mxu0 0.0
      %295 = vmatprep.subr.mxu0 0.0
      %296 = vmatpush2.xpose.msra.mxu0 0.0
      %297 = vmatprep.subr.mxu0 0.0
      %298 = vmatpush2.xpose.msra.mxu0 0.0
      %299 = vmatprep.subr.mxu0 0.0
      %300 = vmatpush2.xpose.msra.mxu0 0.0
      %301 = vmatprep.subr.mxu0 0.0
      %302 = vmatpush2.xpose.msra.mxu0 0.0
      %303 = vmatprep.subr.mxu0 0.0
      %304 = vmatpush2.xpose.msra.mxu0 0.0
      %305 = vmatprep.mubr.f32.mxu0 0.0
      %306 = vmatmul.mubr.f32.gmra.mxu0 %v236
      %v307 = vpop.f32.mrf.mxu0
      %v308 = vadd.f32 0.0, %v307
      %v309 = vpop.f32.mrf.mxu0
      %310 = vdwg.mxu0
      %v311 = vmul.f32 %v308, 0.35355338
      %v312 = vsel %vm234, %v311, -inf
      %313 = vmax.xlane.f32.xlu0 %v312
      %v314 = vpop.xlane.xlu0 %313
      %v315 = vsub.f32 %v311, %v314
      %v316 = vmul.f32 %v315, 1.442695
      %v317 = vpow.pop %v316
      %v318 = vsel %vm234, %v317, 0.0
      %319 = vadd.xlane.f32.xlu0 %v318
      %v320 = vpop.xlane.xlu0 %319
      %v322 = vsel %vm234, %v317, 0
      %324 = vmatprep.subr.mxu0 0.0
      %325 = vmatpush1.msra.mxu0 0.0
      %326 = vmatprep.subr.mxu0 0.0
      %327 = vmatpush1.msra.mxu0 0.0
      %328 = vmatprep.subr.mxu0 0.0
      %329 = vmatpush1.msra.mxu0 0.0
      %330 = vmatprep.subr.mxu0 0.0
      %331 = vmatpush1.msra.mxu0 0.0
      %332 = vmatprep.subr.mxu0 0.0
      %333 = vmatpush1.msra.mxu0 0.0
      %334 = vmatprep.subr.mxu0 0.0
      %335 = vmatpush1.msra.mxu0 0.0
      %336 = vmatprep.subr.mxu0 0.0
      %337 = vmatpush1.msra.mxu0 0.0
      %338 = vmatprep.subr.mxu0 0.0
      %339 = vmatpush1.msra.mxu0 0.0
      %340 = vmatprep.subr.mxu0 0.0
      %341 = vmatpush1.msra.mxu0 0.0
      %342 = vmatprep.subr.mxu0 0.0
      %343 = vmatpush1.msra.mxu0 0.0
      %344 = vmatprep.subr.mxu0 0.0
      %345 = vmatpush1.msra.mxu0 0.0
      %346 = vmatprep.subr.mxu0 0.0
      %347 = vmatpush1.msra.mxu0 0.0
      %348 = vmatprep.subr.mxu0 0.0
      %349 = vmatpush1.msra.mxu0 0.0
      %350 = vmatprep.subr.mxu0 0.0
      %351 = vmatpush1.msra.mxu0 0.0
      %352 = vmatprep.subr.mxu0 0.0
      %353 = vmatpush1.msra.mxu0 0.0
      %354 = vmatprep.subr.mxu0 0.0
      %355 = vmatpush1.msra.mxu0 %v233
      %356 = vmatprep.subr.mxu0 0.0
      %357 = vmatpush2.msra.mxu0 0.0
      %358 = vmatprep.subr.mxu0 0.0
      %359 = vmatpush2.msra.mxu0 0.0
      %360 = vmatprep.subr.mxu0 0.0
      %361 = vmatpush2.msra.mxu0 0.0
      %362 = vmatprep.subr.mxu0 0.0
      %363 = vmatpush2.msra.mxu0 0.0
      %364 = vmatprep.subr.mxu0 0.0
      %365 = vmatpush2.msra.mxu0 0.0
      %366 = vmatprep.subr.mxu0 0.0
      %367 = vmatpush2.msra.mxu0 0.0
      %368 = vmatprep.subr.mxu0 0.0
      %369 = vmatpush2.msra.mxu0 0.0
      %370 = vmatprep.subr.mxu0 0.0
      %371 = vmatpush2.msra.mxu0 0.0
      %372 = vmatprep.subr.mxu0 0.0
      %373 = vmatpush2.msra.mxu0 0.0
      %374 = vmatprep.subr.mxu0 0.0
      %375 = vmatpush2.msra.mxu0 0.0
      %376 = vmatprep.subr.mxu0 0.0
      %377 = vmatpush2.msra.mxu0 0.0
      %378 = vmatprep.subr.mxu0 0.0
      %379 = vmatpush2.msra.mxu0 0.0
      %380 = vmatprep.subr.mxu0 0.0
      %381 = vmatpush2.msra.mxu0 0.0
      %382 = vmatprep.subr.mxu0 0.0
      %383 = vmatpush2.msra.mxu0 0.0
      %384 = vmatprep.subr.mxu0 0.0
      %385 = vmatpush2.msra.mxu0 0.0
      %386 = vmatprep.subr.mxu0 0.0
      %387 = vmatpush2.msra.mxu0 0.0
      %388 = vmatprep.mubr.f32.mxu0 0.0
      %389 = vmatmul.mubr.f32.gmra.mxu0 %v322
      %v390 = vpop.f32.mrf.mxu0
      %v391 = vadd.f32 0.0, %v390
      %v392 = vpop.f32.mrf.mxu0
      %393 = vdwg.mxu0
      %v394 = vrcp.pop %v320
      %v395 = vmul.f32 %v391, %v394
      %396 = vrot.lane.b32.xlu0 %v231, 120
      %v397 = vpop.permute.xlu0 %396
      %398 = vrot.lane.b32.xlu0 %v232, 120
      %v399 = vpop.permute.xlu0 %398
      %v400 = vsel %vm234, %v397, 0
      %v402 = vsel %vm234, %v399, 0
      %404 = vmatprep.subr.mxu0 0.0
      %405 = vmatpush1.xpose.msra.mxu0 0.0
      %406 = vmatprep.subr.mxu0 0.0
      %407 = vmatpush1.xpose.msra.mxu0 0.0
      %408 = vmatprep.subr.mxu0 0.0
      %409 = vmatpush1.xpose.msra.mxu0 0.0
      %410 = vmatprep.subr.mxu0 0.0
      %411 = vmatpush1.xpose.msra.mxu0 0.0
      %412 = vmatprep.subr.mxu0 0.0
      %413 = vmatpush1.xpose.msra.mxu0 0.0
      %414 = vmatprep.subr.mxu0 0.0
      %415 = vmatpush1.xpose.msra.mxu0 0.0
      %416 = vmatprep.subr.mxu0 0.0
      %417 = vmatpush1.xpose.msra.mxu0 0.0
      %418 = vmatprep.subr.mxu0 0.0
      %419 = vmatpush1.xpose.msra.mxu0 0.0
      %420 = vmatprep.subr.mxu0 0.0
      %421 = vmatpush1.xpose.msra.mxu0 0.0
      %422 = vmatprep.subr.mxu0 0.0
      %423 = vmatpush1.xpose.msra.mxu0 0.0
      %424 = vmatprep.subr.mxu0 0.0
      %425 = vmatpush1.xpose.msra.mxu0 0.0
      %426 = vmatprep.subr.mxu0 0.0
      %427 = vmatpush1.xpose.msra.mxu0 0.0
      %428 = vmatprep.subr.mxu0 0.0
      %429 = vmatpush1.xpose.msra.mxu0 0.0
      %430 = vmatprep.subr.mxu0 0.0
      %431 = vmatpush1.xpose.msra.mxu0 0.0
      %432 = vmatprep.subr.mxu0 0.0
      %433 = vmatpush1.xpose.msra.mxu0 0.0
      %434 = vmatprep.subr.mxu0 0.0
      %435 = vmatpush1.xpose.msra.mxu0 %v402
      %436 = vmatprep.subr.mxu0 0.0
      %437 = vmatpush2.xpose.msra.mxu0 0.0
      %438 = vmatprep.subr.mxu0 0.0
      %439 = vmatpush2.xpose.msra.mxu0 0.0
      %440 = vmatprep.subr.mxu0 0.0
      %441 = vmatpush2.xpose.msra.mxu0 0.0
      %442 = vmatprep.subr.mxu0 0.0
      %443 = vmatpush2.xpose.msra.mxu0 0.0
      %444 = vmatprep.subr.mxu0 0.0
      %445 = vmatpush2.xpose.msra.mxu0 0.0
      %446 = vmatprep.subr.mxu0 0.0
      %447 = vmatpush2.xpose.msra.mxu0 0.0
      %448 = vmatprep.subr.mxu0 0.0
      %449 = vmatpush2.xpose.msra.mxu0 0.0
      %450 = vmatprep.subr.mxu0 0.0
      %451 = vmatpush2.xpose.msra.mxu0 0.0
      %452 = vmatprep.subr.mxu0 0.0
      %453 = vmatpush2.xpose.msra.mxu0 0.0
      %454 = vmatprep.subr.mxu0 0.0
      %455 = vmatpush2.xpose.msra.mxu0 0.0
      %456 = vmatprep.subr.mxu0 0.0
      %457 = vmatpush2.xpose.msra.mxu0 0.0
      %458 = vmatprep.subr.mxu0 0.0
      %459 = vmatpush2.xpose.msra.mxu0 0.0
      %460 = vmatprep.subr.mxu0 0.0
      %461 = vmatpush2.xpose.msra.mxu0 0.0
      %462 = vmatprep.subr.mxu0 0.0
      %463 = vmatpush2.xpose.msra.mxu0 0.0
      %464 = vmatprep.subr.mxu0 0.0
      %465 = vmatpush2.xpose.msra.mxu0 0.0
      %466 = vmatprep.subr.mxu0 0.0
      %467 = vmatpush2.xpose.msra.mxu0 0.0
      %468 = vmatprep.mubr.f32.mxu0 0.0
      %469 = vmatmul.mubr.f32.gmra.mxu0 %v400
      %v470 = vpop.f32.mrf.mxu0
      %v471 = vadd.f32 0.0, %v470
      %v472 = vpop.f32.mrf.mxu0
      %473 = vdwg.mxu0
      %v474 = vmul.f32 %v471, 0.35355338
      %v475 = vsel %vm234, %v474, -inf
      %476 = vmax.xlane.f32.xlu0 %v475
      %v477 = vpop.xlane.xlu0 %476
      %v478 = vsub.f32 %v474, %v477
      %v479 = vmul.f32 %v478, 1.442695
      %v480 = vpow.pop %v479
      %v481 = vsel %vm234, %v480, 0.0
      %482 = vadd.xlane.f32.xlu0 %v481
      %v483 = vpop.xlane.xlu0 %482
      %485 = vrot.lane.b32.xlu0 %v233, 120
      %v486 = vpop.permute.xlu0 %485
      %v489 = vsel %vm234, %v480, 0
      %491 = vmatprep.subr.mxu0 0.0
      %492 = vmatpush1.msra.mxu0 0.0
      %493 = vmatprep.subr.mxu0 0.0
      %494 = vmatpush1.msra.mxu0 0.0
      %495 = vmatprep.subr.mxu0 0.0
      %496 = vmatpush1.msra.mxu0 0.0
      %497 = vmatprep.subr.mxu0 0.0
      %498 = vmatpush1.msra.mxu0 0.0
      %499 = vmatprep.subr.mxu0 0.0
      %500 = vmatpush1.msra.mxu0 0.0
      %501 = vmatprep.subr.mxu0 0.0
      %502 = vmatpush1.msra.mxu0 0.0
      %503 = vmatprep.subr.mxu0 0.0
      %504 = vmatpush1.msra.mxu0 0.0
      %505 = vmatprep.subr.mxu0 0.0
      %506 = vmatpush1.msra.mxu0 0.0
      %507 = vmatprep.subr.mxu0 0.0
      %508 = vmatpush1.msra.mxu0 0.0
      %509 = vmatprep.subr.mxu0 0.0
      %510 = vmatpush1.msra.mxu0 0.0
      %511 = vmatprep.subr.mxu0 0.0
      %512 = vmatpush1.msra.mxu0 0.0
      %513 = vmatprep.subr.mxu0 0.0
      %514 = vmatpush1.msra.mxu0 0.0
      %515 = vmatprep.subr.mxu0 0.0
      %516 = vmatpush1.msra.mxu0 0.0
      %517 = vmatprep.subr.mxu0 0.0
      %518 = vmatpush1.msra.mxu0 0.0
      %519 = vmatprep.subr.mxu0 0.0
      %520 = vmatpush1.msra.mxu0 0.0
      %521 = vmatprep.subr.mxu0 0.0
      %522 = vmatpush1.msra.mxu0 %v486
      %523 = vmatprep.subr.mxu0 0.0
      %524 = vmatpush2.msra.mxu0 0.0
      %525 = vmatprep.subr.mxu0 0.0
      %526 = vmatpush2.msra.mxu0 0.0
      %527 = vmatprep.subr.mxu0 0.0
      %528 = vmatpush2.msra.mxu0 0.0
      %529 = vmatprep.subr.mxu0 0.0
      %530 = vmatpush2.msra.mxu0 0.0
      %531 = vmatprep.subr.mxu0 0.0
      %532 = vmatpush2.msra.mxu0 0.0
      %533 = vmatprep.subr.mxu0 0.0
      %534 = vmatpush2.msra.mxu0 0.0
      %535 = vmatprep.subr.mxu0 0.0
      %536 = vmatpush2.msra.mxu0 0.0
      %537 = vmatprep.subr.mxu0 0.0
      %538 = vmatpush2.msra.mxu0 0.0
      %539 = vmatprep.subr.mxu0 0.0
      %540 = vmatpush2.msra.mxu0 0.0
      %541 = vmatprep.subr.mxu0 0.0
      %542 = vmatpush2.msra.mxu0 0.0
      %543 = vmatprep.subr.mxu0 0.0
      %544 = vmatpush2.msra.mxu0 0.0
      %545 = vmatprep.subr.mxu0 0.0
      %546 = vmatpush2.msra.mxu0 0.0
      %547 = vmatprep.subr.mxu0 0.0
      %548 = vmatpush2.msra.mxu0 0.0
      %549 = vmatprep.subr.mxu0 0.0
      %550 = vmatpush2.msra.mxu0 0.0
      %551 = vmatprep.subr.mxu0 0.0
      %552 = vmatpush2.msra.mxu0 0.0
      %553 = vmatprep.subr.mxu0 0.0
      %554 = vmatpush2.msra.mxu0 0.0
      %555 = vmatprep.mubr.f32.mxu0 0.0
      %556 = vmatmul.mubr.f32.gmra.mxu0 %v489
      %v557 = vpop.f32.mrf.mxu0
      %v558 = vadd.f32 0.0, %v557
      %v559 = vpop.f32.mrf.mxu0
      %560 = vdwg.mxu0
      %v561 = vrcp.pop %v483
      %v562 = vmul.f32 %v558, %v561
      %563 = vrot.lane.b32.xlu0 %v231, 112
      %v564 = vpop.permute.xlu0 %563
      %565 = vrot.lane.b32.xlu0 %v232, 112
      %v566 = vpop.permute.xlu0 %565
      %v567 = vsel %vm234, %v564, 0
      %v569 = vsel %vm234, %v566, 0
      %571 = vmatprep.subr.mxu0 0.0
      %572 = vmatpush1.xpose.msra.mxu0 0.0
      %573 = vmatprep.subr.mxu0 0.0
      %574 = vmatpush1.xpose.msra.mxu0 0.0
      %575 = vmatprep.subr.mxu0 0.0
      %576 = vmatpush1.xpose.msra.mxu0 0.0
      %577 = vmatprep.subr.mxu0 0.0
      %578 = vmatpush1.xpose.msra.mxu0 0.0
      %579 = vmatprep.subr.mxu0 0.0
      %580 = vmatpush1.xpose.msra.mxu0 0.0
      %581 = vmatprep.subr.mxu0 0.0
      %582 = vmatpush1.xpose.msra.mxu0 0.0
      %583 = vmatprep.subr.mxu0 0.0
      %584 = vmatpush1.xpose.msra.mxu0 0.0
      %585 = vmatprep.subr.mxu0 0.0
      %586 = vmatpush1.xpose.msra.mxu0 0.0
      %587 = vmatprep.subr.mxu0 0.0
      %588 = vmatpush1.xpose.msra.mxu0 0.0
      %589 = vmatprep.subr.mxu0 0.0
      %590 = vmatpush1.xpose.msra.mxu0 0.0
      %591 = vmatprep.subr.mxu0 0.0
      %592 = vmatpush1.xpose.msra.mxu0 0.0
      %593 = vmatprep.subr.mxu0 0.0
      %594 = vmatpush1.xpose.msra.mxu0 0.0
      %595 = vmatprep.subr.mxu0 0.0
      %596 = vmatpush1.xpose.msra.mxu0 0.0
      %597 = vmatprep.subr.mxu0 0.0
      %598 = vmatpush1.xpose.msra.mxu0 0.0
      %599 = vmatprep.subr.mxu0 0.0
      %600 = vmatpush1.xpose.msra.mxu0 0.0
      %601 = vmatprep.subr.mxu0 0.0
      %602 = vmatpush1.xpose.msra.mxu0 %v569
      %603 = vmatprep.subr.mxu0 0.0
      %604 = vmatpush2.xpose.msra.mxu0 0.0
      %605 = vmatprep.subr.mxu0 0.0
      %606 = vmatpush2.xpose.msra.mxu0 0.0
      %607 = vmatprep.subr.mxu0 0.0
      %608 = vmatpush2.xpose.msra.mxu0 0.0
      %609 = vmatprep.subr.mxu0 0.0
      %610 = vmatpush2.xpose.msra.mxu0 0.0
      %611 = vmatprep.subr.mxu0 0.0
      %612 = vmatpush2.xpose.msra.mxu0 0.0
      %613 = vmatprep.subr.mxu0 0.0
      %614 = vmatpush2.xpose.msra.mxu0 0.0
      %615 = vmatprep.subr.mxu0 0.0
      %616 = vmatpush2.xpose.msra.mxu0 0.0
      %617 = vmatprep.subr.mxu0 0.0
      %618 = vmatpush2.xpose.msra.mxu0 0.0
      %619 = vmatprep.subr.mxu0 0.0
      %620 = vmatpush2.xpose.msra.mxu0 0.0
      %621 = vmatprep.subr.mxu0 0.0
      %622 = vmatpush2.xpose.msra.mxu0 0.0
      %623 = vmatprep.subr.mxu0 0.0
      %624 = vmatpush2.xpose.msra.mxu0 0.0
      %625 = vmatprep.subr.mxu0 0.0
      %626 = vmatpush2.xpose.msra.mxu0 0.0
      %627 = vmatprep.subr.mxu0 0.0
      %628 = vmatpush2.xpose.msra.mxu0 0.0
      %629 = vmatprep.subr.mxu0 0.0
      %630 = vmatpush2.xpose.msra.mxu0 0.0
      %631 = vmatprep.subr.mxu0 0.0
      %632 = vmatpush2.xpose.msra.mxu0 0.0
      %633 = vmatprep.subr.mxu0 0.0
      %634 = vmatpush2.xpose.msra.mxu0 0.0
      %635 = vmatprep.mubr.f32.mxu0 0.0
      %636 = vmatmul.mubr.f32.gmra.mxu0 %v567
      %v637 = vpop.f32.mrf.mxu0
      %v638 = vadd.f32 0.0, %v637
      %v639 = vpop.f32.mrf.mxu0
      %640 = vdwg.mxu0
      %v641 = vmul.f32 %v638, 0.35355338
      %v642 = vsel %vm234, %v641, -inf
      %643 = vmax.xlane.f32.xlu0 %v642
      %v644 = vpop.xlane.xlu0 %643
      %v645 = vsub.f32 %v641, %v644
      %v646 = vmul.f32 %v645, 1.442695
      %v647 = vpow.pop %v646
      %v648 = vsel %vm234, %v647, 0.0
      %649 = vadd.xlane.f32.xlu0 %v648
      %v650 = vpop.xlane.xlu0 %649
      %651 = vrot.lane.b32.xlu0 %v233, 112
      %v652 = vpop.permute.xlu0 %651
      %v655 = vsel %vm234, %v647, 0
      %657 = vmatprep.subr.mxu0 0.0
      %658 = vmatpush1.msra.mxu0 0.0
      %659 = vmatprep.subr.mxu0 0.0
      %660 = vmatpush1.msra.mxu0 0.0
      %661 = vmatprep.subr.mxu0 0.0
      %662 = vmatpush1.msra.mxu0 0.0
      %663 = vmatprep.subr.mxu0 0.0
      %664 = vmatpush1.msra.mxu0 0.0
      %665 = vmatprep.subr.mxu0 0.0
      %666 = vmatpush1.msra.mxu0 0.0
      %667 = vmatprep.subr.mxu0 0.0
      %668 = vmatpush1.msra.mxu0 0.0
      %669 = vmatprep.subr.mxu0 0.0
      %670 = vmatpush1.msra.mxu0 0.0
      %671 = vmatprep.subr.mxu0 0.0
      %672 = vmatpush1.msra.mxu0 0.0
      %673 = vmatprep.subr.mxu0 0.0
      %674 = vmatpush1.msra.mxu0 0.0
      %675 = vmatprep.subr.mxu0 0.0
      %676 = vmatpush1.msra.mxu0 0.0
      %677 = vmatprep.subr.mxu0 0.0
      %678 = vmatpush1.msra.mxu0 0.0
      %679 = vmatprep.subr.mxu0 0.0
      %680 = vmatpush1.msra.mxu0 0.0
      %681 = vmatprep.subr.mxu0 0.0
      %682 = vmatpush1.msra.mxu0 0.0
      %683 = vmatprep.subr.mxu0 0.0
      %684 = vmatpush1.msra.mxu0 0.0
      %685 = vmatprep.subr.mxu0 0.0
      %686 = vmatpush1.msra.mxu0 0.0
      %687 = vmatprep.subr.mxu0 0.0
      %688 = vmatpush1.msra.mxu0 %v652
      %689 = vmatprep.subr.mxu0 0.0
      %690 = vmatpush2.msra.mxu0 0.0
      %691 = vmatprep.subr.mxu0 0.0
      %692 = vmatpush2.msra.mxu0 0.0
      %693 = vmatprep.subr.mxu0 0.0
      %694 = vmatpush2.msra.mxu0 0.0
      %695 = vmatprep.subr.mxu0 0.0
      %696 = vmatpush2.msra.mxu0 0.0
      %697 = vmatprep.subr.mxu0 0.0
      %698 = vmatpush2.msra.mxu0 0.0
      %699 = vmatprep.subr.mxu0 0.0
      %700 = vmatpush2.msra.mxu0 0.0
      %701 = vmatprep.subr.mxu0 0.0
      %702 = vmatpush2.msra.mxu0 0.0
      %703 = vmatprep.subr.mxu0 0.0
      %704 = vmatpush2.msra.mxu0 0.0
      %705 = vmatprep.subr.mxu0 0.0
      %706 = vmatpush2.msra.mxu0 0.0
      %707 = vmatprep.subr.mxu0 0.0
      %708 = vmatpush2.msra.mxu0 0.0
      %709 = vmatprep.subr.mxu0 0.0
      %710 = vmatpush2.msra.mxu0 0.0
      %711 = vmatprep.subr.mxu0 0.0
      %712 = vmatpush2.msra.mxu0 0.0
      %713 = vmatprep.subr.mxu0 0.0
      %714 = vmatpush2.msra.mxu0 0.0
      %715 = vmatprep.subr.mxu0 0.0
      %716 = vmatpush2.msra.mxu0 0.0
      %717 = vmatprep.subr.mxu0 0.0
      %718 = vmatpush2.msra.mxu0 0.0
      %719 = vmatprep.subr.mxu0 0.0
      %720 = vmatpush2.msra.mxu0 0.0
      %721 = vmatprep.mubr.f32.mxu0 0.0
      %722 = vmatmul.mubr.f32.gmra.mxu0 %v655
      %v723 = vpop.f32.mrf.mxu0
      %v724 = vadd.f32 0.0, %v723
      %v725 = vpop.f32.mrf.mxu0
      %726 = vdwg.mxu0
      %v727 = vrcp.pop %v650
      %v728 = vmul.f32 %v724, %v727
      %729 = vrot.lane.b32.xlu0 %v231, 104
      %v730 = vpop.permute.xlu0 %729
      %731 = vrot.lane.b32.xlu0 %v232, 104
      %v732 = vpop.permute.xlu0 %731
      %v733 = vsel %vm234, %v730, 0
      %v735 = vsel %vm234, %v732, 0
      %737 = vmatprep.subr.mxu0 0.0
      %738 = vmatpush1.xpose.msra.mxu0 0.0
      %739 = vmatprep.subr.mxu0 0.0
      %740 = vmatpush1.xpose.msra.mxu0 0.0
      %741 = vmatprep.subr.mxu0 0.0
      %742 = vmatpush1.xpose.msra.mxu0 0.0
      %743 = vmatprep.subr.mxu0 0.0
      %744 = vmatpush1.xpose.msra.mxu0 0.0
      %745 = vmatprep.subr.mxu0 0.0
      %746 = vmatpush1.xpose.msra.mxu0 0.0
      %747 = vmatprep.subr.mxu0 0.0
      %748 = vmatpush1.xpose.msra.mxu0 0.0
      %749 = vmatprep.subr.mxu0 0.0
      %750 = vmatpush1.xpose.msra.mxu0 0.0
      %751 = vmatprep.subr.mxu0 0.0
      %752 = vmatpush1.xpose.msra.mxu0 0.0
      %753 = vmatprep.subr.mxu0 0.0
      %754 = vmatpush1.xpose.msra.mxu0 0.0
      %755 = vmatprep.subr.mxu0 0.0
      %756 = vmatpush1.xpose.msra.mxu0 0.0
      %757 = vmatprep.subr.mxu0 0.0
      %758 = vmatpush1.xpose.msra.mxu0 0.0
      %759 = vmatprep.subr.mxu0 0.0
      %760 = vmatpush1.xpose.msra.mxu0 0.0
      %761 = vmatprep.subr.mxu0 0.0
      %762 = vmatpush1.xpose.msra.mxu0 0.0
      %763 = vmatprep.subr.mxu0 0.0
      %764 = vmatpush1.xpose.msra.mxu0 0.0
      %765 = vmatprep.subr.mxu0 0.0
      %766 = vmatpush1.xpose.msra.mxu0 0.0
      %767 = vmatprep.subr.mxu0 0.0
      %768 = vmatpush1.xpose.msra.mxu0 %v735
      %769 = vmatprep.subr.mxu0 0.0
      %770 = vmatpush2.xpose.msra.mxu0 0.0
      %771 = vmatprep.subr.mxu0 0.0
      %772 = vmatpush2.xpose.msra.mxu0 0.0
      %773 = vmatprep.subr.mxu0 0.0
      %774 = vmatpush2.xpose.msra.mxu0 0.0
      %775 = vmatprep.subr.mxu0 0.0
      %776 = vmatpush2.xpose.msra.mxu0 0.0
      %777 = vmatprep.subr.mxu0 0.0
      %778 = vmatpush2.xpose.msra.mxu0 0.0
      %779 = vmatprep.subr.mxu0 0.0
      %780 = vmatpush2.xpose.msra.mxu0 0.0
      %781 = vmatprep.subr.mxu0 0.0
      %782 = vmatpush2.xpose.msra.mxu0 0.0
      %783 = vmatprep.subr.mxu0 0.0
      %784 = vmatpush2.xpose.msra.mxu0 0.0
      %785 = vmatprep.subr.mxu0 0.0
      %786 = vmatpush2.xpose.msra.mxu0 0.0
      %787 = vmatprep.subr.mxu0 0.0
      %788 = vmatpush2.xpose.msra.mxu0 0.0
      %789 = vmatprep.subr.mxu0 0.0
      %790 = vmatpush2.xpose.msra.mxu0 0.0
      %791 = vmatprep.subr.mxu0 0.0
      %792 = vmatpush2.xpose.msra.mxu0 0.0
      %793 = vmatprep.subr.mxu0 0.0
      %794 = vmatpush2.xpose.msra.mxu0 0.0
      %795 = vmatprep.subr.mxu0 0.0
      %796 = vmatpush2.xpose.msra.mxu0 0.0
      %797 = vmatprep.subr.mxu0 0.0
      %798 = vmatpush2.xpose.msra.mxu0 0.0
      %799 = vmatprep.subr.mxu0 0.0
      %800 = vmatpush2.xpose.msra.mxu0 0.0
      %801 = vmatprep.mubr.f32.mxu0 0.0
      %802 = vmatmul.mubr.f32.gmra.mxu0 %v733
      %v803 = vpop.f32.mrf.mxu0
      %v804 = vadd.f32 0.0, %v803
      %v805 = vpop.f32.mrf.mxu0
      %806 = vdwg.mxu0
      %v807 = vmul.f32 %v804, 0.35355338
      %v808 = vsel %vm234, %v807, -inf
      %809 = vmax.xlane.f32.xlu0 %v808
      %v810 = vpop.xlane.xlu0 %809
      %v811 = vsub.f32 %v807, %v810
      %v812 = vmul.f32 %v811, 1.442695
      %v813 = vpow.pop %v812
      %v814 = vsel %vm234, %v813, 0.0
      %815 = vadd.xlane.f32.xlu0 %v814
      %v816 = vpop.xlane.xlu0 %815
      %817 = vrot.lane.b32.xlu0 %v233, 104
      %v818 = vpop.permute.xlu0 %817
      %v821 = vsel %vm234, %v813, 0
      %823 = vmatprep.subr.mxu0 0.0
      %824 = vmatpush1.msra.mxu0 0.0
      %825 = vmatprep.subr.mxu0 0.0
      %826 = vmatpush1.msra.mxu0 0.0
      %827 = vmatprep.subr.mxu0 0.0
      %828 = vmatpush1.msra.mxu0 0.0
      %829 = vmatprep.subr.mxu0 0.0
      %830 = vmatpush1.msra.mxu0 0.0
      %831 = vmatprep.subr.mxu0 0.0
      %832 = vmatpush1.msra.mxu0 0.0
      %833 = vmatprep.subr.mxu0 0.0
      %834 = vmatpush1.msra.mxu0 0.0
      %835 = vmatprep.subr.mxu0 0.0
      %836 = vmatpush1.msra.mxu0 0.0
      %837 = vmatprep.subr.mxu0 0.0
      %838 = vmatpush1.msra.mxu0 0.0
      %839 = vmatprep.subr.mxu0 0.0
      %840 = vmatpush1.msra.mxu0 0.0
      %841 = vmatprep.subr.mxu0 0.0
      %842 = vmatpush1.msra.mxu0 0.0
      %843 = vmatprep.subr.mxu0 0.0
      %844 = vmatpush1.msra.mxu0 0.0
      %845 = vmatprep.subr.mxu0 0.0
      %846 = vmatpush1.msra.mxu0 0.0
      %847 = vmatprep.subr.mxu0 0.0
      %848 = vmatpush1.msra.mxu0 0.0
      %849 = vmatprep.subr.mxu0 0.0
      %850 = vmatpush1.msra.mxu0 0.0
      %851 = vmatprep.subr.mxu0 0.0
      %852 = vmatpush1.msra.mxu0 0.0
      %853 = vmatprep.subr.mxu0 0.0
      %854 = vmatpush1.msra.mxu0 %v818
      %855 = vmatprep.subr.mxu0 0.0
      %856 = vmatpush2.msra.mxu0 0.0
      %857 = vmatprep.subr.mxu0 0.0
      %858 = vmatpush2.msra.mxu0 0.0
      %859 = vmatprep.subr.mxu0 0.0
      %860 = vmatpush2.msra.mxu0 0.0
      %861 = vmatprep.subr.mxu0 0.0
      %862 = vmatpush2.msra.mxu0 0.0
      %863 = vmatprep.subr.mxu0 0.0
      %864 = vmatpush2.msra.mxu0 0.0
      %865 = vmatprep.subr.mxu0 0.0
      %866 = vmatpush2.msra.mxu0 0.0
      %867 = vmatprep.subr.mxu0 0.0
      %868 = vmatpush2.msra.mxu0 0.0
      %869 = vmatprep.subr.mxu0 0.0
      %870 = vmatpush2.msra.mxu0 0.0
      %871 = vmatprep.subr.mxu0 0.0
      %872 = vmatpush2.msra.mxu0 0.0
      %873 = vmatprep.subr.mxu0 0.0
      %874 = vmatpush2.msra.mxu0 0.0
      %875 = vmatprep.subr.mxu0 0.0
      %876 = vmatpush2.msra.mxu0 0.0
      %877 = vmatprep.subr.mxu0 0.0
      %878 = vmatpush2.msra.mxu0 0.0
      %879 = vmatprep.subr.mxu0 0.0
      %880 = vmatpush2.msra.mxu0 0.0
      %881 = vmatprep.subr.mxu0 0.0
      %882 = vmatpush2.msra.mxu0 0.0
      %883 = vmatprep.subr.mxu0 0.0
      %884 = vmatpush2.msra.mxu0 0.0
      %885 = vmatprep.subr.mxu0 0.0
      %886 = vmatpush2.msra.mxu0 0.0
      %887 = vmatprep.mubr.f32.mxu0 0.0
      %888 = vmatmul.mubr.f32.gmra.mxu0 %v821
      %v889 = vpop.f32.mrf.mxu0
      %v890 = vadd.f32 0.0, %v889
      %v891 = vpop.f32.mrf.mxu0
      %892 = vdwg.mxu0
      %v893 = vrcp.pop %v816
      %v894 = vmul.f32 %v890, %v893
      %896 = vrot.lane.b32.xlu0 %v562, 8
      %v897 = vpop.permute.xlu0 %896
      %900 = vrot.lane.b32.xlu0 %v728, 16
      %v901 = vpop.permute.xlu0 %900
      %904 = vrot.lane.b32.xlu0 %v894, 24
      %v905 = vpop.permute.xlu0 %904
      %v907 = vsel %vm234, %v395, %v897
      %vm908 = vcmask 130048
      %v909 = vsel %vm908, %v907, %v901
      %vm910 = vcmask 195584
      %v911 = vsel %vm910, %v909, %v905
      %vm912 = vcmask 261120
      %913 = vst.msk [vmem:[%s230] sm:$0xff] %vm912, %v911
      %p914 = scmp.lt.s32.totalorder %s18, 1
      %s915 = scalar_select %p914, %s18, 1
      %p916 = scmp.lt.s32.totalorder %s19, 0
      %s917 = scalar_select %p916, %s19, 0
      %s918 = sadd.s32 %s917, %s915
      %s919 = smul.addr %s918, 8
      %s920 = scalar_lea.vmem %s3, %s919
      // Predicated region
      $region33: #{transformer_forward.5} parent=31 // pred_check
        %p921 = pneg %p126
      $region34: #{transformer_forward.5} parent=31 // pred_check_branch
        %923 = sbr.rel (%p921) target = $region36
      $region35: #{transformer_forward.5} parent=31 // pred_region
        _
      $region36: #{transformer_forward.5} parent=31 // pred_fallthru
        _
    $region32: #{transformer_forward.5} parent=5 // pred_fallthru
      _
    %p924 = scmp.le.s32.totalorder 2, %s9
    // Predicated region
    $region37: #{transformer_forward.5} parent=5 // pred_check
      %p925 = pneg %p924
    $region38: #{transformer_forward.5} parent=5 // pred_check_branch
      %927 = sbr.rel (%p925) target = $region40
    $region39: #{transformer_forward.5} parent=5 // pred_region
      %s928 = ssub.s32 %s9, 2
      // Predicated region
      $region41: #{transformer_forward.5} parent=39 // pred_check
        %p929 = pneg %p132
      $region42: #{transformer_forward.5} parent=39 // pred_check_branch
        %931 = sbr.rel (%p929) target = $region44
      $region43: #{transformer_forward.5} parent=39 // pred_region
        %p932 = scmp.lt.s32.totalorder %s20, 1
        %s933 = scalar_select %p932, %s20, 1
        %p934 = scmp.lt.s32.totalorder %s21, 0
        %s935 = scalar_select %p934, %s21, 0
        %s936 = sadd.s32 %s935, %s933
        %s937 = smul.addr %s936, 8
        %s938 = scalar_lea.vmem %s3, %s937
      $region44: #{transformer_forward.5} parent=39 // pred_fallthru
        _
    $region40: #{transformer_forward.5} parent=5 // pred_fallthru
      _
  $region6: #{transformer_forward.5} parent=0 // loop_footer
    %s13 = sadd.s32 1, %s9
  $region7: #{transformer_forward.5} parent=0 // loop_footer_branch
    %8 = sbr.rel target = $region3
  $region8: #{transformer_forward.5} parent=0 // loop_exit
    _

</llo_original>
